<compile_context>
chip_gen: v7x
topology: tpu7x:2x2x1
jax: 0.10.0
libtpu: 0.0.40
codegen_flags: <defaults>
</compile_context>

<pallas_src>
import functools

import numpy as np

import jax
import jax.numpy as jnp
from jax import lax
from jax.experimental import pallas as pl
from jax.experimental.pallas import tpu as pltpu


# ---------------------------------------------------------------------------
# Border masks that emulate "same" zero padding in the flat (B*H*W) lane layout.
# ---------------------------------------------------------------------------
def _make_shift_masks(KH, KW, H, W, B, dtype):
    ph, pw = KH // 2, KW // 2          # assumes odd kernel (same as the PyTorch module)
    M = B * H * W
    p = np.arange(M)
    xc = p % W
    yc = (p // W) % H
    rows = []
    for kh in range(KH):
        for kw in range(KW):
            dy, dx = kh - ph, kw - pw
            valid = (yc + dy >= 0) & (yc + dy < H) & (xc + dx >= 0) & (xc + dx < W)
            rows.append(valid.astype(np.float32))
    m = np.stack(rows, axis=0).reshape(KH * KW, 1, M)
    return jnp.asarray(m, dtype=dtype)


# ---------------------------------------------------------------------------
# Pallas kernel: one ConvLSTM layer, full time recurrence (grid over T).
# ---------------------------------------------------------------------------
def _convlstm_layer_kernel(x_ref, w_ref, b_ref, mask_ref,      # inputs
                           h_seq_ref, c_ref,                   # outputs
                           comb_scr, patch_scr, h_state,       # VMEM scratch
                           *, KH, KW, H, W, Cin_p, Chid, M, compute_dtype):
    # x_ref    : (Cin_p, M)              x_t, compute dtype, lane-dense
    # w_ref    : (4*Chid, KH*KW*Ctot)    fused im2col weight, compute dtype
    # b_ref    : (4*Chid, 1)             f32 bias
    # mask_ref : (KH*KW, 1, M)           border masks (0/1), compute dtype
    # h_seq_ref: (Chid, M)               per-step output h_t
    # c_ref    : (Chid, M) f32           grid-resident cell state (accumulator)
    # comb_scr : (Ctot, M)               [x_t ; h_{t-1}] staging
    # patch_scr: (KH*KW*Ctot, M)         im2col patch matrix
    # h_state  : (Chid, M) f32           hidden state carried across grid steps
    t = pl.program_id(0)
    Ctot = Cin_p + Chid
    ph, pw = KH // 2, KW // 2

    @pl.when(t == 0)
    def _init():
        h_state[...] = jnp.zeros_like(h_state)
        c_ref[...] = jnp.zeros_like(c_ref)

    # Stage combined [x_t ; h_{t-1}] in compute dtype (sublane-aligned writes).
    comb_scr[0:Cin_p, :] = x_ref[...]
    comb_scr[Cin_p:Ctot, :] = h_state[...].astype(compute_dtype)
    comb = comb_scr[...]

    # Build the im2col patch matrix with lane rolls (XLU) + border masks (VPU).
    for kh in range(KH):
        for kw in range(KW):
            tap = kh * KW + kw
            dy, dx = kh - ph, kw - pw
            shift = (-(dy * W + dx)) % M
            rolled = pltpu.roll(comb, shift=shift, axis=1) if shift else comb
            if dy == 0 and dx == 0:
                piece = rolled                    # center tap: always valid
            else:
                piece = rolled * mask_ref[tap]    # zero-padding emulation
            patch_scr[tap * Ctot:(tap + 1) * Ctot, :] = piece

    # Single fused MXU matmul, f32 accumulation; bias add is one VPU pass.
    gates = jnp.dot(w_ref[...], patch_scr[...],
                    preferred_element_type=jnp.float32)
    gates = gates + b_ref[...].astype(jnp.float32)            # (4*Chid, M)

    cc_i = gates[0 * Chid:1 * Chid, :]
    cc_f = gates[1 * Chid:2 * Chid, :]
    cc_o = gates[2 * Chid:3 * Chid, :]
    cc_g = gates[3 * Chid:4 * Chid, :]

    i = jax.nn.sigmoid(cc_i)
    f = jax.nn.sigmoid(cc_f)
    o = jax.nn.sigmoid(cc_o)
    g = jnp.tanh(cc_g)

    # State update stays in f32 (VPU/EUP).
    c_next = f * c_ref[...] + i * g
    h_next = o * jnp.tanh(c_next)

    c_ref[...] = c_next
    h_state[...] = h_next
    h_seq_ref[...] = h_next.astype(h_seq_ref.dtype)


# ---------------------------------------------------------------------------
# One layer = one pallas_call (time loop is the grid).
# ---------------------------------------------------------------------------
def _convlstm_layer(x_seq, w_flat, bias, masks, *, KH, KW, H, W, B, Cin_p, Chid,
                    out_dtype, compute_dtype):
    T = x_seq.shape[0]
    M = B * H * W
    Ctot = Cin_p + Chid
    K = KH * KW * Ctot

    kernel = functools.partial(_convlstm_layer_kernel, KH=KH, KW=KW, H=H, W=W,
                               Cin_p=Cin_p, Chid=Chid, M=M,
                               compute_dtype=compute_dtype)

    h_seq, c_last = pl.pallas_call(
        kernel,
        out_shape=(jax.ShapeDtypeStruct((T, Chid, M), out_dtype),
                   jax.ShapeDtypeStruct((Chid, M), jnp.float32)),
        grid_spec=pltpu.PrefetchScalarGridSpec(
            num_scalar_prefetch=0,
            grid=(T,),
            in_specs=[
                pl.BlockSpec((None, Cin_p, M), lambda t: (t, 0, 0)),   # x_t
                pl.BlockSpec((4 * Chid, K), lambda t: (0, 0)),         # weights (once)
                pl.BlockSpec((4 * Chid, 1), lambda t: (0, 0)),         # bias (once)
                pl.BlockSpec((KH * KW, 1, M), lambda t: (0, 0, 0)),    # masks (once)
            ],
            out_specs=[
                pl.BlockSpec((None, Chid, M), lambda t: (t, 0, 0)),    # h_t per step
                pl.BlockSpec((Chid, M), lambda t: (0, 0)),             # c (resident)
            ],
            scratch_shapes=[
                pltpu.VMEM((Ctot, M), compute_dtype),                  # comb
                pltpu.VMEM((K, M), compute_dtype),                     # im2col patches
                pltpu.VMEM((Chid, M), jnp.float32),                    # h state
            ],
        ),
        compiler_params=pltpu.CompilerParams(
            dimension_semantics=("arbitrary",),                        # recurrence
        ),
    )(x_seq, w_flat, bias, masks)
    return h_seq, c_last


# ---------------------------------------------------------------------------
# Parameter packing: PyTorch (O=4*Chid, I=Cin+Chid, KH, KW) -> fused im2col
# weight (O, KH*KW*(Cin_p+Chid)) with x-channels zero-padded to Cin_p.
# ---------------------------------------------------------------------------
def prepare_layer_params(w_oihw, bias, Cin, Chid, KH, KW):
    Cin_p = ((Cin + 7) // 8) * 8
    O = 4 * Chid
    w = jnp.transpose(w_oihw, (0, 2, 3, 1))                  # (O, KH, KW, Cin+Chid)
    w_x = jnp.pad(w[..., :Cin], ((0, 0), (0, 0), (0, 0), (0, Cin_p - Cin)))
    w_h = w[..., Cin:]
    w_full = jnp.concatenate([w_x, w_h], axis=-1)            # (O, KH, KW, Cin_p+Chid)
    w_flat = w_full.reshape(O, KH * KW * (Cin_p + Chid))
    return (w_flat, bias.reshape(O, 1), KH, KW, Cin, Cin_p, Chid)


# ---------------------------------------------------------------------------
# Full ConvLSTM forward (batch_first=True, return_all_layers=False, zero-init
# hidden states — the PyTorch module's default path).  Returns PyTorch NCHW.
# ---------------------------------------------------------------------------
def convlstm_forward(x_btchw, layer_params, compute_dtype=jnp.bfloat16):
    B, T, C, H, W = x_btchw.shape
    M = B * H * W
    out_dtype = x_btchw.dtype

    # (B,T,C,H,W) -> (T, C, B*H*W): channels on sublanes, B*H*W on lanes.
    cur = jnp.transpose(x_btchw, (1, 2, 0, 3, 4)).reshape(T, C, M)

    layer_outputs = []
    last_states = []
    for (w_flat, bias, KH, KW, Cin, Cin_p, Chid) in layer_params:
        masks = _make_shift_masks(KH, KW, H, W, B, compute_dtype)
        x_in = cur.astype(compute_dtype)
        if Cin_p > Cin:
            x_in = jnp.pad(x_in, ((0, 0), (0, Cin_p - Cin), (0, 0)))
        h_seq, c_last = _convlstm_layer(
            x_in, w_flat.astype(compute_dtype), bias, masks,
            KH=KH, KW=KW, H=H, W=W, B=B, Cin_p=Cin_p, Chid=Chid,
            out_dtype=out_dtype, compute_dtype=compute_dtype)
        layer_outputs.append(h_seq)                    # (T, Chid, M)
        last_states.append((h_seq[T - 1], c_last))     # ((Chid,M), (Chid,M))
        cur = h_seq

    def to_btchw(hs, Chid):
        return jnp.transpose(hs.reshape(T, Chid, B, H, W), (2, 0, 1, 3, 4))

    def to_bchw(s, Chid):
        return jnp.transpose(s.reshape(Chid, B, H, W), (1, 0, 2, 3))

    # return_all_layers=False -> only the last layer (matches the PyTorch module).
    Chid_last = layer_params[-1][6]
    out_list = [to_btchw(layer_outputs[-1], Chid_last)]
    h_last, c_last = last_states[-1]
    state_list = [(to_bchw(h_last, Chid_last),
                   to_bchw(c_last.astype(out_dtype), Chid_last))]
    return out_list, state_list

    # TODO(synk): autograd bookkeeping (retain_grad / detach of init hidden
    # states and the extra hidden-state return values) has no Pallas
    # equivalent; only the forward numerics are implemented.


# ---------------------------------------------------------------------------
# Pure-JAX reference (lax.conv) for correctness checking.  Returns NHWC.
# ---------------------------------------------------------------------------
def ref_forward(x_btchw, torch_style_params):
    x = jnp.transpose(x_btchw, (0, 1, 3, 4, 2))                 # NHWC
    B, T, H, W, _ = x.shape
    cur = x
    last = None
    for (w_oihw, bias, Chid) in torch_style_params:
        w_hwio = jnp.transpose(w_oihw, (2, 3, 1, 0))            # (KH, KW, I, O)
        h = jnp.zeros((B, H, W, Chid), x.dtype)
        c = jnp.zeros((B, H, W, Chid), x.dtype)
        outs = []
        for t in range(T):
            combined = jnp.concatenate([cur[:, t], h], axis=-1)
            conv = lax.conv_general_dilated(
                combined, w_hwio, window_strides=(1, 1), padding="SAME",
                dimension_numbers=("NHWC", "HWIO", "NHWC"))
            conv = conv + bias
            cc_i, cc_f, cc_o, cc_g = jnp.split(conv, 4, axis=-1)
            i = jax.nn.sigmoid(cc_i)
            f = jax.nn.sigmoid(cc_f)
            o = jax.nn.sigmoid(cc_o)
            g = jnp.tanh(cc_g)
            c = f * c + i * g
            h = o * jnp.tanh(c)
            outs.append(h)
        cur = jnp.stack(outs, axis=1)
        last = (h, c)
    return cur, last


# ---------------------------------------------------------------------------
if __name__ == "__main__":
    key = jax.random.PRNGKey(0)

    # ConvLSTM(input_dim=4, hidden_dim=8, kernel_size=(3,3), num_layers=2,
    #          batch_first=True, bias=True, return_all_layers=False)
    B, T, C, H, W = 2, 8, 4, 16, 16
    hidden_dims = [8, 8]
    kernel_size = (3, 3)
    num_layers = 2

    key, kx = jax.random.split(key)
    x = jax.random.normal(kx, (B, T, C, H, W), dtype=jnp.float32)

    pallas_params = []   # packed fused-im2col weights for the kernel
    torch_params = []    # PyTorch-layout weights for the reference
    cur_in_dim = C
    for li in range(num_layers):
        Chid = hidden_dims[li]
        KH, KW = kernel_size
        Ctot = cur_in_dim + Chid
        key, kw_key = jax.random.split(key)
        w_oihw = 0.01 * jax.random.normal(kw_key, (4 * Chid, Ctot, KH, KW),
                                          dtype=jnp.float32)
        bias = jnp.zeros((4 * Chid,), jnp.float32)
        pallas_params.append(prepare_layer_params(w_oihw, bias, cur_in_dim,
                                                  Chid, KH, KW))
        torch_params.append((w_oihw, bias, Chid))
        cur_in_dim = Chid

    # Reference (PyTorch semantics), transposed to NCHW for comparison.
    ref_out, (ref_h, ref_c) = ref_forward(x, torch_params)
    ref_out = jnp.transpose(ref_out, (0, 1, 4, 2, 3))   # (B, T, C, H, W)
    ref_h = jnp.transpose(ref_h, (0, 3, 1, 2))          # (B, C, H, W)
    ref_c = jnp.transpose(ref_c, (0, 3, 1, 2))

    # --- f32 MXU path: tight correctness check of the kernel structure. ------
    fwd_f32 = jax.jit(lambda xx: convlstm_forward(xx, pallas_params, jnp.float32))
    outs32, states32 = jax.block_until_ready(fwd_f32(x))
    out32 = outs32[0]
    h32, c32 = states32[0]
    assert jnp.allclose(out32, ref_out, rtol=2e-4, atol=2e-5), "f32 output mismatch"
    assert jnp.allclose(h32, ref_h, rtol=2e-4, atol=2e-5), "f32 h mismatch"
    assert jnp.allclose(c32, ref_c, rtol=2e-4, atol=2e-5), "f32 c mismatch"

    # --- bf16 MXU path (default, perf): looser tolerance for bf16 operands. --
    fwd_bf16 = jax.jit(lambda xx: convlstm_forward(xx, pallas_params, jnp.bfloat16))
    outsbf, statesbf = jax.block_until_ready(fwd_bf16(x))
    outbf = outsbf[0]
    hbf, cbf = statesbf[0]
    assert jnp.allclose(outbf, ref_out, rtol=5e-2, atol=5e-3), "bf16 output mismatch"
    assert jnp.allclose(hbf, ref_h, rtol=5e-2, atol=5e-3), "bf16 h mismatch"
    assert jnp.allclose(cbf, ref_c, rtol=5e-2, atol=5e-3), "bf16 c mismatch"

    print("KERNEL_OK")
</pallas_src>

<mosaic_0001>
module attributes {stable_mosaic.version = 11 : i64} {
  func.func @_convlstm_layer_kernel(%arg0: i32, %arg1: memref<1x8x512xf32, #tpu.memory_space<vmem>>, %arg2: memref<32x144xf32, #tpu.memory_space<vmem>>, %arg3: memref<32x1xf32, #tpu.memory_space<vmem>>, %arg4: memref<9x1x512xf32, #tpu.memory_space<vmem>>, %arg5: memref<1x8x512xf32, #tpu.memory_space<vmem>>, %arg6: memref<8x512xf32, #tpu.memory_space<vmem>>, %arg7: memref<16x512xf32, #tpu.memory_space<vmem>>, %arg8: memref<144x512xf32, #tpu.memory_space<vmem>>, %arg9: memref<8x512xf32, #tpu.memory_space<vmem>>) attributes {dimension_semantics = [#tpu.dimension_semantics<arbitrary>], iteration_bounds = array<i64: 8>, scalar_prefetch = 0 : i64, scratch_operands = 3 : i64, tpu.core_type = #tpu.core_type<tc>, window_params = [{transform_indices = @transform_0, window_bounds = array<i64: 1, 8, 512>}, {pipeline_mode = #tpu.pipeline_mode<synchronous>, transform_indices = @transform_1, window_bounds = array<i64: 32, 144>}, {pipeline_mode = #tpu.pipeline_mode<synchronous>, transform_indices = @transform_2, window_bounds = array<i64: 32, 1>}, {pipeline_mode = #tpu.pipeline_mode<synchronous>, transform_indices = @transform_3, window_bounds = array<i64: 9, 1, 512>}, {transform_indices = @transform_4, window_bounds = array<i64: 1, 8, 512>}, {pipeline_mode = #tpu.pipeline_mode<synchronous>, transform_indices = @transform_5, window_bounds = array<i64: 8, 512>}]} {
    %c0_i32 = arith.constant 0 : i32
    %0 = arith.cmpi eq, %arg0, %c0_i32 : i32
    %1 = arith.extui %0 : i1 to i32
    %c0_i32_0 = arith.constant 0 : i32
    %2 = arith.cmpi ne, %1, %c0_i32_0 : i32
    scf.if %2 {
      %cst_56 = arith.constant 0.000000e+00 : f32
      %95 = vector.broadcast %cst_56 : f32 to vector<8x512xf32>
      %c0_57 = arith.constant 0 : index
      %c0_58 = arith.constant 0 : index
      %96 = vector.load %arg9[%c0_57, %c0_58] : memref<8x512xf32, #tpu.memory_space<vmem>>, vector<8x512xf32>
      tpu.vector_store %arg9[%c0_57, %c0_58], %95 {strides = array<i32>} : memref<8x512xf32, #tpu.memory_space<vmem>>, vector<8x512xf32>,
      %cst_59 = arith.constant 0.000000e+00 : f32
      %97 = vector.broadcast %cst_59 : f32 to vector<8x512xf32>
      %c0_60 = arith.constant 0 : index
      %c0_61 = arith.constant 0 : index
      %98 = vector.load %arg6[%c0_60, %c0_61] : memref<8x512xf32, #tpu.memory_space<vmem>>, vector<8x512xf32>
      tpu.vector_store %arg6[%c0_60, %c0_61], %97 {strides = array<i32>} : memref<8x512xf32, #tpu.memory_space<vmem>>, vector<8x512xf32>,
    } else {
    }
    %c0 = arith.constant 0 : index
    %c0_1 = arith.constant 0 : index
    %c0_2 = arith.constant 0 : index
    %3 = vector.load %arg1[%c0, %c0_1, %c0_2] : memref<1x8x512xf32, #tpu.memory_space<vmem>>, vector<1x8x512xf32>
    %4 = vector.shape_cast %3 : vector<1x8x512xf32> to vector<8x512xf32>
    %c0_3 = arith.constant 0 : index
    %c0_4 = arith.constant 0 : index
    %5 = vector.load %arg7[%c0_3, %c0_4] : memref<16x512xf32, #tpu.memory_space<vmem>>, vector<8x512xf32>
    tpu.vector_store %arg7[%c0_3, %c0_4], %4 {strides = array<i32>} : memref<16x512xf32, #tpu.memory_space<vmem>>, vector<8x512xf32>,
    %c0_5 = arith.constant 0 : index
    %c0_6 = arith.constant 0 : index
    %6 = vector.load %arg9[%c0_5, %c0_6] : memref<8x512xf32, #tpu.memory_space<vmem>>, vector<8x512xf32>
    %c8 = arith.constant 8 : index
    %c0_7 = arith.constant 0 : index
    %7 = vector.load %arg7[%c8, %c0_7] : memref<16x512xf32, #tpu.memory_space<vmem>>, vector<8x512xf32>
    tpu.vector_store %arg7[%c8, %c0_7], %6 {strides = array<i32>} : memref<16x512xf32, #tpu.memory_space<vmem>>, vector<8x512xf32>,
    %c0_8 = arith.constant 0 : index
    %c0_9 = arith.constant 0 : index
    %8 = vector.load %arg7[%c0_8, %c0_9] : memref<16x512xf32, #tpu.memory_space<vmem>>, vector<16x512xf32>
    %c17_i32 = arith.constant 17 : i32
    %9 = tpu.dynamic_rotate %8 by %c17_i32 dim 1 : vector<16x512xf32>, i32 -> vector<16x512xf32>
    %c0_10 = arith.constant 0 : index
    %c0_11 = arith.constant 0 : index
    %c0_12 = arith.constant 0 : index
    %10 = vector.load %arg4[%c0_10, %c0_11, %c0_12] : memref<9x1x512xf32, #tpu.memory_space<vmem>>, vector<1x1x512xf32>
    %11 = vector.shape_cast %10 : vector<1x1x512xf32> to vector<1x512xf32>
    %12 = vector.broadcast %11 : vector<1x512xf32> to vector<16x512xf32>
    %13 = arith.mulf %9, %12 : vector<16x512xf32>
    %c0_13 = arith.constant 0 : index
    %c0_14 = arith.constant 0 : index
    %14 = vector.load %arg8[%c0_13, %c0_14] : memref<144x512xf32, #tpu.memory_space<vmem>>, vector<16x512xf32>
    tpu.vector_store %arg8[%c0_13, %c0_14], %13 {strides = array<i32>} : memref<144x512xf32, #tpu.memory_space<vmem>>, vector<16x512xf32>,
    %c16_i32 = arith.constant 16 : i32
    %15 = tpu.dynamic_rotate %8 by %c16_i32 dim 1 : vector<16x512xf32>, i32 -> vector<16x512xf32>
    %c1 = arith.constant 1 : index
    %c0_15 = arith.constant 0 : index
    %c0_16 = arith.constant 0 : index
    %16 = vector.load %arg4[%c1, %c0_15, %c0_16] : memref<9x1x512xf32, #tpu.memory_space<vmem>>, vector<1x1x512xf32>
    %17 = vector.shape_cast %16 : vector<1x1x512xf32> to vector<1x512xf32>
    %18 = vector.broadcast %17 : vector<1x512xf32> to vector<16x512xf32>
    %19 = arith.mulf %15, %18 : vector<16x512xf32>
    %c16 = arith.constant 16 : index
    %c0_17 = arith.constant 0 : index
    %20 = vector.load %arg8[%c16, %c0_17] : memref<144x512xf32, #tpu.memory_space<vmem>>, vector<16x512xf32>
    tpu.vector_store %arg8[%c16, %c0_17], %19 {strides = array<i32>} : memref<144x512xf32, #tpu.memory_space<vmem>>, vector<16x512xf32>,
    %c15_i32 = arith.constant 15 : i32
    %21 = tpu.dynamic_rotate %8 by %c15_i32 dim 1 : vector<16x512xf32>, i32 -> vector<16x512xf32>
    %c2 = arith.constant 2 : index
    %c0_18 = arith.constant 0 : index
    %c0_19 = arith.constant 0 : index
    %22 = vector.load %arg4[%c2, %c0_18, %c0_19] : memref<9x1x512xf32, #tpu.memory_space<vmem>>, vector<1x1x512xf32>
    %23 = vector.shape_cast %22 : vector<1x1x512xf32> to vector<1x512xf32>
    %24 = vector.broadcast %23 : vector<1x512xf32> to vector<16x512xf32>
    %25 = arith.mulf %21, %24 : vector<16x512xf32>
    %c32 = arith.constant 32 : index
    %c0_20 = arith.constant 0 : index
    %26 = vector.load %arg8[%c32, %c0_20] : memref<144x512xf32, #tpu.memory_space<vmem>>, vector<16x512xf32>
    tpu.vector_store %arg8[%c32, %c0_20], %25 {strides = array<i32>} : memref<144x512xf32, #tpu.memory_space<vmem>>, vector<16x512xf32>,
    %c1_i32 = arith.constant 1 : i32
    %27 = tpu.dynamic_rotate %8 by %c1_i32 dim 1 : vector<16x512xf32>, i32 -> vector<16x512xf32>
    %c3 = arith.constant 3 : index
    %c0_21 = arith.constant 0 : index
    %c0_22 = arith.constant 0 : index
    %28 = vector.load %arg4[%c3, %c0_21, %c0_22] : memref<9x1x512xf32, #tpu.memory_space<vmem>>, vector<1x1x512xf32>
    %29 = vector.shape_cast %28 : vector<1x1x512xf32> to vector<1x512xf32>
    %30 = vector.broadcast %29 : vector<1x512xf32> to vector<16x512xf32>
    %31 = arith.mulf %27, %30 : vector<16x512xf32>
    %c48 = arith.constant 48 : index
    %c0_23 = arith.constant 0 : index
    %32 = vector.load %arg8[%c48, %c0_23] : memref<144x512xf32, #tpu.memory_space<vmem>>, vector<16x512xf32>
    tpu.vector_store %arg8[%c48, %c0_23], %31 {strides = array<i32>} : memref<144x512xf32, #tpu.memory_space<vmem>>, vector<16x512xf32>,
    %c64 = arith.constant 64 : index
    %c0_24 = arith.constant 0 : index
    %33 = vector.load %arg8[%c64, %c0_24] : memref<144x512xf32, #tpu.memory_space<vmem>>, vector<16x512xf32>
    tpu.vector_store %arg8[%c64, %c0_24], %8 {strides = array<i32>} : memref<144x512xf32, #tpu.memory_space<vmem>>, vector<16x512xf32>,
    %c511_i32 = arith.constant 511 : i32
    %34 = tpu.dynamic_rotate %8 by %c511_i32 dim 1 : vector<16x512xf32>, i32 -> vector<16x512xf32>
    %c5 = arith.constant 5 : index
    %c0_25 = arith.constant 0 : index
    %c0_26 = arith.constant 0 : index
    %35 = vector.load %arg4[%c5, %c0_25, %c0_26] : memref<9x1x512xf32, #tpu.memory_space<vmem>>, vector<1x1x512xf32>
    %36 = vector.shape_cast %35 : vector<1x1x512xf32> to vector<1x512xf32>
    %37 = vector.broadcast %36 : vector<1x512xf32> to vector<16x512xf32>
    %38 = arith.mulf %34, %37 : vector<16x512xf32>
    %c80 = arith.constant 80 : index
    %c0_27 = arith.constant 0 : index
    %39 = vector.load %arg8[%c80, %c0_27] : memref<144x512xf32, #tpu.memory_space<vmem>>, vector<16x512xf32>
    tpu.vector_store %arg8[%c80, %c0_27], %38 {strides = array<i32>} : memref<144x512xf32, #tpu.memory_space<vmem>>, vector<16x512xf32>,
    %c497_i32 = arith.constant 497 : i32
    %40 = tpu.dynamic_rotate %8 by %c497_i32 dim 1 : vector<16x512xf32>, i32 -> vector<16x512xf32>
    %c6 = arith.constant 6 : index
    %c0_28 = arith.constant 0 : index
    %c0_29 = arith.constant 0 : index
    %41 = vector.load %arg4[%c6, %c0_28, %c0_29] : memref<9x1x512xf32, #tpu.memory_space<vmem>>, vector<1x1x512xf32>
    %42 = vector.shape_cast %41 : vector<1x1x512xf32> to vector<1x512xf32>
    %43 = vector.broadcast %42 : vector<1x512xf32> to vector<16x512xf32>
    %44 = arith.mulf %40, %43 : vector<16x512xf32>
    %c96 = arith.constant 96 : index
    %c0_30 = arith.constant 0 : index
    %45 = vector.load %arg8[%c96, %c0_30] : memref<144x512xf32, #tpu.memory_space<vmem>>, vector<16x512xf32>
    tpu.vector_store %arg8[%c96, %c0_30], %44 {strides = array<i32>} : memref<144x512xf32, #tpu.memory_space<vmem>>, vector<16x512xf32>,
    %c496_i32 = arith.constant 496 : i32
    %46 = tpu.dynamic_rotate %8 by %c496_i32 dim 1 : vector<16x512xf32>, i32 -> vector<16x512xf32>
    %c7 = arith.constant 7 : index
    %c0_31 = arith.constant 0 : index
    %c0_32 = arith.constant 0 : index
    %47 = vector.load %arg4[%c7, %c0_31, %c0_32] : memref<9x1x512xf32, #tpu.memory_space<vmem>>, vector<1x1x512xf32>
    %48 = vector.shape_cast %47 : vector<1x1x512xf32> to vector<1x512xf32>
    %49 = vector.broadcast %48 : vector<1x512xf32> to vector<16x512xf32>
    %50 = arith.mulf %46, %49 : vector<16x512xf32>
    %c112 = arith.constant 112 : index
    %c0_33 = arith.constant 0 : index
    %51 = vector.load %arg8[%c112, %c0_33] : memref<144x512xf32, #tpu.memory_space<vmem>>, vector<16x512xf32>
    tpu.vector_store %arg8[%c112, %c0_33], %50 {strides = array<i32>} : memref<144x512xf32, #tpu.memory_space<vmem>>, vector<16x512xf32>,
    %c495_i32 = arith.constant 495 : i32
    %52 = tpu.dynamic_rotate %8 by %c495_i32 dim 1 : vector<16x512xf32>, i32 -> vector<16x512xf32>
    %c8_34 = arith.constant 8 : index
    %c0_35 = arith.constant 0 : index
    %c0_36 = arith.constant 0 : index
    %53 = vector.load %arg4[%c8_34, %c0_35, %c0_36] : memref<9x1x512xf32, #tpu.memory_space<vmem>>, vector<1x1x512xf32>
    %54 = vector.shape_cast %53 : vector<1x1x512xf32> to vector<1x512xf32>
    %55 = vector.broadcast %54 : vector<1x512xf32> to vector<16x512xf32>
    %56 = arith.mulf %52, %55 : vector<16x512xf32>
    %c128 = arith.constant 128 : index
    %c0_37 = arith.constant 0 : index
    %57 = vector.load %arg8[%c128, %c0_37] : memref<144x512xf32, #tpu.memory_space<vmem>>, vector<16x512xf32>
    tpu.vector_store %arg8[%c128, %c0_37], %56 {strides = array<i32>} : memref<144x512xf32, #tpu.memory_space<vmem>>, vector<16x512xf32>,
    %c0_38 = arith.constant 0 : index
    %c0_39 = arith.constant 0 : index
    %58 = vector.load %arg2[%c0_38, %c0_39] : memref<32x144xf32, #tpu.memory_space<vmem>>, vector<32x144xf32>
    %c0_40 = arith.constant 0 : index
    %c0_41 = arith.constant 0 : index
    %59 = vector.load %arg8[%c0_40, %c0_41] : memref<144x512xf32, #tpu.memory_space<vmem>>, vector<144x512xf32>
    %cst = arith.constant dense<0.000000e+00> : vector<32x512xf32>
    %60 = tpu.matmul %58, %59, %cst {dimension_numbers = #tpu.dot_dimension_numbers<[1], [0], [0], [1], [0, 0, 1, 1], [], []>} : vector<32x144xf32>, vector<144x512xf32>, vector<32x512xf32> -> vector<32x512xf32>
    %c0_42 = arith.constant 0 : index
    %c0_43 = arith.constant 0 : index
    %61 = vector.load %arg3[%c0_42, %c0_43] : memref<32x1xf32, #tpu.memory_space<vmem>>, vector<32x1xf32>
    %62 = vector.broadcast %61 : vector<32x1xf32> to vector<32x512xf32>
    %63 = arith.addf %60, %62 : vector<32x512xf32>
    %64 = vector.extract_strided_slice %63 {offsets = [0, 0], sizes = [8, 512], strides = [1, 1]} : vector<32x512xf32> to vector<8x512xf32>
    %65 = vector.extract_strided_slice %63 {offsets = [8, 0], sizes = [8, 512], strides = [1, 1]} : vector<32x512xf32> to vector<8x512xf32>
    %66 = vector.extract_strided_slice %63 {offsets = [16, 0], sizes = [8, 512], strides = [1, 1]} : vector<32x512xf32> to vector<8x512xf32>
    %67 = vector.extract_strided_slice %63 {offsets = [24, 0], sizes = [8, 512], strides = [1, 1]} : vector<32x512xf32> to vector<8x512xf32>
    %68 = arith.negf %64 : vector<8x512xf32>
    %69 = math.exp %68 : vector<8x512xf32>
    %cst_44 = arith.constant 1.000000e+00 : f32
    %70 = vector.broadcast %cst_44 : f32 to vector<8x512xf32>
    %71 = arith.addf %70, %69 : vector<8x512xf32>
    %72 = arith.divf %70, %71 : vector<8x512xf32>
    %73 = arith.negf %65 : vector<8x512xf32>
    %74 = math.exp %73 : vector<8x512xf32>
    %cst_45 = arith.constant 1.000000e+00 : f32
    %75 = vector.broadcast %cst_45 : f32 to vector<8x512xf32>
    %76 = arith.addf %75, %74 : vector<8x512xf32>
    %77 = arith.divf %75, %76 : vector<8x512xf32>
    %78 = arith.negf %66 : vector<8x512xf32>
    %79 = math.exp %78 : vector<8x512xf32>
    %cst_46 = arith.constant 1.000000e+00 : f32
    %80 = vector.broadcast %cst_46 : f32 to vector<8x512xf32>
    %81 = arith.addf %80, %79 : vector<8x512xf32>
    %82 = arith.divf %80, %81 : vector<8x512xf32>
    %83 = math.tanh %67 : vector<8x512xf32>
    %c0_47 = arith.constant 0 : index
    %c0_48 = arith.constant 0 : index
    %84 = vector.load %arg6[%c0_47, %c0_48] : memref<8x512xf32, #tpu.memory_space<vmem>>, vector<8x512xf32>
    %85 = arith.mulf %77, %84 : vector<8x512xf32>
    %86 = arith.mulf %72, %83 : vector<8x512xf32>
    %87 = arith.addf %85, %86 : vector<8x512xf32>
    %88 = math.tanh %87 : vector<8x512xf32>
    %89 = arith.mulf %82, %88 : vector<8x512xf32>
    %c0_49 = arith.constant 0 : index
    %c0_50 = arith.constant 0 : index
    %90 = vector.load %arg6[%c0_49, %c0_50] : memref<8x512xf32, #tpu.memory_space<vmem>>, vector<8x512xf32>
    tpu.vector_store %arg6[%c0_49, %c0_50], %87 {strides = array<i32>} : memref<8x512xf32, #tpu.memory_space<vmem>>, vector<8x512xf32>,
    %c0_51 = arith.constant 0 : index
    %c0_52 = arith.constant 0 : index
    %91 = vector.load %arg9[%c0_51, %c0_52] : memref<8x512xf32, #tpu.memory_space<vmem>>, vector<8x512xf32>
    tpu.vector_store %arg9[%c0_51, %c0_52], %89 {strides = array<i32>} : memref<8x512xf32, #tpu.memory_space<vmem>>, vector<8x512xf32>,
    %c0_53 = arith.constant 0 : index
    %c0_54 = arith.constant 0 : index
    %c0_55 = arith.constant 0 : index
    %92 = vector.load %arg5[%c0_53, %c0_54, %c0_55] : memref<1x8x512xf32, #tpu.memory_space<vmem>>, vector<1x8x512xf32>
    %93 = vector.shape_cast %92 : vector<1x8x512xf32> to vector<8x512xf32>
    %94 = vector.shape_cast %89 : vector<8x512xf32> to vector<1x8x512xf32>
    tpu.vector_store %arg5[%c0_53, %c0_54, %c0_55], %94 {strides = array<i32>} : memref<1x8x512xf32, #tpu.memory_space<vmem>>, vector<1x8x512xf32>,
    return
  }
  func.func @transform_0(%arg0: i32) -> (i32, i32, i32) {
    %c0_i32 = arith.constant 0 : i32
    %c0_i32_0 = arith.constant 0 : i32
    %c0_i32_1 = arith.constant 0 : i32
    return %arg0, %c0_i32, %c0_i32_0 : i32, i32, i32
  }
  func.func @transform_1(%arg0: i32) -> (i32, i32) {
    %c0_i32 = arith.constant 0 : i32
    %c0_i32_0 = arith.constant 0 : i32
    %c0_i32_1 = arith.constant 0 : i32
    return %c0_i32, %c0_i32_0 : i32, i32
  }
  func.func @transform_2(%arg0: i32) -> (i32, i32) {
    %c0_i32 = arith.constant 0 : i32
    %c0_i32_0 = arith.constant 0 : i32
    %c0_i32_1 = arith.constant 0 : i32
    return %c0_i32, %c0_i32_0 : i32, i32
  }
  func.func @transform_3(%arg0: i32) -> (i32, i32, i32) {
    %c0_i32 = arith.constant 0 : i32
    %c0_i32_0 = arith.constant 0 : i32
    %c0_i32_1 = arith.constant 0 : i32
    %c0_i32_2 = arith.constant 0 : i32
    return %c0_i32, %c0_i32_0, %c0_i32_1 : i32, i32, i32
  }
  func.func @transform_4(%arg0: i32) -> (i32, i32, i32) {
    %c0_i32 = arith.constant 0 : i32
    %c0_i32_0 = arith.constant 0 : i32
    %c0_i32_1 = arith.constant 0 : i32
    return %arg0, %c0_i32, %c0_i32_0 : i32, i32, i32
  }
  func.func @transform_5(%arg0: i32) -> (i32, i32) {
    %c0_i32 = arith.constant 0 : i32
    %c0_i32_0 = arith.constant 0 : i32
    %c0_i32_1 = arith.constant 0 : i32
    return %c0_i32, %c0_i32_0 : i32, i32
  }
}

module attributes {stable_mosaic.version = 11 : i64} {
  func.func @_convlstm_layer_kernel(%arg0: i32, %arg1: memref<1x8x512xf32, #tpu.memory_space<vmem>>, %arg2: memref<32x144xf32, #tpu.memory_space<vmem>>, %arg3: memref<32x1xf32, #tpu.memory_space<vmem>>, %arg4: memref<9x1x512xf32, #tpu.memory_space<vmem>>, %arg5: memref<1x8x512xf32, #tpu.memory_space<vmem>>, %arg6: memref<8x512xf32, #tpu.memory_space<vmem>>, %arg7: memref<16x512xf32, #tpu.memory_space<vmem>>, %arg8: memref<144x512xf32, #tpu.memory_space<vmem>>, %arg9: memref<8x512xf32, #tpu.memory_space<vmem>>) attributes {dimension_semantics = [#tpu.dimension_semantics<arbitrary>], iteration_bounds = array<i64: 8>, scalar_prefetch = 0 : i64, scratch_operands = 3 : i64, tpu.core_type = #tpu.core_type<tc>, window_params = [{transform_indices = @transform_0, window_bounds = array<i64: 1, 8, 512>}, {pipeline_mode = #tpu.pipeline_mode<synchronous>, transform_indices = @transform_1, window_bounds = array<i64: 32, 144>}, {pipeline_mode = #tpu.pipeline_mode<synchronous>, transform_indices = @transform_2, window_bounds = array<i64: 32, 1>}, {pipeline_mode = #tpu.pipeline_mode<synchronous>, transform_indices = @transform_3, window_bounds = array<i64: 9, 1, 512>}, {transform_indices = @transform_4, window_bounds = array<i64: 1, 8, 512>}, {pipeline_mode = #tpu.pipeline_mode<synchronous>, transform_indices = @transform_5, window_bounds = array<i64: 8, 512>}]} {
    %c0_i32 = arith.constant 0 : i32
    %0 = arith.cmpi eq, %arg0, %c0_i32 : i32
    %1 = arith.extui %0 : i1 to i32
    %c0_i32_0 = arith.constant 0 : i32
    %2 = arith.cmpi ne, %1, %c0_i32_0 : i32
    scf.if %2 {
      %cst_56 = arith.constant 0.000000e+00 : f32
      %95 = vector.broadcast %cst_56 : f32 to vector<8x512xf32>
      %c0_57 = arith.constant 0 : index
      %c0_58 = arith.constant 0 : index
      %96 = vector.load %arg9[%c0_57, %c0_58] : memref<8x512xf32, #tpu.memory_space<vmem>>, vector<8x512xf32>
      tpu.vector_store %arg9[%c0_57, %c0_58], %95 {strides = array<i32>} : memref<8x512xf32, #tpu.memory_space<vmem>>, vector<8x512xf32>,
      %cst_59 = arith.constant 0.000000e+00 : f32
      %97 = vector.broadcast %cst_59 : f32 to vector<8x512xf32>
      %c0_60 = arith.constant 0 : index
      %c0_61 = arith.constant 0 : index
      %98 = vector.load %arg6[%c0_60, %c0_61] : memref<8x512xf32, #tpu.memory_space<vmem>>, vector<8x512xf32>
      tpu.vector_store %arg6[%c0_60, %c0_61], %97 {strides = array<i32>} : memref<8x512xf32, #tpu.memory_space<vmem>>, vector<8x512xf32>,
    } else {
    }
    %c0 = arith.constant 0 : index
    %c0_1 = arith.constant 0 : index
    %c0_2 = arith.constant 0 : index
    %3 = vector.load %arg1[%c0, %c0_1, %c0_2] : memref<1x8x512xf32, #tpu.memory_space<vmem>>, vector<1x8x512xf32>
    %4 = vector.shape_cast %3 : vector<1x8x512xf32> to vector<8x512xf32>
    %c0_3 = arith.constant 0 : index
    %c0_4 = arith.constant 0 : index
    %5 = vector.load %arg7[%c0_3, %c0_4] : memref<16x512xf32, #tpu.memory_space<vmem>>, vector<8x512xf32>
    tpu.vector_store %arg7[%c0_3, %c0_4], %4 {strides = array<i32>} : memref<16x512xf32, #tpu.memory_space<vmem>>, vector<8x512xf32>,
    %c0_5 = arith.constant 0 : index
    %c0_6 = arith.constant 0 : index
    %6 = vector.load %arg9[%c0_5, %c0_6] : memref<8x512xf32, #tpu.memory_space<vmem>>, vector<8x512xf32>
    %c8 = arith.constant 8 : index
    %c0_7 = arith.constant 0 : index
    %7 = vector.load %arg7[%c8, %c0_7] : memref<16x512xf32, #tpu.memory_space<vmem>>, vector<8x512xf32>
    tpu.vector_store %arg7[%c8, %c0_7], %6 {strides = array<i32>} : memref<16x512xf32, #tpu.memory_space<vmem>>, vector<8x512xf32>,
    %c0_8 = arith.constant 0 : index
    %c0_9 = arith.constant 0 : index
    %8 = vector.load %arg7[%c0_8, %c0_9] : memref<16x512xf32, #tpu.memory_space<vmem>>, vector<16x512xf32>
    %c17_i32 = arith.constant 17 : i32
    %9 = tpu.dynamic_rotate %8 by %c17_i32 dim 1 : vector<16x512xf32>, i32 -> vector<16x512xf32>
    %c0_10 = arith.constant 0 : index
    %c0_11 = arith.constant 0 : index
    %c0_12 = arith.constant 0 : index
    %10 = vector.load %arg4[%c0_10, %c0_11, %c0_12] : memref<9x1x512xf32, #tpu.memory_space<vmem>>, vector<1x1x512xf32>
    %11 = vector.shape_cast %10 : vector<1x1x512xf32> to vector<1x512xf32>
    %12 = vector.broadcast %11 : vector<1x512xf32> to vector<16x512xf32>
    %13 = arith.mulf %9, %12 : vector<16x512xf32>
    %c0_13 = arith.constant 0 : index
    %c0_14 = arith.constant 0 : index
    %14 = vector.load %arg8[%c0_13, %c0_14] : memref<144x512xf32, #tpu.memory_space<vmem>>, vector<16x512xf32>
    tpu.vector_store %arg8[%c0_13, %c0_14], %13 {strides = array<i32>} : memref<144x512xf32, #tpu.memory_space<vmem>>, vector<16x512xf32>,
    %c16_i32 = arith.constant 16 : i32
    %15 = tpu.dynamic_rotate %8 by %c16_i32 dim 1 : vector<16x512xf32>, i32 -> vector<16x512xf32>
    %c1 = arith.constant 1 : index
    %c0_15 = arith.constant 0 : index
    %c0_16 = arith.constant 0 : index
    %16 = vector.load %arg4[%c1, %c0_15, %c0_16] : memref<9x1x512xf32, #tpu.memory_space<vmem>>, vector<1x1x512xf32>
    %17 = vector.shape_cast %16 : vector<1x1x512xf32> to vector<1x512xf32>
    %18 = vector.broadcast %17 : vector<1x512xf32> to vector<16x512xf32>
    %19 = arith.mulf %15, %18 : vector<16x512xf32>
    %c16 = arith.constant 16 : index
    %c0_17 = arith.constant 0 : index
    %20 = vector.load %arg8[%c16, %c0_17] : memref<144x512xf32, #tpu.memory_space<vmem>>, vector<16x512xf32>
    tpu.vector_store %arg8[%c16, %c0_17], %19 {strides = array<i32>} : memref<144x512xf32, #tpu.memory_space<vmem>>, vector<16x512xf32>,
    %c15_i32 = arith.constant 15 : i32
    %21 = tpu.dynamic_rotate %8 by %c15_i32 dim 1 : vector<16x512xf32>, i32 -> vector<16x512xf32>
    %c2 = arith.constant 2 : index
    %c0_18 = arith.constant 0 : index
    %c0_19 = arith.constant 0 : index
    %22 = vector.load %arg4[%c2, %c0_18, %c0_19] : memref<9x1x512xf32, #tpu.memory_space<vmem>>, vector<1x1x512xf32>
    %23 = vector.shape_cast %22 : vector<1x1x512xf32> to vector<1x512xf32>
    %24 = vector.broadcast %23 : vector<1x512xf32> to vector<16x512xf32>
    %25 = arith.mulf %21, %24 : vector<16x512xf32>
    %c32 = arith.constant 32 : index
    %c0_20 = arith.constant 0 : index
    %26 = vector.load %arg8[%c32, %c0_20] : memref<144x512xf32, #tpu.memory_space<vmem>>, vector<16x512xf32>
    tpu.vector_store %arg8[%c32, %c0_20], %25 {strides = array<i32>} : memref<144x512xf32, #tpu.memory_space<vmem>>, vector<16x512xf32>,
    %c1_i32 = arith.constant 1 : i32
    %27 = tpu.dynamic_rotate %8 by %c1_i32 dim 1 : vector<16x512xf32>, i32 -> vector<16x512xf32>
    %c3 = arith.constant 3 : index
    %c0_21 = arith.constant 0 : index
    %c0_22 = arith.constant 0 : index
    %28 = vector.load %arg4[%c3, %c0_21, %c0_22] : memref<9x1x512xf32, #tpu.memory_space<vmem>>, vector<1x1x512xf32>
    %29 = vector.shape_cast %28 : vector<1x1x512xf32> to vector<1x512xf32>
    %30 = vector.broadcast %29 : vector<1x512xf32> to vector<16x512xf32>
    %31 = arith.mulf %27, %30 : vector<16x512xf32>
    %c48 = arith.constant 48 : index
    %c0_23 = arith.constant 0 : index
    %32 = vector.load %arg8[%c48, %c0_23] : memref<144x512xf32, #tpu.memory_space<vmem>>, vector<16x512xf32>
    tpu.vector_store %arg8[%c48, %c0_23], %31 {strides = array<i32>} : memref<144x512xf32, #tpu.memory_space<vmem>>, vector<16x512xf32>,
    %c64 = arith.constant 64 : index
    %c0_24 = arith.constant 0 : index
    %33 = vector.load %arg8[%c64, %c0_24] : memref<144x512xf32, #tpu.memory_space<vmem>>, vector<16x512xf32>
    tpu.vector_store %arg8[%c64, %c0_24], %8 {strides = array<i32>} : memref<144x512xf32, #tpu.memory_space<vmem>>, vector<16x512xf32>,
    %c511_i32 = arith.constant 511 : i32
    %34 = tpu.dynamic_rotate %8 by %c511_i32 dim 1 : vector<16x512xf32>, i32 -> vector<16x512xf32>
    %c5 = arith.constant 5 : index
    %c0_25 = arith.constant 0 : index
    %c0_26 = arith.constant 0 : index
    %35 = vector.load %arg4[%c5, %c0_25, %c0_26] : memref<9x1x512xf32, #tpu.memory_space<vmem>>, vector<1x1x512xf32>
    %36 = vector.shape_cast %35 : vector<1x1x512xf32> to vector<1x512xf32>
    %37 = vector.broadcast %36 : vector<1x512xf32> to vector<16x512xf32>
    %38 = arith.mulf %34, %37 : vector<16x512xf32>
    %c80 = arith.constant 80 : index
    %c0_27 = arith.constant 0 : index
    %39 = vector.load %arg8[%c80, %c0_27] : memref<144x512xf32, #tpu.memory_space<vmem>>, vector<16x512xf32>
    tpu.vector_store %arg8[%c80, %c0_27], %38 {strides = array<i32>} : memref<144x512xf32, #tpu.memory_space<vmem>>, vector<16x512xf32>,
    %c497_i32 = arith.constant 497 : i32
    %40 = tpu.dynamic_rotate %8 by %c497_i32 dim 1 : vector<16x512xf32>, i32 -> vector<16x512xf32>
    %c6 = arith.constant 6 : index
    %c0_28 = arith.constant 0 : index
    %c0_29 = arith.constant 0 : index
    %41 = vector.load %arg4[%c6, %c0_28, %c0_29] : memref<9x1x512xf32, #tpu.memory_space<vmem>>, vector<1x1x512xf32>
    %42 = vector.shape_cast %41 : vector<1x1x512xf32> to vector<1x512xf32>
    %43 = vector.broadcast %42 : vector<1x512xf32> to vector<16x512xf32>
    %44 = arith.mulf %40, %43 : vector<16x512xf32>
    %c96 = arith.constant 96 : index
    %c0_30 = arith.constant 0 : index
    %45 = vector.load %arg8[%c96, %c0_30] : memref<144x512xf32, #tpu.memory_space<vmem>>, vector<16x512xf32>
    tpu.vector_store %arg8[%c96, %c0_30], %44 {strides = array<i32>} : memref<144x512xf32, #tpu.memory_space<vmem>>, vector<16x512xf32>,
    %c496_i32 = arith.constant 496 : i32
    %46 = tpu.dynamic_rotate %8 by %c496_i32 dim 1 : vector<16x512xf32>, i32 -> vector<16x512xf32>
    %c7 = arith.constant 7 : index
    %c0_31 = arith.constant 0 : index
    %c0_32 = arith.constant 0 : index
    %47 = vector.load %arg4[%c7, %c0_31, %c0_32] : memref<9x1x512xf32, #tpu.memory_space<vmem>>, vector<1x1x512xf32>
    %48 = vector.shape_cast %47 : vector<1x1x512xf32> to vector<1x512xf32>
    %49 = vector.broadcast %48 : vector<1x512xf32> to vector<16x512xf32>
    %50 = arith.mulf %46, %49 : vector<16x512xf32>
    %c112 = arith.constant 112 : index
    %c0_33 = arith.constant 0 : index
    %51 = vector.load %arg8[%c112, %c0_33] : memref<144x512xf32, #tpu.memory_space<vmem>>, vector<16x512xf32>
    tpu.vector_store %arg8[%c112, %c0_33], %50 {strides = array<i32>} : memref<144x512xf32, #tpu.memory_space<vmem>>, vector<16x512xf32>,
    %c495_i32 = arith.constant 495 : i32
    %52 = tpu.dynamic_rotate %8 by %c495_i32 dim 1 : vector<16x512xf32>, i32 -> vector<16x512xf32>
    %c8_34 = arith.constant 8 : index
    %c0_35 = arith.constant 0 : index
    %c0_36 = arith.constant 0 : index
    %53 = vector.load %arg4[%c8_34, %c0_35, %c0_36] : memref<9x1x512xf32, #tpu.memory_space<vmem>>, vector<1x1x512xf32>
    %54 = vector.shape_cast %53 : vector<1x1x512xf32> to vector<1x512xf32>
    %55 = vector.broadcast %54 : vector<1x512xf32> to vector<16x512xf32>
    %56 = arith.mulf %52, %55 : vector<16x512xf32>
    %c128 = arith.constant 128 : index
    %c0_37 = arith.constant 0 : index
    %57 = vector.load %arg8[%c128, %c0_37] : memref<144x512xf32, #tpu.memory_space<vmem>>, vector<16x512xf32>
    tpu.vector_store %arg8[%c128, %c0_37], %56 {strides = array<i32>} : memref<144x512xf32, #tpu.memory_space<vmem>>, vector<16x512xf32>,
    %c0_38 = arith.constant 0 : index
    %c0_39 = arith.constant 0 : index
    %58 = vector.load %arg2[%c0_38, %c0_39] : memref<32x144xf32, #tpu.memory_space<vmem>>, vector<32x144xf32>
    %c0_40 = arith.constant 0 : index
    %c0_41 = arith.constant 0 : index
    %59 = vector.load %arg8[%c0_40, %c0_41] : memref<144x512xf32, #tpu.memory_space<vmem>>, vector<144x512xf32>
    %cst = arith.constant dense<0.000000e+00> : vector<32x512xf32>
    %60 = tpu.matmul %58, %59, %cst {dimension_numbers = #tpu.dot_dimension_numbers<[1], [0], [0], [1], [0, 0, 1, 1], [], []>} : vector<32x144xf32>, vector<144x512xf32>, vector<32x512xf32> -> vector<32x512xf32>
    %c0_42 = arith.constant 0 : index
    %c0_43 = arith.constant 0 : index
    %61 = vector.load %arg3[%c0_42, %c0_43] : memref<32x1xf32, #tpu.memory_space<vmem>>, vector<32x1xf32>
    %62 = vector.broadcast %61 : vector<32x1xf32> to vector<32x512xf32>
    %63 = arith.addf %60, %62 : vector<32x512xf32>
    %64 = vector.extract_strided_slice %63 {offsets = [0, 0], sizes = [8, 512], strides = [1, 1]} : vector<32x512xf32> to vector<8x512xf32>
    %65 = vector.extract_strided_slice %63 {offsets = [8, 0], sizes = [8, 512], strides = [1, 1]} : vector<32x512xf32> to vector<8x512xf32>
    %66 = vector.extract_strided_slice %63 {offsets = [16, 0], sizes = [8, 512], strides = [1, 1]} : vector<32x512xf32> to vector<8x512xf32>
    %67 = vector.extract_strided_slice %63 {offsets = [24, 0], sizes = [8, 512], strides = [1, 1]} : vector<32x512xf32> to vector<8x512xf32>
    %68 = arith.negf %64 : vector<8x512xf32>
    %69 = math.exp %68 : vector<8x512xf32>
    %cst_44 = arith.constant 1.000000e+00 : f32
    %70 = vector.broadcast %cst_44 : f32 to vector<8x512xf32>
    %71 = arith.addf %70, %69 : vector<8x512xf32>
    %72 = arith.divf %70, %71 : vector<8x512xf32>
    %73 = arith.negf %65 : vector<8x512xf32>
    %74 = math.exp %73 : vector<8x512xf32>
    %cst_45 = arith.constant 1.000000e+00 : f32
    %75 = vector.broadcast %cst_45 : f32 to vector<8x512xf32>
    %76 = arith.addf %75, %74 : vector<8x512xf32>
    %77 = arith.divf %75, %76 : vector<8x512xf32>
    %78 = arith.negf %66 : vector<8x512xf32>
    %79 = math.exp %78 : vector<8x512xf32>
    %cst_46 = arith.constant 1.000000e+00 : f32
    %80 = vector.broadcast %cst_46 : f32 to vector<8x512xf32>
    %81 = arith.addf %80, %79 : vector<8x512xf32>
    %82 = arith.divf %80, %81 : vector<8x512xf32>
    %83 = math.tanh %67 : vector<8x512xf32>
    %c0_47 = arith.constant 0 : index
    %c0_48 = arith.constant 0 : index
    %84 = vector.load %arg6[%c0_47, %c0_48] : memref<8x512xf32, #tpu.memory_space<vmem>>, vector<8x512xf32>
    %85 = arith.mulf %77, %84 : vector<8x512xf32>
    %86 = arith.mulf %72, %83 : vector<8x512xf32>
    %87 = arith.addf %85, %86 : vector<8x512xf32>
    %88 = math.tanh %87 : vector<8x512xf32>
    %89 = arith.mulf %82, %88 : vector<8x512xf32>
    %c0_49 = arith.constant 0 : index
    %c0_50 = arith.constant 0 : index
    %90 = vector.load %arg6[%c0_49, %c0_50] : memref<8x512xf32, #tpu.memory_space<vmem>>, vector<8x512xf32>
    tpu.vector_store %arg6[%c0_49, %c0_50], %87 {strides = array<i32>} : memref<8x512xf32, #tpu.memory_space<vmem>>, vector<8x512xf32>,
    %c0_51 = arith.constant 0 : index
    %c0_52 = arith.constant 0 : index
    %91 = vector.load %arg9[%c0_51, %c0_52] : memref<8x512xf32, #tpu.memory_space<vmem>>, vector<8x512xf32>
    tpu.vector_store %arg9[%c0_51, %c0_52], %89 {strides = array<i32>} : memref<8x512xf32, #tpu.memory_space<vmem>>, vector<8x512xf32>,
    %c0_53 = arith.constant 0 : index
    %c0_54 = arith.constant 0 : index
    %c0_55 = arith.constant 0 : index
    %92 = vector.load %arg5[%c0_53, %c0_54, %c0_55] : memref<1x8x512xf32, #tpu.memory_space<vmem>>, vector<1x8x512xf32>
    %93 = vector.shape_cast %92 : vector<1x8x512xf32> to vector<8x512xf32>
    %94 = vector.shape_cast %89 : vector<8x512xf32> to vector<1x8x512xf32>
    tpu.vector_store %arg5[%c0_53, %c0_54, %c0_55], %94 {strides = array<i32>} : memref<1x8x512xf32, #tpu.memory_space<vmem>>, vector<1x8x512xf32>,
    return
  }
  func.func @transform_0(%arg0: i32) -> (i32, i32, i32) {
    %c0_i32 = arith.constant 0 : i32
    %c0_i32_0 = arith.constant 0 : i32
    %c0_i32_1 = arith.constant 0 : i32
    return %arg0, %c0_i32, %c0_i32_0 : i32, i32, i32
  }
  func.func @transform_1(%arg0: i32) -> (i32, i32) {
    %c0_i32 = arith.constant 0 : i32
    %c0_i32_0 = arith.constant 0 : i32
    %c0_i32_1 = arith.constant 0 : i32
    return %c0_i32, %c0_i32_0 : i32, i32
  }
  func.func @transform_2(%arg0: i32) -> (i32, i32) {
    %c0_i32 = arith.constant 0 : i32
    %c0_i32_0 = arith.constant 0 : i32
    %c0_i32_1 = arith.constant 0 : i32
    return %c0_i32, %c0_i32_0 : i32, i32
  }
  func.func @transform_3(%arg0: i32) -> (i32, i32, i32) {
    %c0_i32 = arith.constant 0 : i32
    %c0_i32_0 = arith.constant 0 : i32
    %c0_i32_1 = arith.constant 0 : i32
    %c0_i32_2 = arith.constant 0 : i32
    return %c0_i32, %c0_i32_0, %c0_i32_1 : i32, i32, i32
  }
  func.func @transform_4(%arg0: i32) -> (i32, i32, i32) {
    %c0_i32 = arith.constant 0 : i32
    %c0_i32_0 = arith.constant 0 : i32
    %c0_i32_1 = arith.constant 0 : i32
    return %arg0, %c0_i32, %c0_i32_0 : i32, i32, i32
  }
  func.func @transform_5(%arg0: i32) -> (i32, i32) {
    %c0_i32 = arith.constant 0 : i32
    %c0_i32_0 = arith.constant 0 : i32
    %c0_i32_1 = arith.constant 0 : i32
    return %c0_i32, %c0_i32_0 : i32, i32
  }
}

</mosaic_0001>

<llo_original>
// kernel: _lambda_.3
$region0: #{_lambda_.3}
  #allocation0 [shape = 'u32[]', space=smem, size = 0x4, offset = 0x4, fixed_abs, tag = 'smem constant byte address 0x4 - core index']
  #allocation1 [shape = 'u32[144,128]{1,0:T(1,128)}', space=vmem, size = 0x12000, scoped, tag = 'internal scratch']
  #allocation2 [shape = 'f32[16,512]{1,0:T(8,128)}', space=vmem, size = 0x8000, scoped, tag = 'scratch operand']
  #allocation3 [shape = 'f32[144,512]{1,0:T(8,128)}', space=vmem, size = 0x48000, scoped, tag = 'scratch operand']
  #allocation4 [shape = 'f32[8,512]{1,0:T(8,128)}', space=vmem, size = 0x4000, scoped, tag = 'scratch operand']
  %s0 = inlined_call_operand.vmem [shape: f32[8,8,512], index: 0, kind: input, shape index: {}]
  %s1 = inlined_call_operand.vmem [shape: f32[32,144], index: 1, kind: input, shape index: {}]
  %s2 = inlined_call_operand.vmem [shape: f32[32,1], index: 2, kind: input, shape index: {}]
  %s3 = inlined_call_operand.vmem [shape: f32[9,1,512], index: 3, kind: input, shape index: {}]
  %s4 = inlined_call_operand.vmem [shape: f32[8,8,512], index: 4, kind: output, shape index: {0}]
  %s5 = inlined_call_operand.vmem [shape: f32[8,512], index: 5, kind: output, shape index: {1}]
  %6 = xla_tuple %s4, %s5
  %s7 = sld [smem:[#allocation0]]
  $region61: #{_lambda_.3} parent=0
    _
  %s9 = ssub.s32 1, %s7
  %s10 = scalar_select 0, %s9, %s7
  loop: start=0, step=1, limit=10
  $region2: #{_lambda_.3} parent=0 // loop_pre_header
    _
  $region3: #{_lambda_.3} parent=0 // loop_header
    %s12 = sphi 0, %s16
    %p13 = scmp.ge.s32.totalorder %s12, 10
    %s22 = sphi 0, %s24
    %s25 = sphi 0, %s22
    %s26 = sphi 0, %s25
    %s42 = sphi 0, %s26
    %s46 = sphi 0, %s46
    %s48 = sphi 0, %s46
    %s49 = sphi 0, %s48
    %s63 = sphi 0, %s49
    %s67 = sphi 0, %s67
    %s69 = sphi 0, %s67
    %s70 = sphi 0, %s69
    %s84 = sphi 0, %s70
    %s88 = sphi 0, %s88
    %s90 = sphi 0, %s88
    %s91 = sphi 0, %s90
    %s105 = sphi 0, %s91
    %s111 = sphi 0, %s113
    %s114 = sphi 0, %s111
    %s115 = sphi 0, %s114
    %s131 = sphi 0, %s115
    %s135 = sphi 0, %s135
    %s137 = sphi 0, %s135
    %s138 = sphi 0, %s137
    %s152 = sphi 0, %s138
  $region4: #{_lambda_.3} parent=0 // loop_header_branch
    %15 = sbr.rel (%p13) target = $region8
  $region5: #{_lambda_.3} parent=0 // loop_body
    %s17 = ssub.s32 %s12, 1
    %s18 = ssub.s32 %s12, 2
    %s19 = sadd.s32 %s12, 1
    %s20 = ssub.s32 %s12, %s19
    %p21 = scmp.eq.s32.totalorder %s20, 0
    %s23 = sadd.s32 %s22, 1
    %s24 = scalar_select %p21, %s22, %s23
    %p27 = pneg %p21
    %p28 = scmp.eq.s32.totalorder %s12, 7
    %p29 = por %p27, %p28
    %p30 = scmp.ne.s32.totalorder %s22, %s25
    %p31 = scmp.eq.s32.totalorder %s12, 0
    %p32 = por %p30, %p31
    %p33 = scmp.ne.s32.totalorder %s22, %s25
    %p34 = scmp.eq.s32.totalorder %s17, 7
    %p35 = por %p33, %p34
    %p36 = scmp.ne.s32.totalorder %s25, %s26
    %p37 = scmp.eq.s32.totalorder %s17, 0
    %p38 = por %p36, %p37
    %p39 = scmp.ne.s32.totalorder %s25, %s26
    %p40 = scmp.eq.s32.totalorder %s18, 7
    %p41 = por %p39, %p40
    %p43 = scmp.ne.s32.totalorder %s26, %s42
    %p44 = scmp.eq.s32.totalorder %s18, 0
    %p45 = por %p43, %p44
    %s47 = sadd.s32 %s46, 1
    %p50 = scmp.eq.s32.totalorder %s12, 7
    %p51 = scmp.ne.s32.totalorder %s46, %s48
    %p52 = scmp.eq.s32.totalorder %s12, 0
    %p53 = por %p51, %p52
    %p54 = scmp.ne.s32.totalorder %s46, %s48
    %p55 = scmp.eq.s32.totalorder %s17, 7
    %p56 = por %p54, %p55
    %p57 = scmp.ne.s32.totalorder %s48, %s49
    %p58 = scmp.eq.s32.totalorder %s17, 0
    %p59 = por %p57, %p58
    %p60 = scmp.ne.s32.totalorder %s48, %s49
    %p61 = scmp.eq.s32.totalorder %s18, 7
    %p62 = por %p60, %p61
    %p64 = scmp.ne.s32.totalorder %s49, %s63
    %p65 = scmp.eq.s32.totalorder %s18, 0
    %p66 = por %p64, %p65
    %s68 = sadd.s32 %s67, 1
    %p71 = scmp.eq.s32.totalorder %s12, 7
    %p72 = scmp.ne.s32.totalorder %s67, %s69
    %p73 = scmp.eq.s32.totalorder %s12, 0
    %p74 = por %p72, %p73
    %p75 = scmp.ne.s32.totalorder %s67, %s69
    %p76 = scmp.eq.s32.totalorder %s17, 7
    %p77 = por %p75, %p76
    %p78 = scmp.ne.s32.totalorder %s69, %s70
    %p79 = scmp.eq.s32.totalorder %s17, 0
    %p80 = por %p78, %p79
    %p81 = scmp.ne.s32.totalorder %s69, %s70
    %p82 = scmp.eq.s32.totalorder %s18, 7
    %p83 = por %p81, %p82
    %p85 = scmp.ne.s32.totalorder %s70, %s84
    %p86 = scmp.eq.s32.totalorder %s18, 0
    %p87 = por %p85, %p86
    %s89 = sadd.s32 %s88, 1
    %p92 = scmp.eq.s32.totalorder %s12, 7
    %p93 = scmp.ne.s32.totalorder %s88, %s90
    %p94 = scmp.eq.s32.totalorder %s12, 0
    %p95 = por %p93, %p94
    %p96 = scmp.ne.s32.totalorder %s88, %s90
    %p97 = scmp.eq.s32.totalorder %s17, 7
    %p98 = por %p96, %p97
    %p99 = scmp.ne.s32.totalorder %s90, %s91
    %p100 = scmp.eq.s32.totalorder %s17, 0
    %p101 = por %p99, %p100
    %p102 = scmp.ne.s32.totalorder %s90, %s91
    %p103 = scmp.eq.s32.totalorder %s18, 7
    %p104 = por %p102, %p103
    %p106 = scmp.ne.s32.totalorder %s91, %s105
    %p107 = scmp.eq.s32.totalorder %s18, 0
    %p108 = por %p106, %p107
    %s109 = ssub.s32 %s12, %s19
    %p110 = scmp.eq.s32.totalorder %s109, 0
    %s112 = sadd.s32 %s111, 1
    %s113 = scalar_select %p110, %s111, %s112
    %p116 = pneg %p110
    %p117 = scmp.eq.s32.totalorder %s12, 7
    %p118 = por %p116, %p117
    %p119 = scmp.ne.s32.totalorder %s111, %s114
    %p120 = scmp.eq.s32.totalorder %s12, 0
    %p121 = por %p119, %p120
    %p122 = scmp.ne.s32.totalorder %s111, %s114
    %p123 = scmp.eq.s32.totalorder %s17, 7
    %p124 = por %p122, %p123
    %p125 = scmp.ne.s32.totalorder %s114, %s115
    %p126 = scmp.eq.s32.totalorder %s17, 0
    %p127 = por %p125, %p126
    %p128 = scmp.ne.s32.totalorder %s114, %s115
    %p129 = scmp.eq.s32.totalorder %s18, 7
    %p130 = por %p128, %p129
    %p132 = scmp.ne.s32.totalorder %s115, %s131
    %p133 = scmp.eq.s32.totalorder %s18, 0
    %p134 = por %p132, %p133
    %s136 = sadd.s32 %s135, 1
    %p139 = scmp.eq.s32.totalorder %s12, 7
    %p140 = scmp.ne.s32.totalorder %s135, %s137
    %p141 = scmp.eq.s32.totalorder %s12, 0
    %p142 = por %p140, %p141
    %p143 = scmp.ne.s32.totalorder %s135, %s137
    %p144 = scmp.eq.s32.totalorder %s17, 7
    %p145 = por %p143, %p144
    %p146 = scmp.ne.s32.totalorder %s137, %s138
    %p147 = scmp.eq.s32.totalorder %s17, 0
    %p148 = por %p146, %p147
    %p149 = scmp.ne.s32.totalorder %s137, %s138
    %p150 = scmp.eq.s32.totalorder %s18, 7
    %p151 = por %p149, %p150
    %p153 = scmp.ne.s32.totalorder %s138, %s152
    %p154 = scmp.eq.s32.totalorder %s18, 0
    %p155 = por %p153, %p154
    %p156 = scmp.le.s32.totalorder 1, %s12
    %p157 = scmp.lt.s32.totalorder %s12, 9
    %p158 = pnand %p156, %p157
    %p159 = pneg %p158
    // Predicated region
    $region9: #{_lambda_.3} parent=5 // pred_check
      _
    $region10: #{_lambda_.3} parent=5 // pred_check_branch
      %161 = sbr.rel (%p158) target = $region12
    $region11: #{_lambda_.3} parent=5 // pred_region
      %s162 = ssub.s32 %s12, 1
      // Predicated region
      $region13: #{_lambda_.3} parent=11 // pred_check
        %p163 = pneg %p59
      $region14: #{_lambda_.3} parent=11 // pred_check_branch
        %165 = sbr.rel (%p163) target = $region16
      $region15: #{_lambda_.3} parent=11 // pred_region
        _
      $region16: #{_lambda_.3} parent=11 // pred_fallthru
        _
      // Predicated region
      $region17: #{_lambda_.3} parent=11 // pred_check
        %p166 = pneg %p80
      $region18: #{_lambda_.3} parent=11 // pred_check_branch
        %168 = sbr.rel (%p166) target = $region20
      $region19: #{_lambda_.3} parent=11 // pred_region
        _
      $region20: #{_lambda_.3} parent=11 // pred_fallthru
        _
      // Predicated region
      $region21: #{_lambda_.3} parent=11 // pred_check
        %p169 = pneg %p101
      $region22: #{_lambda_.3} parent=11 // pred_check_branch
        %171 = sbr.rel (%p169) target = $region24
      $region23: #{_lambda_.3} parent=11 // pred_region
        _
      $region24: #{_lambda_.3} parent=11 // pred_fallthru
        _
    $region12: #{_lambda_.3} parent=5 // pred_fallthru
      _
    %p172 = scmp.lt.s32.totalorder %s12, 8
    // Predicated region
    $region25: #{_lambda_.3} parent=5 // pred_check
      %p173 = pneg %p172
    $region26: #{_lambda_.3} parent=5 // pred_check_branch
      %175 = sbr.rel (%p173) target = $region28
    $region27: #{_lambda_.3} parent=5 // pred_region
      // Predicated region
      $region29: #{_lambda_.3} parent=27 // pred_check
        %p176 = pneg %p32
      $region30: #{_lambda_.3} parent=27 // pred_check_branch
        %178 = sbr.rel (%p176) target = $region32
      $region31: #{_lambda_.3} parent=27 // pred_region
        %p179 = scmp.lt.s32.totalorder %s12, 7
        %s180 = scalar_select %p179, %s12, 7
        %s181 = smul.addr %s180, 4
        %s182 = smul.addr %s181, 8
        %s183 = scalar_lea.vmem %s0, %s182
      $region32: #{_lambda_.3} parent=27 // pred_fallthru
        _
    $region28: #{_lambda_.3} parent=5 // pred_fallthru
      _
    %p184 = scmp.le.s32.totalorder 1, %s12
    %p185 = scmp.lt.s32.totalorder %s12, 9
    %p186 = pnand %p184, %p185
    %p187 = pneg %p186
    // Predicated region
    $region33: #{_lambda_.3} parent=5 // pred_check
      _
    $region34: #{_lambda_.3} parent=5 // pred_check_branch
      %189 = sbr.rel (%p186) target = $region36
    $region35: #{_lambda_.3} parent=5 // pred_region
      %s190 = ssub.s32 %s12, 1
      %p191 = scmp.lt.s32.totalorder %s17, 7
      %s192 = scalar_select %p191, %s17, 7
      %s193 = smul.addr %s192, 4
      %s194 = smul.addr %s193, 8
      %s195 = scalar_lea.vmem %s0, %s194
      %p196 = pneg %p38
      %p197 = pneg %p35
      %p198 = pneg %p59
      %p199 = pneg %p56
      %p200 = pneg %p80
      %p201 = pneg %p77
      %p202 = pneg %p101
      %p203 = pneg %p98
      %p204 = pneg %p127
      %p205 = pneg %p124
      %p206 = scmp.lt.s32.totalorder %s17, 7
      %s207 = scalar_select %p206, %s17, 7
      %s208 = smul.addr %s207, 4
      %s209 = smul.addr %s208, 8
      %s210 = scalar_lea.vmem %s4, %s209
      %p211 = pneg %p148
      %p212 = pneg %p145
      %p213 = scmp.lt.s32.totalorder %s17, 7
      %s214 = scalar_select %p213, %s17, 7
      %s215 = smul.addr %s214, 4
      %s216 = smul.addr %s215, 8
      %s217 = scalar_lea.vmem %s0, %s216
      %p218 = scmp.lt.s32.totalorder %s17, 7
      %s219 = scalar_select %p218, %s17, 7
      %s220 = smul.addr %s219, 4
      %s221 = smul.addr %s220, 8
      %s222 = scalar_lea.vmem %s4, %s221
      %p223 = scmp.eq.s32.totalorder %s17, 0
      // Predicated region
      $region37: #{_lambda_.3} parent=35 // pred_check
        %p224 = pneg %p223
      $region38: #{_lambda_.3} parent=35 // pred_check_branch
        %226 = sbr.rel (%p224) target = $region40
      $region39: #{_lambda_.3} parent=35 // pred_region
        %227 = vst [vmem:[#allocation4] sm:$0xff] 0.0
        %228 = vst [vmem:[#allocation4 + $0x8] sm:$0xff] 0.0
        %229 = vst [vmem:[#allocation4 + $0x10] sm:$0xff] 0.0
        %230 = vst [vmem:[#allocation4 + $0x18] sm:$0xff] 0.0
        %231 = vst [vmem:[%s5] sm:$0xff] 0.0
        %232 = vst [vmem:[%s5 + $0x8] sm:$0xff] 0.0
        %233 = vst [vmem:[%s5 + $0x10] sm:$0xff] 0.0
        %234 = vst [vmem:[%s5 + $0x18] sm:$0xff] 0.0
      $region40: #{_lambda_.3} parent=35 // pred_fallthru
        _
      %v235 = vld [vmem:[%s217] sm:$0xff]
      %v236 = vld [vmem:[%s217 + $0x8] sm:$0xff]
      %v237 = vld [vmem:[%s217 + $0x10] sm:$0xff]
      %v238 = vld [vmem:[%s217 + $0x18] sm:$0xff]
      %239 = vst [vmem:[#allocation2] sm:$0xff] %v235
      %240 = vst [vmem:[#allocation2 + $0x8] sm:$0xff] %v236
      %241 = vst [vmem:[#allocation2 + $0x10] sm:$0xff] %v237
      %242 = vst [vmem:[#allocation2 + $0x18] sm:$0xff] %v238
      %v243 = vld [vmem:[#allocation4] sm:$0xff]
      %v244 = vld [vmem:[#allocation4 + $0x8] sm:$0xff]
      %v245 = vld [vmem:[#allocation4 + $0x10] sm:$0xff]
      %v246 = vld [vmem:[#allocation4 + $0x18] sm:$0xff]
      %247 = vst [vmem:[#allocation2 + $0x20] sm:$0xff] %v243
      %248 = vst [vmem:[#allocation2 + $0x28] sm:$0xff] %v244
      %249 = vst [vmem:[#allocation2 + $0x30] sm:$0xff] %v245
      %250 = vst [vmem:[#allocation2 + $0x38] sm:$0xff] %v246
      %v251 = vld [vmem:[#allocation2] sm:$0xff]
      %v252 = vld [vmem:[#allocation2 + $0x8] sm:$0xff]
      %v253 = vld [vmem:[#allocation2 + $0x10] sm:$0xff]
      %v254 = vld [vmem:[#allocation2 + $0x18] sm:$0xff]
      %v255 = vld [vmem:[#allocation2 + $0x20] sm:$0xff]
      %v256 = vld [vmem:[#allocation2 + $0x28] sm:$0xff]
      %v257 = vld [vmem:[#allocation2 + $0x30] sm:$0xff]
      %v258 = vld [vmem:[#allocation2 + $0x38] sm:$0xff]
      %259 = vrot.lane.b32.xlu0 %v251, 17
      %v260 = vpop.permute.xlu0 %259
      %261 = vrot.lane.b32.xlu0 %v255, 17
      %v262 = vpop.permute.xlu0 %261
      %263 = vrot.lane.b32.xlu0 %v252, 17
      %v264 = vpop.permute.xlu0 %263
      %265 = vrot.lane.b32.xlu0 %v256, 17
      %v266 = vpop.permute.xlu0 %265
      %267 = vrot.lane.b32.xlu0 %v253, 17
      %v268 = vpop.permute.xlu0 %267
      %269 = vrot.lane.b32.xlu0 %v257, 17
      %v270 = vpop.permute.xlu0 %269
      %271 = vrot.lane.b32.xlu0 %v254, 17
      %v272 = vpop.permute.xlu0 %271
      %273 = vrot.lane.b32.xlu0 %v258, 17
      %v274 = vpop.permute.xlu0 %273
      %v275 = vlaneseq
      %v276 = vand.u32 %v275, 127
      %vm277 = vcmp.lt.s32.totalorder %v276, 17
      %v278 = vsel %vm277, %v268, %v272
      %v279 = vsel %vm277, %v270, %v274
      %v280 = vsel %vm277, %v264, %v268
      %v281 = vsel %vm277, %v266, %v270
      %v282 = vsel %vm277, %v260, %v264
      %v283 = vsel %vm277, %v262, %v266
      %v284 = vsel %vm277, %v272, %v260
      %v285 = vsel %vm277, %v274, %v262
      %v286 = vld [vmem:[%s3] sm:$0xf]
      %v288 = vlaneseq
      %v289 = vshrl.u32 %v288, 7
      %v290 = vsub.s32 0, %v289
      %v291 = vrot.slane %v286, %v290
      %v292 = vlaneseq
      %v293 = vshrl.u32 %v292, 7
      %v294 = vsub.s32 1, %v293
      %v295 = vrot.slane %v286, %v294
      %v296 = vlaneseq
      %v297 = vshrl.u32 %v296, 7
      %v298 = vsub.s32 2, %v297
      %v299 = vrot.slane %v286, %v298
      %v300 = vlaneseq
      %v301 = vshrl.u32 %v300, 7
      %v302 = vsub.s32 3, %v301
      %v303 = vrot.slane %v286, %v302
      %v308 = vmul.f32 %v284, %v291
      %v309 = vmul.f32 %v282, %v295
      %v310 = vmul.f32 %v280, %v299
      %v311 = vmul.f32 %v278, %v303
      %v312 = vmul.f32 %v285, %v291
      %v313 = vmul.f32 %v283, %v295
      %v314 = vmul.f32 %v281, %v299
      %v315 = vmul.f32 %v279, %v303
      %316 = vst [vmem:[#allocation3] sm:$0xff] %v308
      %317 = vst [vmem:[#allocation3 + $0x8] sm:$0xff] %v309
      %318 = vst [vmem:[#allocation3 + $0x10] sm:$0xff] %v310
      %319 = vst [vmem:[#allocation3 + $0x18] sm:$0xff] %v311
      %320 = vst [vmem:[#allocation3 + $0x20] sm:$0xff] %v312
      %321 = vst [vmem:[#allocation3 + $0x28] sm:$0xff] %v313
      %322 = vst [vmem:[#allocation3 + $0x30] sm:$0xff] %v314
      %323 = vst [vmem:[#allocation3 + $0x38] sm:$0xff] %v315
      %324 = vrot.lane.b32.xlu0 %v251, 16
      %v325 = vpop.permute.xlu0 %324
      %326 = vrot.lane.b32.xlu0 %v255, 16
      %v327 = vpop.permute.xlu0 %326
      %328 = vrot.lane.b32.xlu0 %v252, 16
      %v329 = vpop.permute.xlu0 %328
      %330 = vrot.lane.b32.xlu0 %v256, 16
      %v331 = vpop.permute.xlu0 %330
      %332 = vrot.lane.b32.xlu0 %v253, 16
      %v333 = vpop.permute.xlu0 %332
      %334 = vrot.lane.b32.xlu0 %v257, 16
      %v335 = vpop.permute.xlu0 %334
      %336 = vrot.lane.b32.xlu0 %v254, 16
      %v337 = vpop.permute.xlu0 %336
      %338 = vrot.lane.b32.xlu0 %v258, 16
      %v339 = vpop.permute.xlu0 %338
      %vm340 = vcmp.lt.s32.totalorder %v276, 16
      %v341 = vsel %vm340, %v333, %v337
      %v342 = vsel %vm340, %v335, %v339
      %v343 = vsel %vm340, %v329, %v333
      %v344 = vsel %vm340, %v331, %v335
      %v345 = vsel %vm340, %v325, %v329
      %v346 = vsel %vm340, %v327, %v331
      %v347 = vsel %vm340, %v337, %v325
      %v348 = vsel %vm340, %v339, %v327
      %s349 = scalar_lea.vmem %s3, 4
      %v350 = vld [vmem:[%s349] sm:$0xf]
      %v352 = vlaneseq
      %v353 = vshrl.u32 %v352, 7
      %v354 = vsub.s32 0, %v353
      %v355 = vrot.slane %v350, %v354
      %v356 = vlaneseq
      %v357 = vshrl.u32 %v356, 7
      %v358 = vsub.s32 1, %v357
      %v359 = vrot.slane %v350, %v358
      %v360 = vlaneseq
      %v361 = vshrl.u32 %v360, 7
      %v362 = vsub.s32 2, %v361
      %v363 = vrot.slane %v350, %v362
      %v364 = vlaneseq
      %v365 = vshrl.u32 %v364, 7
      %v366 = vsub.s32 3, %v365
      %v367 = vrot.slane %v350, %v366
      %v372 = vmul.f32 %v347, %v355
      %v373 = vmul.f32 %v345, %v359
      %v374 = vmul.f32 %v343, %v363
      %v375 = vmul.f32 %v341, %v367
      %v376 = vmul.f32 %v348, %v355
      %v377 = vmul.f32 %v346, %v359
      %v378 = vmul.f32 %v344, %v363
      %v379 = vmul.f32 %v342, %v367
      %380 = vst [vmem:[#allocation3 + $0x40] sm:$0xff] %v372
      %381 = vst [vmem:[#allocation3 + $0x48] sm:$0xff] %v373
      %382 = vst [vmem:[#allocation3 + $0x50] sm:$0xff] %v374
      %383 = vst [vmem:[#allocation3 + $0x58] sm:$0xff] %v375
      %384 = vst [vmem:[#allocation3 + $0x60] sm:$0xff] %v376
      %385 = vst [vmem:[#allocation3 + $0x68] sm:$0xff] %v377
      %386 = vst [vmem:[#allocation3 + $0x70] sm:$0xff] %v378
      %387 = vst [vmem:[#allocation3 + $0x78] sm:$0xff] %v379
      %388 = vrot.lane.b32.xlu0 %v251, 15
      %v389 = vpop.permute.xlu0 %388
      %390 = vrot.lane.b32.xlu0 %v255, 15
      %v391 = vpop.permute.xlu0 %390
      %392 = vrot.lane.b32.xlu0 %v252, 15
      %v393 = vpop.permute.xlu0 %392
      %394 = vrot.lane.b32.xlu0 %v256, 15
      %v395 = vpop.permute.xlu0 %394
      %396 = vrot.lane.b32.xlu0 %v253, 15
      %v397 = vpop.permute.xlu0 %396
      %398 = vrot.lane.b32.xlu0 %v257, 15
      %v399 = vpop.permute.xlu0 %398
      %400 = vrot.lane.b32.xlu0 %v254, 15
      %v401 = vpop.permute.xlu0 %400
      %402 = vrot.lane.b32.xlu0 %v258, 15
      %v403 = vpop.permute.xlu0 %402
      %vm404 = vcmp.lt.s32.totalorder %v276, 15
      %v405 = vsel %vm404, %v397, %v401
      %v406 = vsel %vm404, %v399, %v403
      %v407 = vsel %vm404, %v393, %v397
      %v408 = vsel %vm404, %v395, %v399
      %v409 = vsel %vm404, %v389, %v393
      %v410 = vsel %vm404, %v391, %v395
      %v411 = vsel %vm404, %v401, %v389
      %v412 = vsel %vm404, %v403, %v391
      %s413 = scalar_lea.vmem %s3, 8
      %v414 = vld [vmem:[%s413] sm:$0xf]
      %v416 = vlaneseq
      %v417 = vshrl.u32 %v416, 7
      %v418 = vsub.s32 0, %v417
      %v419 = vrot.slane %v414, %v418
      %v420 = vlaneseq
      %v421 = vshrl.u32 %v420, 7
      %v422 = vsub.s32 1, %v421
      %v423 = vrot.slane %v414, %v422
      %v424 = vlaneseq
      %v425 = vshrl.u32 %v424, 7
      %v426 = vsub.s32 2, %v425
      %v427 = vrot.slane %v414, %v426
      %v428 = vlaneseq
      %v429 = vshrl.u32 %v428, 7
      %v430 = vsub.s32 3, %v429
      %v431 = vrot.slane %v414, %v430
      %v436 = vmul.f32 %v411, %v419
      %v437 = vmul.f32 %v409, %v423
      %v438 = vmul.f32 %v407, %v427
      %v439 = vmul.f32 %v405, %v431
      %v440 = vmul.f32 %v412, %v419
      %v441 = vmul.f32 %v410, %v423
      %v442 = vmul.f32 %v408, %v427
      %v443 = vmul.f32 %v406, %v431
      %444 = vst [vmem:[#allocation3 + $0x80] sm:$0xff] %v436
      %445 = vst [vmem:[#allocation3 + $0x88] sm:$0xff] %v437
      %446 = vst [vmem:[#allocation3 + $0x90] sm:$0xff] %v438
      %447 = vst [vmem:[#allocation3 + $0x98] sm:$0xff] %v439
      %448 = vst [vmem:[#allocation3 + $0xa0] sm:$0xff] %v440
      %449 = vst [vmem:[#allocation3 + $0xa8] sm:$0xff] %v441
      %450 = vst [vmem:[#allocation3 + $0xb0] sm:$0xff] %v442
      %451 = vst [vmem:[#allocation3 + $0xb8] sm:$0xff] %v443
      %452 = vrot.lane.b32.xlu0 %v251, 1
      %v453 = vpop.permute.xlu0 %452
      %454 = vrot.lane.b32.xlu0 %v255, 1
      %v455 = vpop.permute.xlu0 %454
      %456 = vrot.lane.b32.xlu0 %v252, 1
      %v457 = vpop.permute.xlu0 %456
      %458 = vrot.lane.b32.xlu0 %v256, 1
      %v459 = vpop.permute.xlu0 %458
      %460 = vrot.lane.b32.xlu0 %v253, 1
      %v461 = vpop.permute.xlu0 %460
      %462 = vrot.lane.b32.xlu0 %v257, 1
      %v463 = vpop.permute.xlu0 %462
      %464 = vrot.lane.b32.xlu0 %v254, 1
      %v465 = vpop.permute.xlu0 %464
      %466 = vrot.lane.b32.xlu0 %v258, 1
      %v467 = vpop.permute.xlu0 %466
      %vm468 = vcmp.lt.s32.totalorder %v276, 1
      %v469 = vsel %vm468, %v461, %v465
      %v470 = vsel %vm468, %v463, %v467
      %v471 = vsel %vm468, %v457, %v461
      %v472 = vsel %vm468, %v459, %v463
      %v473 = vsel %vm468, %v453, %v457
      %v474 = vsel %vm468, %v455, %v459
      %v475 = vsel %vm468, %v465, %v453
      %v476 = vsel %vm468, %v467, %v455
      %s477 = scalar_lea.vmem %s3, 12
      %v478 = vld [vmem:[%s477] sm:$0xf]
      %v480 = vlaneseq
      %v481 = vshrl.u32 %v480, 7
      %v482 = vsub.s32 0, %v481
      %v483 = vrot.slane %v478, %v482
      %v484 = vlaneseq
      %v485 = vshrl.u32 %v484, 7
      %v486 = vsub.s32 1, %v485
      %v487 = vrot.slane %v478, %v486
      %v488 = vlaneseq
      %v489 = vshrl.u32 %v488, 7
      %v490 = vsub.s32 2, %v489
      %v491 = vrot.slane %v478, %v490
      %v492 = vlaneseq
      %v493 = vshrl.u32 %v492, 7
      %v494 = vsub.s32 3, %v493
      %v495 = vrot.slane %v478, %v494
      %v500 = vmul.f32 %v475, %v483
      %v501 = vmul.f32 %v473, %v487
      %v502 = vmul.f32 %v471, %v491
      %v503 = vmul.f32 %v469, %v495
      %v504 = vmul.f32 %v476, %v483
      %v505 = vmul.f32 %v474, %v487
      %v506 = vmul.f32 %v472, %v491
      %v507 = vmul.f32 %v470, %v495
      %508 = vst [vmem:[#allocation3 + $0xc0] sm:$0xff] %v500
      %509 = vst [vmem:[#allocation3 + $0xc8] sm:$0xff] %v501
      %510 = vst [vmem:[#allocation3 + $0xd0] sm:$0xff] %v502
      %511 = vst [vmem:[#allocation3 + $0xd8] sm:$0xff] %v503
      %512 = vst [vmem:[#allocation3 + $0xe0] sm:$0xff] %v504
      %513 = vst [vmem:[#allocation3 + $0xe8] sm:$0xff] %v505
      %514 = vst [vmem:[#allocation3 + $0xf0] sm:$0xff] %v506
      %515 = vst [vmem:[#allocation3 + $0xf8] sm:$0xff] %v507
      %516 = vst [vmem:[#allocation3 + $0x100] sm:$0xff] %v251
      %517 = vst [vmem:[#allocation3 + $0x108] sm:$0xff] %v252
      %518 = vst [vmem:[#allocation3 + $0x110] sm:$0xff] %v253
      %519 = vst [vmem:[#allocation3 + $0x118] sm:$0xff] %v254
      %520 = vst [vmem:[#allocation3 + $0x120] sm:$0xff] %v255
      %521 = vst [vmem:[#allocation3 + $0x128] sm:$0xff] %v256
      %522 = vst [vmem:[#allocation3 + $0x130] sm:$0xff] %v257
      %523 = vst [vmem:[#allocation3 + $0x138] sm:$0xff] %v258
      %524 = vrot.lane.b32.xlu0 %v251, 127
      %v525 = vpop.permute.xlu0 %524
      %526 = vrot.lane.b32.xlu0 %v255, 127
      %v527 = vpop.permute.xlu0 %526
      %528 = vrot.lane.b32.xlu0 %v252, 127
      %v529 = vpop.permute.xlu0 %528
      %530 = vrot.lane.b32.xlu0 %v256, 127
      %v531 = vpop.permute.xlu0 %530
      %532 = vrot.lane.b32.xlu0 %v253, 127
      %v533 = vpop.permute.xlu0 %532
      %534 = vrot.lane.b32.xlu0 %v257, 127
      %v535 = vpop.permute.xlu0 %534
      %536 = vrot.lane.b32.xlu0 %v254, 127
      %v537 = vpop.permute.xlu0 %536
      %538 = vrot.lane.b32.xlu0 %v258, 127
      %v539 = vpop.permute.xlu0 %538
      %vm540 = vcmp.lt.s32.totalorder %v276, 127
      %v541 = vsel %vm540, %v533, %v537
      %v542 = vsel %vm540, %v535, %v539
      %v543 = vsel %vm540, %v529, %v533
      %v544 = vsel %vm540, %v531, %v535
      %v545 = vsel %vm540, %v525, %v529
      %v546 = vsel %vm540, %v527, %v531
      %v547 = vsel %vm540, %v537, %v525
      %v548 = vsel %vm540, %v539, %v527
      %s549 = scalar_lea.vmem %s3, 20
      %v550 = vld [vmem:[%s549] sm:$0xf]
      %v552 = vlaneseq
      %v553 = vshrl.u32 %v552, 7
      %v554 = vsub.s32 0, %v553
      %v555 = vrot.slane %v550, %v554
      %v556 = vlaneseq
      %v557 = vshrl.u32 %v556, 7
      %v558 = vsub.s32 1, %v557
      %v559 = vrot.slane %v550, %v558
      %v560 = vlaneseq
      %v561 = vshrl.u32 %v560, 7
      %v562 = vsub.s32 2, %v561
      %v563 = vrot.slane %v550, %v562
      %v564 = vlaneseq
      %v565 = vshrl.u32 %v564, 7
      %v566 = vsub.s32 3, %v565
      %v567 = vrot.slane %v550, %v566
      %v572 = vmul.f32 %v545, %v555
      %v573 = vmul.f32 %v543, %v559
      %v574 = vmul.f32 %v541, %v563
      %v575 = vmul.f32 %v547, %v567
      %v576 = vmul.f32 %v546, %v555
      %v577 = vmul.f32 %v544, %v559
      %v578 = vmul.f32 %v542, %v563
      %v579 = vmul.f32 %v548, %v567
      %580 = vst [vmem:[#allocation3 + $0x140] sm:$0xff] %v572
      %581 = vst [vmem:[#allocation3 + $0x148] sm:$0xff] %v573
      %582 = vst [vmem:[#allocation3 + $0x150] sm:$0xff] %v574
      %583 = vst [vmem:[#allocation3 + $0x158] sm:$0xff] %v575
      %584 = vst [vmem:[#allocation3 + $0x160] sm:$0xff] %v576
      %585 = vst [vmem:[#allocation3 + $0x168] sm:$0xff] %v577
      %586 = vst [vmem:[#allocation3 + $0x170] sm:$0xff] %v578
      %587 = vst [vmem:[#allocation3 + $0x178] sm:$0xff] %v579
      %588 = vrot.lane.b32.xlu0 %v251, 113
      %v589 = vpop.permute.xlu0 %588
      %590 = vrot.lane.b32.xlu0 %v255, 113
      %v591 = vpop.permute.xlu0 %590
      %592 = vrot.lane.b32.xlu0 %v252, 113
      %v593 = vpop.permute.xlu0 %592
      %594 = vrot.lane.b32.xlu0 %v256, 113
      %v595 = vpop.permute.xlu0 %594
      %596 = vrot.lane.b32.xlu0 %v253, 113
      %v597 = vpop.permute.xlu0 %596
      %598 = vrot.lane.b32.xlu0 %v257, 113
      %v599 = vpop.permute.xlu0 %598
      %600 = vrot.lane.b32.xlu0 %v254, 113
      %v601 = vpop.permute.xlu0 %600
      %602 = vrot.lane.b32.xlu0 %v258, 113
      %v603 = vpop.permute.xlu0 %602
      %vm604 = vcmp.lt.s32.totalorder %v276, 113
      %v605 = vsel %vm604, %v597, %v601
      %v606 = vsel %vm604, %v599, %v603
      %v607 = vsel %vm604, %v593, %v597
      %v608 = vsel %vm604, %v595, %v599
      %v609 = vsel %vm604, %v589, %v593
      %v610 = vsel %vm604, %v591, %v595
      %v611 = vsel %vm604, %v601, %v589
      %v612 = vsel %vm604, %v603, %v591
      %s613 = scalar_lea.vmem %s3, 24
      %v614 = vld [vmem:[%s613] sm:$0xf]
      %v616 = vlaneseq
      %v617 = vshrl.u32 %v616, 7
      %v618 = vsub.s32 0, %v617
      %v619 = vrot.slane %v614, %v618
      %v620 = vlaneseq
      %v621 = vshrl.u32 %v620, 7
      %v622 = vsub.s32 1, %v621
      %v623 = vrot.slane %v614, %v622
      %v624 = vlaneseq
      %v625 = vshrl.u32 %v624, 7
      %v626 = vsub.s32 2, %v625
      %v627 = vrot.slane %v614, %v626
      %v628 = vlaneseq
      %v629 = vshrl.u32 %v628, 7
      %v630 = vsub.s32 3, %v629
      %v631 = vrot.slane %v614, %v630
      %v636 = vmul.f32 %v609, %v619
      %v637 = vmul.f32 %v607, %v623
      %v638 = vmul.f32 %v605, %v627
      %v639 = vmul.f32 %v611, %v631
      %v640 = vmul.f32 %v610, %v619
      %v641 = vmul.f32 %v608, %v623
      %v642 = vmul.f32 %v606, %v627
      %v643 = vmul.f32 %v612, %v631
      %644 = vst [vmem:[#allocation3 + $0x180] sm:$0xff] %v636
      %645 = vst [vmem:[#allocation3 + $0x188] sm:$0xff] %v637
      %646 = vst [vmem:[#allocation3 + $0x190] sm:$0xff] %v638
      %647 = vst [vmem:[#allocation3 + $0x198] sm:$0xff] %v639
      %648 = vst [vmem:[#allocation3 + $0x1a0] sm:$0xff] %v640
      %649 = vst [vmem:[#allocation3 + $0x1a8] sm:$0xff] %v641
      %650 = vst [vmem:[#allocation3 + $0x1b0] sm:$0xff] %v642
      %651 = vst [vmem:[#allocation3 + $0x1b8] sm:$0xff] %v643
      %652 = vrot.lane.b32.xlu0 %v251, 112
      %v653 = vpop.permute.xlu0 %652
      %654 = vrot.lane.b32.xlu0 %v255, 112
      %v655 = vpop.permute.xlu0 %654
      %656 = vrot.lane.b32.xlu0 %v252, 112
      %v657 = vpop.permute.xlu0 %656
      %658 = vrot.lane.b32.xlu0 %v256, 112
      %v659 = vpop.permute.xlu0 %658
      %660 = vrot.lane.b32.xlu0 %v253, 112
      %v661 = vpop.permute.xlu0 %660
      %662 = vrot.lane.b32.xlu0 %v257, 112
      %v663 = vpop.permute.xlu0 %662
      %664 = vrot.lane.b32.xlu0 %v254, 112
      %v665 = vpop.permute.xlu0 %664
      %666 = vrot.lane.b32.xlu0 %v258, 112
      %v667 = vpop.permute.xlu0 %666
      %vm668 = vcmp.lt.s32.totalorder %v276, 112
      %v669 = vsel %vm668, %v661, %v665
      %v670 = vsel %vm668, %v663, %v667
      %v671 = vsel %vm668, %v657, %v661
      %v672 = vsel %vm668, %v659, %v663
      %v673 = vsel %vm668, %v653, %v657
      %v674 = vsel %vm668, %v655, %v659
      %v675 = vsel %vm668, %v665, %v653
      %v676 = vsel %vm668, %v667, %v655
      %s677 = scalar_lea.vmem %s3, 28
      %v678 = vld [vmem:[%s677] sm:$0xf]
      %v680 = vlaneseq
      %v681 = vshrl.u32 %v680, 7
      %v682 = vsub.s32 0, %v681
      %v683 = vrot.slane %v678, %v682
      %v684 = vlaneseq
      %v685 = vshrl.u32 %v684, 7
      %v686 = vsub.s32 1, %v685
      %v687 = vrot.slane %v678, %v686
      %v688 = vlaneseq
      %v689 = vshrl.u32 %v688, 7
      %v690 = vsub.s32 2, %v689
      %v691 = vrot.slane %v678, %v690
      %v692 = vlaneseq
      %v693 = vshrl.u32 %v692, 7
      %v694 = vsub.s32 3, %v693
      %v695 = vrot.slane %v678, %v694
      %v700 = vmul.f32 %v673, %v683
      %v701 = vmul.f32 %v671, %v687
      %v702 = vmul.f32 %v669, %v691
      %v703 = vmul.f32 %v675, %v695
      %v704 = vmul.f32 %v674, %v683
      %v705 = vmul.f32 %v672, %v687
      %v706 = vmul.f32 %v670, %v691
      %v707 = vmul.f32 %v676, %v695
      %708 = vst [vmem:[#allocation3 + $0x1c0] sm:$0xff] %v700
      %709 = vst [vmem:[#allocation3 + $0x1c8] sm:$0xff] %v701
      %710 = vst [vmem:[#allocation3 + $0x1d0] sm:$0xff] %v702
      %711 = vst [vmem:[#allocation3 + $0x1d8] sm:$0xff] %v703
      %712 = vst [vmem:[#allocation3 + $0x1e0] sm:$0xff] %v704
      %713 = vst [vmem:[#allocation3 + $0x1e8] sm:$0xff] %v705
      %714 = vst [vmem:[#allocation3 + $0x1f0] sm:$0xff] %v706
      %715 = vst [vmem:[#allocation3 + $0x1f8] sm:$0xff] %v707
      %716 = vrot.lane.b32.xlu0 %v251, 111
      %v717 = vpop.permute.xlu0 %716
      %718 = vrot.lane.b32.xlu0 %v255, 111
      %v719 = vpop.permute.xlu0 %718
      %720 = vrot.lane.b32.xlu0 %v252, 111
      %v721 = vpop.permute.xlu0 %720
      %722 = vrot.lane.b32.xlu0 %v256, 111
      %v723 = vpop.permute.xlu0 %722
      %724 = vrot.lane.b32.xlu0 %v253, 111
      %v725 = vpop.permute.xlu0 %724
      %726 = vrot.lane.b32.xlu0 %v257, 111
      %v727 = vpop.permute.xlu0 %726
      %728 = vrot.lane.b32.xlu0 %v254, 111
      %v729 = vpop.permute.xlu0 %728
      %730 = vrot.lane.b32.xlu0 %v258, 111
      %v731 = vpop.permute.xlu0 %730
      %vm732 = vcmp.lt.s32.totalorder %v276, 111
      %v733 = vsel %vm732, %v725, %v729
      %v734 = vsel %vm732, %v727, %v731
      %v735 = vsel %vm732, %v721, %v725
      %v736 = vsel %vm732, %v723, %v727
      %v737 = vsel %vm732, %v717, %v721
      %v738 = vsel %vm732, %v719, %v723
      %v739 = vsel %vm732, %v729, %v717
      %v740 = vsel %vm732, %v731, %v719
      %s741 = scalar_lea.vmem %s3, 32
      %v742 = vld [vmem:[%s741] sm:$0xf]
      %v744 = vlaneseq
      %v745 = vshrl.u32 %v744, 7
      %v746 = vsub.s32 0, %v745
      %v747 = vrot.slane %v742, %v746
      %v748 = vlaneseq
      %v749 = vshrl.u32 %v748, 7
      %v750 = vsub.s32 1, %v749
      %v751 = vrot.slane %v742, %v750
      %v752 = vlaneseq
      %v753 = vshrl.u32 %v752, 7
      %v754 = vsub.s32 2, %v753
      %v755 = vrot.slane %v742, %v754
      %v756 = vlaneseq
      %v757 = vshrl.u32 %v756, 7
      %v758 = vsub.s32 3, %v757
      %v759 = vrot.slane %v742, %v758
      %v764 = vmul.f32 %v737, %v747
      %v765 = vmul.f32 %v735, %v751
      %v766 = vmul.f32 %v733, %v755
      %v767 = vmul.f32 %v739, %v759
      %v768 = vmul.f32 %v738, %v747
      %v769 = vmul.f32 %v736, %v751
      %v770 = vmul.f32 %v734, %v755
      %v771 = vmul.f32 %v740, %v759
      %772 = vst [vmem:[#allocation3 + $0x200] sm:$0xff] %v764
      %773 = vst [vmem:[#allocation3 + $0x208] sm:$0xff] %v765
      %774 = vst [vmem:[#allocation3 + $0x210] sm:$0xff] %v766
      %775 = vst [vmem:[#allocation3 + $0x218] sm:$0xff] %v767
      %776 = vst [vmem:[#allocation3 + $0x220] sm:$0xff] %v768
      %777 = vst [vmem:[#allocation3 + $0x228] sm:$0xff] %v769
      %778 = vst [vmem:[#allocation3 + $0x230] sm:$0xff] %v770
      %779 = vst [vmem:[#allocation3 + $0x238] sm:$0xff] %v771
      %v780 = vld [vmem:[%s1] sm:$0xff]
      %v781 = vld [vmem:[%s1 + $0x8] sm:$0xff]
      %v782 = vld [vmem:[%s1 + $0x10] sm:$0xff]
      %v783 = vld [vmem:[%s1 + $0x18] sm:$0xff]
      %v784 = vld [vmem:[%s1 + $0x20] sm:$0xff]
      %v785 = vld [vmem:[%s1 + $0x28] sm:$0xff]
      %v786 = vld [vmem:[%s1 + $0x30] sm:$0xff]
      %v787 = vld [vmem:[%s1 + $0x38] sm:$0xff]
      %v788 = vld [vmem:[#allocation3] sm:$0xff]
      %v789 = vld [vmem:[#allocation3 + $0x8] sm:$0xff]
      %v790 = vld [vmem:[#allocation3 + $0x10] sm:$0xff]
      %v791 = vld [vmem:[#allocation3 + $0x18] sm:$0xff]
      %v792 = vld [vmem:[#allocation3 + $0x20] sm:$0xff]
      %v793 = vld [vmem:[#allocation3 + $0x28] sm:$0xff]
      %v794 = vld [vmem:[#allocation3 + $0x30] sm:$0xff]
      %v795 = vld [vmem:[#allocation3 + $0x38] sm:$0xff]
      %v796 = vld [vmem:[#allocation3 + $0x40] sm:$0xff]
      %v797 = vld [vmem:[#allocation3 + $0x48] sm:$0xff]
      %v798 = vld [vmem:[#allocation3 + $0x50] sm:$0xff]
      %v799 = vld [vmem:[#allocation3 + $0x58] sm:$0xff]
      %v800 = vld [vmem:[#allocation3 + $0x60] sm:$0xff]
      %v801 = vld [vmem:[#allocation3 + $0x68] sm:$0xff]
      %v802 = vld [vmem:[#allocation3 + $0x70] sm:$0xff]
      %v803 = vld [vmem:[#allocation3 + $0x78] sm:$0xff]
      %v804 = vld [vmem:[#allocation3 + $0x80] sm:$0xff]
      %v805 = vld [vmem:[#allocation3 + $0x88] sm:$0xff]
      %v806 = vld [vmem:[#allocation3 + $0x90] sm:$0xff]
      %v807 = vld [vmem:[#allocation3 + $0x98] sm:$0xff]
      %v808 = vld [vmem:[#allocation3 + $0xa0] sm:$0xff]
      %v809 = vld [vmem:[#allocation3 + $0xa8] sm:$0xff]
      %v810 = vld [vmem:[#allocation3 + $0xb0] sm:$0xff]
      %v811 = vld [vmem:[#allocation3 + $0xb8] sm:$0xff]
      %v812 = vld [vmem:[#allocation3 + $0xc0] sm:$0xff]
      %v813 = vld [vmem:[#allocation3 + $0xc8] sm:$0xff]
      %v814 = vld [vmem:[#allocation3 + $0xd0] sm:$0xff]
      %v815 = vld [vmem:[#allocation3 + $0xd8] sm:$0xff]
      %v816 = vld [vmem:[#allocation3 + $0xe0] sm:$0xff]
      %v817 = vld [vmem:[#allocation3 + $0xe8] sm:$0xff]
      %v818 = vld [vmem:[#allocation3 + $0xf0] sm:$0xff]
      %v819 = vld [vmem:[#allocation3 + $0xf8] sm:$0xff]
      %v820 = vld [vmem:[#allocation3 + $0x100] sm:$0xff]
      %v821 = vld [vmem:[#allocation3 + $0x108] sm:$0xff]
      %v822 = vld [vmem:[#allocation3 + $0x110] sm:$0xff]
      %v823 = vld [vmem:[#allocation3 + $0x118] sm:$0xff]
      %v824 = vld [vmem:[#allocation3 + $0x120] sm:$0xff]
      %v825 = vld [vmem:[#allocation3 + $0x128] sm:$0xff]
      %v826 = vld [vmem:[#allocation3 + $0x130] sm:$0xff]
      %v827 = vld [vmem:[#allocation3 + $0x138] sm:$0xff]
      %v828 = vld [vmem:[#allocation3 + $0x140] sm:$0xff]
      %v829 = vld [vmem:[#allocation3 + $0x148] sm:$0xff]
      %v830 = vld [vmem:[#allocation3 + $0x150] sm:$0xff]
      %v831 = vld [vmem:[#allocation3 + $0x158] sm:$0xff]
      %v832 = vld [vmem:[#allocation3 + $0x160] sm:$0xff]
      %v833 = vld [vmem:[#allocation3 + $0x168] sm:$0xff]
      %v834 = vld [vmem:[#allocation3 + $0x170] sm:$0xff]
      %v835 = vld [vmem:[#allocation3 + $0x178] sm:$0xff]
      %v836 = vld [vmem:[#allocation3 + $0x180] sm:$0xff]
      %v837 = vld [vmem:[#allocation3 + $0x188] sm:$0xff]
      %v838 = vld [vmem:[#allocation3 + $0x190] sm:$0xff]
      %v839 = vld [vmem:[#allocation3 + $0x198] sm:$0xff]
      %v840 = vld [vmem:[#allocation3 + $0x1a0] sm:$0xff]
      %v841 = vld [vmem:[#allocation3 + $0x1a8] sm:$0xff]
      %v842 = vld [vmem:[#allocation3 + $0x1b0] sm:$0xff]
      %v843 = vld [vmem:[#allocation3 + $0x1b8] sm:$0xff]
      %v844 = vld [vmem:[#allocation3 + $0x1c0] sm:$0xff]
      %v845 = vld [vmem:[#allocation3 + $0x1c8] sm:$0xff]
      %v846 = vld [vmem:[#allocation3 + $0x1d0] sm:$0xff]
      %v847 = vld [vmem:[#allocation3 + $0x1d8] sm:$0xff]
      %v848 = vld [vmem:[#allocation3 + $0x1e0] sm:$0xff]
      %v849 = vld [vmem:[#allocation3 + $0x1e8] sm:$0xff]
      %v850 = vld [vmem:[#allocation3 + $0x1f0] sm:$0xff]
      %v851 = vld [vmem:[#allocation3 + $0x1f8] sm:$0xff]
      %v852 = vld [vmem:[#allocation3 + $0x200] sm:$0xff]
      %v853 = vld [vmem:[#allocation3 + $0x208] sm:$0xff]
      %v854 = vld [vmem:[#allocation3 + $0x210] sm:$0xff]
      %v855 = vld [vmem:[#allocation3 + $0x218] sm:$0xff]
      %v856 = vld [vmem:[#allocation3 + $0x220] sm:$0xff]
      %v857 = vld [vmem:[#allocation3 + $0x228] sm:$0xff]
      %v858 = vld [vmem:[#allocation3 + $0x230] sm:$0xff]
      %v859 = vld [vmem:[#allocation3 + $0x238] sm:$0xff]
      %v860 = vld [vmem:[%s2] sm:$0xff]
      %v861 = vld [vmem:[%s2 + $0x8] sm:$0xff]
      %v862 = vld [vmem:[%s2 + $0x10] sm:$0xff]
      %v863 = vld [vmem:[%s2 + $0x18] sm:$0xff]
      %865 = vset.pattern.permute.xlu0 0
      %866 = vperm.xlu0 %865, %v860
      %v867 = vpop.permute.xlu0 %866
      %870 = vset.pattern.permute.xlu0 0
      %871 = vperm.xlu0 %870, %v861
      %v872 = vpop.permute.xlu0 %871
      %875 = vset.pattern.permute.xlu0 0
      %876 = vperm.xlu0 %875, %v862
      %v877 = vpop.permute.xlu0 %876
      %880 = vset.pattern.permute.xlu0 0
      %881 = vperm.xlu0 %880, %v863
      %v882 = vpop.permute.xlu0 %881
      %vm884 = vcmask 130048
      %v886 = vsel %vm884, %v781, 0
      %v889 = vsel %vm884, %v783, 0
      %v892 = vsel %vm884, %v785, 0
      %v895 = vsel %vm884, %v787, 0
      %897 = vmatprep.subr.mxu0 %v789
      %898 = vmatpush1.msra.mxu0 %v788
      %899 = vmatprep.subr.mxu0 %v793
      %900 = vmatpush1.msra.mxu0 %v792
      %901 = vmatprep.subr.mxu0 %v797
      %902 = vmatpush1.msra.mxu0 %v796
      %903 = vmatprep.subr.mxu0 %v801
      %904 = vmatpush1.msra.mxu0 %v800
      %905 = vmatprep.subr.mxu0 %v805
      %906 = vmatpush1.msra.mxu0 %v804
      %907 = vmatprep.subr.mxu0 %v809
      %908 = vmatpush1.msra.mxu0 %v808
      %909 = vmatprep.subr.mxu0 %v813
      %910 = vmatpush1.msra.mxu0 %v812
      %911 = vmatprep.subr.mxu0 %v817
      %912 = vmatpush1.msra.mxu0 %v816
      %913 = vmatprep.subr.mxu0 %v821
      %914 = vmatpush1.msra.mxu0 %v820
      %915 = vmatprep.subr.mxu0 %v825
      %916 = vmatpush1.msra.mxu0 %v824
      %917 = vmatprep.subr.mxu0 %v829
      %918 = vmatpush1.msra.mxu0 %v828
      %919 = vmatprep.subr.mxu0 %v833
      %920 = vmatpush1.msra.mxu0 %v832
      %921 = vmatprep.subr.mxu0 %v837
      %922 = vmatpush1.msra.mxu0 %v836
      %923 = vmatprep.subr.mxu0 %v841
      %924 = vmatpush1.msra.mxu0 %v840
      %925 = vmatprep.subr.mxu0 %v845
      %926 = vmatpush1.msra.mxu0 %v844
      %927 = vmatprep.subr.mxu0 %v849
      %928 = vmatpush1.msra.mxu0 %v848
      %929 = vmatprep.subr.mxu0 %v853
      %930 = vmatpush1.msra.mxu0 %v852
      %931 = vmatprep.subr.mxu0 %v857
      %932 = vmatpush1.msra.mxu0 %v856
      %933 = vmatprep.subr.mxu0 0.0
      %934 = vmatpush1.msra.mxu0 0.0
      %935 = vmatprep.subr.mxu0 0.0
      %936 = vmatpush1.msra.mxu0 0.0
      %937 = vmatprep.subr.mxu0 0.0
      %938 = vmatpush1.msra.mxu0 0.0
      %939 = vmatprep.subr.mxu0 0.0
      %940 = vmatpush1.msra.mxu0 0.0
      %941 = vmatprep.subr.mxu0 0.0
      %942 = vmatpush1.msra.mxu0 0.0
      %943 = vmatprep.subr.mxu0 0.0
      %944 = vmatpush1.msra.mxu0 0.0
      %945 = vmatprep.subr.mxu0 0.0
      %946 = vmatpush1.msra.mxu0 0.0
      %947 = vmatprep.subr.mxu0 0.0
      %948 = vmatpush1.msra.mxu0 0.0
      %949 = vmatprep.subr.mxu0 0.0
      %950 = vmatpush1.msra.mxu0 0.0
      %951 = vmatprep.subr.mxu0 0.0
      %952 = vmatpush1.msra.mxu0 0.0
      %953 = vmatprep.subr.mxu0 0.0
      %954 = vmatpush1.msra.mxu0 0.0
      %955 = vmatprep.subr.mxu0 0.0
      %956 = vmatpush1.msra.mxu0 0.0
      %957 = vmatprep.subr.mxu0 0.0
      %958 = vmatpush1.msra.mxu0 0.0
      %959 = vmatprep.subr.mxu0 0.0
      %960 = vmatpush1.msra.mxu0 0.0
      %961 = vmatprep.mubr.f32.mxu0 %v886
      %962 = vmatmul.mubr.f32.gmra.mrb[0].mxu0 %v780
      %v963 = vpop.f32.mrb[0].mxu0
      %v964 = vadd.f32 %v867, %v963
      %v965 = vpop.f32.mrb[0].mxu0
      %v966 = vadd.f32 %v867, %v965
      %967 = vmatprep.mubr.f32.mxu0 %v889
      %968 = vmatmul.mubr.f32.gmra.mrb[0].mxu0 %v782
      %v969 = vpop.f32.mrb[0].mxu0
      %v970 = vadd.f32 %v872, %v969
      %v971 = vpop.f32.mrb[0].mxu0
      %v972 = vadd.f32 %v872, %v971
      %973 = vmatprep.mubr.f32.mxu0 %v892
      %974 = vmatmul.mubr.f32.gmra.mrb[0].mxu0 %v784
      %v975 = vpop.f32.mrb[0].mxu0
      %v976 = vadd.f32 %v877, %v975
      %v977 = vpop.f32.mrb[0].mxu0
      %v978 = vadd.f32 %v877, %v977
      %979 = vmatprep.mubr.f32.mxu0 %v895
      %980 = vmatmul.mubr.f32.gmra.mrb[0].mxu0 %v786
      %v981 = vpop.f32.mrb[0].mxu0
      %v982 = vadd.f32 %v882, %v981
      %v983 = vpop.f32.mrb[0].mxu0
      %v984 = vadd.f32 %v882, %v983
      %985 = vdwg.mxu0
      %986 = vmatprep.subr.mxu0 %v791
      %987 = vmatpush1.msra.mxu0 %v790
      %988 = vmatprep.subr.mxu0 %v795
      %989 = vmatpush1.msra.mxu0 %v794
      %990 = vmatprep.subr.mxu0 %v799
      %991 = vmatpush1.msra.mxu0 %v798
      %992 = vmatprep.subr.mxu0 %v803
      %993 = vmatpush1.msra.mxu0 %v802
      %994 = vmatprep.subr.mxu0 %v807
      %995 = vmatpush1.msra.mxu0 %v806
      %996 = vmatprep.subr.mxu0 %v811
      %997 = vmatpush1.msra.mxu0 %v810
      %998 = vmatprep.subr.mxu0 %v815
      %999 = vmatpush1.msra.mxu0 %v814
      %1000 = vmatprep.subr.mxu0 %v819
      %1001 = vmatpush1.msra.mxu0 %v818
      %1002 = vmatprep.subr.mxu0 %v823
      %1003 = vmatpush1.msra.mxu0 %v822
      %1004 = vmatprep.subr.mxu0 %v827
      %1005 = vmatpush1.msra.mxu0 %v826
      %1006 = vmatprep.subr.mxu0 %v831
      %1007 = vmatpush1.msra.mxu0 %v830
      %1008 = vmatprep.subr.mxu0 %v835
      %1009 = vmatpush1.msra.mxu0 %v834
      %1010 = vmatprep.subr.mxu0 %v839
      %1011 = vmatpush1.msra.mxu0 %v838
      %1012 = vmatprep.subr.mxu0 %v843
      %1013 = vmatpush1.msra.mxu0 %v842
      %1014 = vmatprep.subr.mxu0 %v847
      %1015 = vmatpush1.msra.mxu0 %v846
      %1016 = vmatprep.subr.mxu0 %v851
      %1017 = vmatpush1.msra.mxu0 %v850
      %1018 = vmatprep.subr.mxu0 %v855
      %1019 = vmatpush1.msra.mxu0 %v854
      %1020 = vmatprep.subr.mxu0 %v859
      %1021 = vmatpush1.msra.mxu0 %v858
      %1022 = vmatprep.subr.mxu0 0.0
      %1023 = vmatpush1.msra.mxu0 0.0
      %1024 = vmatprep.subr.mxu0 0.0
      %1025 = vmatpush1.msra.mxu0 0.0
      %1026 = vmatprep.subr.mxu0 0.0
      %1027 = vmatpush1.msra.mxu0 0.0
      %1028 = vmatprep.subr.mxu0 0.0
      %1029 = vmatpush1.msra.mxu0 0.0
      %1030 = vmatprep.subr.mxu0 0.0
      %1031 = vmatpush1.msra.mxu0 0.0
      %1032 = vmatprep.subr.mxu0 0.0
      %1033 = vmatpush1.msra.mxu0 0.0
      %1034 = vmatprep.subr.mxu0 0.0
      %1035 = vmatpush1.msra.mxu0 0.0
      %1036 = vmatprep.subr.mxu0 0.0
      %1037 = vmatpush1.msra.mxu0 0.0
      %1038 = vmatprep.subr.mxu0 0.0
      %1039 = vmatpush1.msra.mxu0 0.0
      %1040 = vmatprep.subr.mxu0 0.0
      %1041 = vmatpush1.msra.mxu0 0.0
      %1042 = vmatprep.subr.mxu0 0.0
      %1043 = vmatpush1.msra.mxu0 0.0
      %1044 = vmatprep.subr.mxu0 0.0
      %1045 = vmatpush1.msra.mxu0 0.0
      %1046 = vmatprep.subr.mxu0 0.0
      %1047 = vmatpush1.msra.mxu0 0.0
      %1048 = vmatprep.subr.mxu0 0.0
      %1049 = vmatpush1.msra.mxu0 0.0
      %1050 = vmatprep.mubr.f32.mxu0 %v886
      %1051 = vmatmul.mubr.f32.gmra.mrb[0].mxu0 %v780
      %v1052 = vpop.f32.mrb[0].mxu0
      %v1053 = vadd.f32 %v867, %v1052
      %v1054 = vpop.f32.mrb[0].mxu0
      %v1055 = vadd.f32 %v867, %v1054
      %1056 = vmatprep.mubr.f32.mxu0 %v889
      %1057 = vmatmul.mubr.f32.gmra.mrb[0].mxu0 %v782
      %v1058 = vpop.f32.mrb[0].mxu0
      %v1059 = vadd.f32 %v872, %v1058
      %v1060 = vpop.f32.mrb[0].mxu0
      %v1061 = vadd.f32 %v872, %v1060
      %1062 = vmatprep.mubr.f32.mxu0 %v892
      %1063 = vmatmul.mubr.f32.gmra.mrb[0].mxu0 %v784
      %v1064 = vpop.f32.mrb[0].mxu0
      %v1065 = vadd.f32 %v877, %v1064
      %v1066 = vpop.f32.mrb[0].mxu0
      %v1067 = vadd.f32 %v877, %v1066
      %1068 = vmatprep.mubr.f32.mxu0 %v895
      %1069 = vmatmul.mubr.f32.gmra.mrb[0].mxu0 %v786
      %v1070 = vpop.f32.mrb[0].mxu0
      %v1071 = vadd.f32 %v882, %v1070
      %v1072 = vpop.f32.mrb[0].mxu0
      %v1073 = vadd.f32 %v882, %v1072
      %1074 = vdwg.mxu0
      %v1075 = vxor.u32 %v964, 2147483648
      %v1076 = vxor.u32 %v966, 2147483648
      %v1077 = vxor.u32 %v1053, 2147483648
      %v1078 = vxor.u32 %v1055, 2147483648
      %v1079 = vmul.f32 %v1075, 1.442695
      %v1080 = vpow.pop %v1079
      %v1081 = vmul.f32 %v1076, 1.442695
      %v1082 = vpow.pop %v1081
      %v1083 = vmul.f32 %v1077, 1.442695
      %v1084 = vpow.pop %v1083
      %v1085 = vmul.f32 %v1078, 1.442695
      %v1086 = vpow.pop %v1085
      %v1087 = vadd.f32 %v1080, 1.0
      %v1088 = vadd.f32 %v1082, 1.0
      %v1089 = vadd.f32 %v1084, 1.0
      %v1090 = vadd.f32 %v1086, 1.0
      %v1091 = vrcp.pop %v1087
      %v1092 = vmul.f32 1.0, %v1091
      %v1093 = vrcp.pop %v1088
      %v1094 = vmul.f32 1.0, %v1093
      %v1095 = vrcp.pop %v1089
      %v1096 = vmul.f32 1.0, %v1095
      %v1097 = vrcp.pop %v1090
      %v1098 = vmul.f32 1.0, %v1097
      %v1099 = vxor.u32 %v970, 2147483648
      %v1100 = vxor.u32 %v972, 2147483648
      %v1101 = vxor.u32 %v1059, 2147483648
      %v1102 = vxor.u32 %v1061, 2147483648
      %v1103 = vmul.f32 %v1099, 1.442695
      %v1104 = vpow.pop %v1103
      %v1105 = vmul.f32 %v1100, 1.442695
      %v1106 = vpow.pop %v1105
      %v1107 = vmul.f32 %v1101, 1.442695
      %v1108 = vpow.pop %v1107
      %v1109 = vmul.f32 %v1102, 1.442695
      %v1110 = vpow.pop %v1109
      %v1111 = vadd.f32 %v1104, 1.0
      %v1112 = vadd.f32 %v1106, 1.0
      %v1113 = vadd.f32 %v1108, 1.0
      %v1114 = vadd.f32 %v1110, 1.0
      %v1115 = vrcp.pop %v1111
      %v1116 = vmul.f32 1.0, %v1115
      %v1117 = vrcp.pop %v1112
      %v1118 = vmul.f32 1.0, %v1117
      %v1119 = vrcp.pop %v1113
      %v1120 = vmul.f32 1.0, %v1119
      %v1121 = vrcp.pop %v1114
      %v1122 = vmul.f32 1.0, %v1121
      %v1123 = vxor.u32 %v976, 2147483648
      %v1124 = vxor.u32 %v978, 2147483648
      %v1125 = vxor.u32 %v1065, 2147483648
      %v1126 = vxor.u32 %v1067, 2147483648
      %v1127 = vmul.f32 %v1123, 1.442695
      %v1128 = vpow.pop %v1127
      %v1129 = vmul.f32 %v1124, 1.442695
      %v1130 = vpow.pop %v1129
      %v1131 = vmul.f32 %v1125, 1.442695
      %v1132 = vpow.pop %v1131
      %v1133 = vmul.f32 %v1126, 1.442695
      %v1134 = vpow.pop %v1133
      %v1135 = vadd.f32 %v1128, 1.0
      %v1136 = vadd.f32 %v1130, 1.0
      %v1137 = vadd.f32 %v1132, 1.0
      %v1138 = vadd.f32 %v1134, 1.0
      %v1139 = vrcp.pop %v1135
      %v1140 = vmul.f32 1.0, %v1139
      %v1141 = vrcp.pop %v1136
      %v1142 = vmul.f32 1.0, %v1141
      %v1143 = vrcp.pop %v1137
      %v1144 = vmul.f32 1.0, %v1143
      %v1145 = vrcp.pop %v1138
      %v1146 = vmul.f32 1.0, %v1145
      %v1147 = vtanh.pop %v982
      %v1148 = vtanh.pop %v984
      %v1149 = vtanh.pop %v1071
      %v1150 = vtanh.pop %v1073
      %v1151 = vld [vmem:[%s5] sm:$0xff]
      %v1152 = vld [vmem:[%s5 + $0x8] sm:$0xff]
      %v1153 = vld [vmem:[%s5 + $0x10] sm:$0xff]
      %v1154 = vld [vmem:[%s5 + $0x18] sm:$0xff]
      %v1155 = vmul.f32 %v1116, %v1151
      %v1156 = vmul.f32 %v1118, %v1152
      %v1157 = vmul.f32 %v1120, %v1153
      %v1158 = vmul.f32 %v1122, %v1154
      %v1159 = vmul.f32 %v1092, %v1147
      %v1160 = vmul.f32 %v1094, %v1148
      %v1161 = vmul.f32 %v1096, %v1149
      %v1162 = vmul.f32 %v1098, %v1150
      %v1163 = vadd.f32 %v1155, %v1159
      %v1164 = vadd.f32 %v1156, %v1160
      %v1165 = vadd.f32 %v1157, %v1161
      %v1166 = vadd.f32 %v1158, %v1162
      %v1167 = vtanh.pop %v1163
      %v1168 = vtanh.pop %v1164
      %v1169 = vtanh.pop %v1165
      %v1170 = vtanh.pop %v1166
      %v1171 = vmul.f32 %v1140, %v1167
      %v1172 = vmul.f32 %v1142, %v1168
      %v1173 = vmul.f32 %v1144, %v1169
      %v1174 = vmul.f32 %v1146, %v1170
      %1175 = vst [vmem:[%s5] sm:$0xff] %v1163
      %1176 = vst [vmem:[%s5 + $0x8] sm:$0xff] %v1164
      %1177 = vst [vmem:[%s5 + $0x10] sm:$0xff] %v1165
      %1178 = vst [vmem:[%s5 + $0x18] sm:$0xff] %v1166
      %1179 = vst [vmem:[#allocation4] sm:$0xff] %v1171
      %1180 = vst [vmem:[#allocation4 + $0x8] sm:$0xff] %v1172
      %1181 = vst [vmem:[#allocation4 + $0x10] sm:$0xff] %v1173
      %1182 = vst [vmem:[#allocation4 + $0x18] sm:$0xff] %v1174
      %1183 = vst [vmem:[%s222] sm:$0xff] %v1171
      %1184 = vst [vmem:[%s222 + $0x8] sm:$0xff] %v1172
      %1185 = vst [vmem:[%s222 + $0x10] sm:$0xff] %v1173
      %1186 = vst [vmem:[%s222 + $0x18] sm:$0xff] %v1174
      %p1187 = scmp.lt.s32.totalorder %s17, 7
      %s1188 = scalar_select %p1187, %s17, 7
      %s1189 = smul.addr %s1188, 4
      %s1190 = smul.addr %s1189, 8
      %s1191 = scalar_lea.vmem %s4, %s1190
      // Predicated region
      $region41: #{_lambda_.3} parent=35 // pred_check
        %p1192 = pneg %p124
      $region42: #{_lambda_.3} parent=35 // pred_check_branch
        %1194 = sbr.rel (%p1192) target = $region44
      $region43: #{_lambda_.3} parent=35 // pred_region
        _
      $region44: #{_lambda_.3} parent=35 // pred_fallthru
        _
      // Predicated region
      $region45: #{_lambda_.3} parent=35 // pred_check
        %p1195 = pneg %p145
      $region46: #{_lambda_.3} parent=35 // pred_check_branch
        %1197 = sbr.rel (%p1195) target = $region48
      $region47: #{_lambda_.3} parent=35 // pred_region
        _
      $region48: #{_lambda_.3} parent=35 // pred_fallthru
        _
      // Predicated region
      $region49: #{_lambda_.3} parent=35 // pred_check
        %p1198 = pneg %p145
      $region50: #{_lambda_.3} parent=35 // pred_check_branch
        %1200 = sbr.rel (%p1198) target = $region52
      $region51: #{_lambda_.3} parent=35 // pred_region
        _
      $region52: #{_lambda_.3} parent=35 // pred_fallthru
        _
    $region36: #{_lambda_.3} parent=5 // pred_fallthru
      _
    %p1201 = scmp.le.s32.totalorder 2, %s12
    // Predicated region
    $region53: #{_lambda_.3} parent=5 // pred_check
      %p1202 = pneg %p1201
    $region54: #{_lambda_.3} parent=5 // pred_check_branch
      %1204 = sbr.rel (%p1202) target = $region56
    $region55: #{_lambda_.3} parent=5 // pred_region
      %s1205 = ssub.s32 %s12, 2
      // Predicated region
      $region57: #{_lambda_.3} parent=55 // pred_check
        %p1206 = pneg %p130
      $region58: #{_lambda_.3} parent=55 // pred_check_branch
        %1208 = sbr.rel (%p1206) target = $region60
      $region59: #{_lambda_.3} parent=55 // pred_region
        %p1209 = scmp.lt.s32.totalorder %s18, 7
        %s1210 = scalar_select %p1209, %s18, 7
        %s1211 = smul.addr %s1210, 4
        %s1212 = smul.addr %s1211, 8
        %s1213 = scalar_lea.vmem %s4, %s1212
      $region60: #{_lambda_.3} parent=55 // pred_fallthru
        _
    $region56: #{_lambda_.3} parent=5 // pred_fallthru
      _
  $region6: #{_lambda_.3} parent=0 // loop_footer
    %s16 = sadd.s32 1, %s12
  $region7: #{_lambda_.3} parent=0 // loop_footer_branch
    %11 = sbr.rel target = $region3
  $region8: #{_lambda_.3} parent=0 // loop_exit
    _

// kernel: _lambda_.2
$region0: #{_lambda_.2}
  #allocation0 [shape = 'u32[]', space=smem, size = 0x4, offset = 0x4, fixed_abs, tag = 'smem constant byte address 0x4 - core index']
  #allocation1 [shape = 'u32[144,128]{1,0:T(1,128)}', space=vmem, size = 0x12000, scoped, tag = 'internal scratch']
  #allocation2 [shape = 'f32[16,512]{1,0:T(8,128)}', space=vmem, size = 0x8000, scoped, tag = 'scratch operand']
  #allocation3 [shape = 'f32[144,512]{1,0:T(8,128)}', space=vmem, size = 0x48000, scoped, tag = 'scratch operand']
  #allocation4 [shape = 'f32[8,512]{1,0:T(8,128)}', space=vmem, size = 0x4000, scoped, tag = 'scratch operand']
  %s0 = inlined_call_operand.vmem [shape: f32[8,8,512], index: 0, kind: input, shape index: {}]
  %s1 = inlined_call_operand.vmem [shape: f32[32,144], index: 1, kind: input, shape index: {}]
  %s2 = inlined_call_operand.vmem [shape: f32[32,1], index: 2, kind: input, shape index: {}]
  %s3 = inlined_call_operand.vmem [shape: f32[9,1,512], index: 3, kind: input, shape index: {}]
  %s4 = inlined_call_operand.vmem [shape: f32[8,8,512], index: 4, kind: output, shape index: {0}]
  %s5 = inlined_call_operand.hbm [shape: f32[8,512], index: 5, kind: output, shape index: {1}]
  %6 = xla_tuple %s4, %s5
  %s7 = sld [smem:[#allocation0]]
  $region61: #{_lambda_.2} parent=0
    _
  %s9 = ssub.s32 1, %s7
  %s10 = scalar_select 0, %s9, %s7
  $region1: #{_lambda_.2} parent=0
    #allocation5 [shape = 'u8[16384]{0}', space=vmem, size = 0x4000, scoped, tag = 'output window, operand 1, single buffered']
    #allocation6 [shape = 's32[2]{0}', space=sflag, size = 0x8, scoped, tag = 'scoped memory for _lambda_.2']
    %11 = vsyncpa [#allocation6], 0
    loop: start=0, step=1, limit=10
    $region2: #{_lambda_.2} parent=1 // loop_pre_header
      _
    $region3: #{_lambda_.2} parent=1 // loop_header
      %s13 = sphi 0, %s17
      %p14 = scmp.ge.s32.totalorder %s13, 10
      %s23 = sphi 0, %s25
      %s26 = sphi 0, %s23
      %s27 = sphi 0, %s26
      %s43 = sphi 0, %s27
      %s47 = sphi 0, %s47
      %s49 = sphi 0, %s47
      %s50 = sphi 0, %s49
      %s64 = sphi 0, %s50
      %s68 = sphi 0, %s68
      %s70 = sphi 0, %s68
      %s71 = sphi 0, %s70
      %s85 = sphi 0, %s71
      %s89 = sphi 0, %s89
      %s91 = sphi 0, %s89
      %s92 = sphi 0, %s91
      %s106 = sphi 0, %s92
      %s112 = sphi 0, %s114
      %s115 = sphi 0, %s112
      %s116 = sphi 0, %s115
      %s132 = sphi 0, %s116
      %s136 = sphi 0, %s136
      %s138 = sphi 0, %s136
      %s139 = sphi 0, %s138
      %s153 = sphi 0, %s139
    $region4: #{_lambda_.2} parent=1 // loop_header_branch
      %16 = sbr.rel (%p14) target = $region8
    $region5: #{_lambda_.2} parent=1 // loop_body
      %s18 = ssub.s32 %s13, 1
      %s19 = ssub.s32 %s13, 2
      %s20 = sadd.s32 %s13, 1
      %s21 = ssub.s32 %s13, %s20
      %p22 = scmp.eq.s32.totalorder %s21, 0
      %s24 = sadd.s32 %s23, 1
      %s25 = scalar_select %p22, %s23, %s24
      %p28 = pneg %p22
      %p29 = scmp.eq.s32.totalorder %s13, 7
      %p30 = por %p28, %p29
      %p31 = scmp.ne.s32.totalorder %s23, %s26
      %p32 = scmp.eq.s32.totalorder %s13, 0
      %p33 = por %p31, %p32
      %p34 = scmp.ne.s32.totalorder %s23, %s26
      %p35 = scmp.eq.s32.totalorder %s18, 7
      %p36 = por %p34, %p35
      %p37 = scmp.ne.s32.totalorder %s26, %s27
      %p38 = scmp.eq.s32.totalorder %s18, 0
      %p39 = por %p37, %p38
      %p40 = scmp.ne.s32.totalorder %s26, %s27
      %p41 = scmp.eq.s32.totalorder %s19, 7
      %p42 = por %p40, %p41
      %p44 = scmp.ne.s32.totalorder %s27, %s43
      %p45 = scmp.eq.s32.totalorder %s19, 0
      %p46 = por %p44, %p45
      %s48 = sadd.s32 %s47, 1
      %p51 = scmp.eq.s32.totalorder %s13, 7
      %p52 = scmp.ne.s32.totalorder %s47, %s49
      %p53 = scmp.eq.s32.totalorder %s13, 0
      %p54 = por %p52, %p53
      %p55 = scmp.ne.s32.totalorder %s47, %s49
      %p56 = scmp.eq.s32.totalorder %s18, 7
      %p57 = por %p55, %p56
      %p58 = scmp.ne.s32.totalorder %s49, %s50
      %p59 = scmp.eq.s32.totalorder %s18, 0
      %p60 = por %p58, %p59
      %p61 = scmp.ne.s32.totalorder %s49, %s50
      %p62 = scmp.eq.s32.totalorder %s19, 7
      %p63 = por %p61, %p62
      %p65 = scmp.ne.s32.totalorder %s50, %s64
      %p66 = scmp.eq.s32.totalorder %s19, 0
      %p67 = por %p65, %p66
      %s69 = sadd.s32 %s68, 1
      %p72 = scmp.eq.s32.totalorder %s13, 7
      %p73 = scmp.ne.s32.totalorder %s68, %s70
      %p74 = scmp.eq.s32.totalorder %s13, 0
      %p75 = por %p73, %p74
      %p76 = scmp.ne.s32.totalorder %s68, %s70
      %p77 = scmp.eq.s32.totalorder %s18, 7
      %p78 = por %p76, %p77
      %p79 = scmp.ne.s32.totalorder %s70, %s71
      %p80 = scmp.eq.s32.totalorder %s18, 0
      %p81 = por %p79, %p80
      %p82 = scmp.ne.s32.totalorder %s70, %s71
      %p83 = scmp.eq.s32.totalorder %s19, 7
      %p84 = por %p82, %p83
      %p86 = scmp.ne.s32.totalorder %s71, %s85
      %p87 = scmp.eq.s32.totalorder %s19, 0
      %p88 = por %p86, %p87
      %s90 = sadd.s32 %s89, 1
      %p93 = scmp.eq.s32.totalorder %s13, 7
      %p94 = scmp.ne.s32.totalorder %s89, %s91
      %p95 = scmp.eq.s32.totalorder %s13, 0
      %p96 = por %p94, %p95
      %p97 = scmp.ne.s32.totalorder %s89, %s91
      %p98 = scmp.eq.s32.totalorder %s18, 7
      %p99 = por %p97, %p98
      %p100 = scmp.ne.s32.totalorder %s91, %s92
      %p101 = scmp.eq.s32.totalorder %s18, 0
      %p102 = por %p100, %p101
      %p103 = scmp.ne.s32.totalorder %s91, %s92
      %p104 = scmp.eq.s32.totalorder %s19, 7
      %p105 = por %p103, %p104
      %p107 = scmp.ne.s32.totalorder %s92, %s106
      %p108 = scmp.eq.s32.totalorder %s19, 0
      %p109 = por %p107, %p108
      %s110 = ssub.s32 %s13, %s20
      %p111 = scmp.eq.s32.totalorder %s110, 0
      %s113 = sadd.s32 %s112, 1
      %s114 = scalar_select %p111, %s112, %s113
      %p117 = pneg %p111
      %p118 = scmp.eq.s32.totalorder %s13, 7
      %p119 = por %p117, %p118
      %p120 = scmp.ne.s32.totalorder %s112, %s115
      %p121 = scmp.eq.s32.totalorder %s13, 0
      %p122 = por %p120, %p121
      %p123 = scmp.ne.s32.totalorder %s112, %s115
      %p124 = scmp.eq.s32.totalorder %s18, 7
      %p125 = por %p123, %p124
      %p126 = scmp.ne.s32.totalorder %s115, %s116
      %p127 = scmp.eq.s32.totalorder %s18, 0
      %p128 = por %p126, %p127
      %p129 = scmp.ne.s32.totalorder %s115, %s116
      %p130 = scmp.eq.s32.totalorder %s19, 7
      %p131 = por %p129, %p130
      %p133 = scmp.ne.s32.totalorder %s116, %s132
      %p134 = scmp.eq.s32.totalorder %s19, 0
      %p135 = por %p133, %p134
      %s137 = sadd.s32 %s136, 1
      %p140 = scmp.eq.s32.totalorder %s13, 7
      %p141 = scmp.ne.s32.totalorder %s136, %s138
      %p142 = scmp.eq.s32.totalorder %s13, 0
      %p143 = por %p141, %p142
      %p144 = scmp.ne.s32.totalorder %s136, %s138
      %p145 = scmp.eq.s32.totalorder %s18, 7
      %p146 = por %p144, %p145
      %p147 = scmp.ne.s32.totalorder %s138, %s139
      %p148 = scmp.eq.s32.totalorder %s18, 0
      %p149 = por %p147, %p148
      %p150 = scmp.ne.s32.totalorder %s138, %s139
      %p151 = scmp.eq.s32.totalorder %s19, 7
      %p152 = por %p150, %p151
      %p154 = scmp.ne.s32.totalorder %s139, %s153
      %p155 = scmp.eq.s32.totalorder %s19, 0
      %p156 = por %p154, %p155
      %p157 = scmp.le.s32.totalorder 1, %s13
      %p158 = scmp.lt.s32.totalorder %s13, 9
      %p159 = pnand %p157, %p158
      %p160 = pneg %p159
      // Predicated region
      $region9: #{_lambda_.2} parent=5 // pred_check
        _
      $region10: #{_lambda_.2} parent=5 // pred_check_branch
        %162 = sbr.rel (%p159) target = $region12
      $region11: #{_lambda_.2} parent=5 // pred_region
        %s163 = ssub.s32 %s13, 1
        // Predicated region
        $region13: #{_lambda_.2} parent=11 // pred_check
          %p164 = pneg %p60
        $region14: #{_lambda_.2} parent=11 // pred_check_branch
          %166 = sbr.rel (%p164) target = $region16
        $region15: #{_lambda_.2} parent=11 // pred_region
          _
        $region16: #{_lambda_.2} parent=11 // pred_fallthru
          _
        // Predicated region
        $region17: #{_lambda_.2} parent=11 // pred_check
          %p167 = pneg %p81
        $region18: #{_lambda_.2} parent=11 // pred_check_branch
          %169 = sbr.rel (%p167) target = $region20
        $region19: #{_lambda_.2} parent=11 // pred_region
          _
        $region20: #{_lambda_.2} parent=11 // pred_fallthru
          _
        // Predicated region
        $region21: #{_lambda_.2} parent=11 // pred_check
          %p170 = pneg %p102
        $region22: #{_lambda_.2} parent=11 // pred_check_branch
          %172 = sbr.rel (%p170) target = $region24
        $region23: #{_lambda_.2} parent=11 // pred_region
          _
        $region24: #{_lambda_.2} parent=11 // pred_fallthru
          _
      $region12: #{_lambda_.2} parent=5 // pred_fallthru
        _
      %p173 = scmp.lt.s32.totalorder %s13, 8
      // Predicated region
      $region25: #{_lambda_.2} parent=5 // pred_check
        %p174 = pneg %p173
      $region26: #{_lambda_.2} parent=5 // pred_check_branch
        %176 = sbr.rel (%p174) target = $region28
      $region27: #{_lambda_.2} parent=5 // pred_region
        // Predicated region
        $region29: #{_lambda_.2} parent=27 // pred_check
          %p177 = pneg %p33
        $region30: #{_lambda_.2} parent=27 // pred_check_branch
          %179 = sbr.rel (%p177) target = $region32
        $region31: #{_lambda_.2} parent=27 // pred_region
          %p180 = scmp.lt.s32.totalorder %s13, 7
          %s181 = scalar_select %p180, %s13, 7
          %s182 = smul.addr %s181, 4
          %s183 = smul.addr %s182, 8
          %s184 = scalar_lea.vmem %s0, %s183
        $region32: #{_lambda_.2} parent=27 // pred_fallthru
          _
      $region28: #{_lambda_.2} parent=5 // pred_fallthru
        _
      %p185 = scmp.le.s32.totalorder 1, %s13
      %p186 = scmp.lt.s32.totalorder %s13, 9
      %p187 = pnand %p185, %p186
      %p188 = pneg %p187
      // Predicated region
      $region33: #{_lambda_.2} parent=5 // pred_check
        _
      $region34: #{_lambda_.2} parent=5 // pred_check_branch
        %190 = sbr.rel (%p187) target = $region36
      $region35: #{_lambda_.2} parent=5 // pred_region
        %s191 = ssub.s32 %s13, 1
        %p192 = scmp.lt.s32.totalorder %s18, 7
        %s193 = scalar_select %p192, %s18, 7
        %s194 = smul.addr %s193, 4
        %s195 = smul.addr %s194, 8
        %s196 = scalar_lea.vmem %s0, %s195
        %p197 = pneg %p39
        %p198 = pneg %p36
        %p199 = pneg %p60
        %p200 = pneg %p57
        %p201 = pneg %p81
        %p202 = pneg %p78
        %p203 = pneg %p102
        %p204 = pneg %p99
        %p205 = pneg %p128
        %p206 = pneg %p125
        %p207 = scmp.lt.s32.totalorder %s18, 7
        %s208 = scalar_select %p207, %s18, 7
        %s209 = smul.addr %s208, 4
        %s210 = smul.addr %s209, 8
        %s211 = scalar_lea.vmem %s4, %s210
        %p212 = pneg %p149
        %p213 = pneg %p146
        %p214 = scmp.lt.s32.totalorder %s18, 7
        %s215 = scalar_select %p214, %s18, 7
        %s216 = smul.addr %s215, 4
        %s217 = smul.addr %s216, 8
        %s218 = scalar_lea.vmem %s0, %s217
        %p219 = scmp.lt.s32.totalorder %s18, 7
        %s220 = scalar_select %p219, %s18, 7
        %s221 = smul.addr %s220, 4
        %s222 = smul.addr %s221, 8
        %s223 = scalar_lea.vmem %s4, %s222
        %p224 = scmp.eq.s32.totalorder %s18, 0
        // Predicated region
        $region37: #{_lambda_.2} parent=35 // pred_check
          %p225 = pneg %p224
        $region38: #{_lambda_.2} parent=35 // pred_check_branch
          %227 = sbr.rel (%p225) target = $region40
        $region39: #{_lambda_.2} parent=35 // pred_region
          %228 = vst [vmem:[#allocation4] sm:$0xff] 0.0
          %229 = vst [vmem:[#allocation4 + $0x8] sm:$0xff] 0.0
          %230 = vst [vmem:[#allocation4 + $0x10] sm:$0xff] 0.0
          %231 = vst [vmem:[#allocation4 + $0x18] sm:$0xff] 0.0
          %232 = vst [vmem:[#allocation5] sm:$0xff] 0.0
          %233 = vst [vmem:[#allocation5 + $0x8] sm:$0xff] 0.0
          %234 = vst [vmem:[#allocation5 + $0x10] sm:$0xff] 0.0
          %235 = vst [vmem:[#allocation5 + $0x18] sm:$0xff] 0.0
        $region40: #{_lambda_.2} parent=35 // pred_fallthru
          _
        %v236 = vld [vmem:[%s218] sm:$0xff]
        %v237 = vld [vmem:[%s218 + $0x8] sm:$0xff]
        %v238 = vld [vmem:[%s218 + $0x10] sm:$0xff]
        %v239 = vld [vmem:[%s218 + $0x18] sm:$0xff]
        %240 = vst [vmem:[#allocation2] sm:$0xff] %v236
        %241 = vst [vmem:[#allocation2 + $0x8] sm:$0xff] %v237
        %242 = vst [vmem:[#allocation2 + $0x10] sm:$0xff] %v238
        %243 = vst [vmem:[#allocation2 + $0x18] sm:$0xff] %v239
        %v244 = vld [vmem:[#allocation4] sm:$0xff]
        %v245 = vld [vmem:[#allocation4 + $0x8] sm:$0xff]
        %v246 = vld [vmem:[#allocation4 + $0x10] sm:$0xff]
        %v247 = vld [vmem:[#allocation4 + $0x18] sm:$0xff]
        %248 = vst [vmem:[#allocation2 + $0x20] sm:$0xff] %v244
        %249 = vst [vmem:[#allocation2 + $0x28] sm:$0xff] %v245
        %250 = vst [vmem:[#allocation2 + $0x30] sm:$0xff] %v246
        %251 = vst [vmem:[#allocation2 + $0x38] sm:$0xff] %v247
        %v252 = vld [vmem:[#allocation2] sm:$0xff]
        %v253 = vld [vmem:[#allocation2 + $0x8] sm:$0xff]
        %v254 = vld [vmem:[#allocation2 + $0x10] sm:$0xff]
        %v255 = vld [vmem:[#allocation2 + $0x18] sm:$0xff]
        %v256 = vld [vmem:[#allocation2 + $0x20] sm:$0xff]
        %v257 = vld [vmem:[#allocation2 + $0x28] sm:$0xff]
        %v258 = vld [vmem:[#allocation2 + $0x30] sm:$0xff]
        %v259 = vld [vmem:[#allocation2 + $0x38] sm:$0xff]
        %260 = vrot.lane.b32.xlu0 %v252, 17
        %v261 = vpop.permute.xlu0 %260
        %262 = vrot.lane.b32.xlu0 %v256, 17
        %v263 = vpop.permute.xlu0 %262
        %264 = vrot.lane.b32.xlu0 %v253, 17
        %v265 = vpop.permute.xlu0 %264
        %266 = vrot.lane.b32.xlu0 %v257, 17
        %v267 = vpop.permute.xlu0 %266
        %268 = vrot.lane.b32.xlu0 %v254, 17
        %v269 = vpop.permute.xlu0 %268
        %270 = vrot.lane.b32.xlu0 %v258, 17
        %v271 = vpop.permute.xlu0 %270
        %272 = vrot.lane.b32.xlu0 %v255, 17
        %v273 = vpop.permute.xlu0 %272
        %274 = vrot.lane.b32.xlu0 %v259, 17
        %v275 = vpop.permute.xlu0 %274
        %v276 = vlaneseq
        %v277 = vand.u32 %v276, 127
        %vm278 = vcmp.lt.s32.totalorder %v277, 17
        %v279 = vsel %vm278, %v269, %v273
        %v280 = vsel %vm278, %v271, %v275
        %v281 = vsel %vm278, %v265, %v269
        %v282 = vsel %vm278, %v267, %v271
        %v283 = vsel %vm278, %v261, %v265
        %v284 = vsel %vm278, %v263, %v267
        %v285 = vsel %vm278, %v273, %v261
        %v286 = vsel %vm278, %v275, %v263
        %v287 = vld [vmem:[%s3] sm:$0xf]
        %v289 = vlaneseq
        %v290 = vshrl.u32 %v289, 7
        %v291 = vsub.s32 0, %v290
        %v292 = vrot.slane %v287, %v291
        %v293 = vlaneseq
        %v294 = vshrl.u32 %v293, 7
        %v295 = vsub.s32 1, %v294
        %v296 = vrot.slane %v287, %v295
        %v297 = vlaneseq
        %v298 = vshrl.u32 %v297, 7
        %v299 = vsub.s32 2, %v298
        %v300 = vrot.slane %v287, %v299
        %v301 = vlaneseq
        %v302 = vshrl.u32 %v301, 7
        %v303 = vsub.s32 3, %v302
        %v304 = vrot.slane %v287, %v303
        %v309 = vmul.f32 %v285, %v292
        %v310 = vmul.f32 %v283, %v296
        %v311 = vmul.f32 %v281, %v300
        %v312 = vmul.f32 %v279, %v304
        %v313 = vmul.f32 %v286, %v292
        %v314 = vmul.f32 %v284, %v296
        %v315 = vmul.f32 %v282, %v300
        %v316 = vmul.f32 %v280, %v304
        %317 = vst [vmem:[#allocation3] sm:$0xff] %v309
        %318 = vst [vmem:[#allocation3 + $0x8] sm:$0xff] %v310
        %319 = vst [vmem:[#allocation3 + $0x10] sm:$0xff] %v311
        %320 = vst [vmem:[#allocation3 + $0x18] sm:$0xff] %v312
        %321 = vst [vmem:[#allocation3 + $0x20] sm:$0xff] %v313
        %322 = vst [vmem:[#allocation3 + $0x28] sm:$0xff] %v314
        %323 = vst [vmem:[#allocation3 + $0x30] sm:$0xff] %v315
        %324 = vst [vmem:[#allocation3 + $0x38] sm:$0xff] %v316
        %325 = vrot.lane.b32.xlu0 %v252, 16
        %v326 = vpop.permute.xlu0 %325
        %327 = vrot.lane.b32.xlu0 %v256, 16
        %v328 = vpop.permute.xlu0 %327
        %329 = vrot.lane.b32.xlu0 %v253, 16
        %v330 = vpop.permute.xlu0 %329
        %331 = vrot.lane.b32.xlu0 %v257, 16
        %v332 = vpop.permute.xlu0 %331
        %333 = vrot.lane.b32.xlu0 %v254, 16
        %v334 = vpop.permute.xlu0 %333
        %335 = vrot.lane.b32.xlu0 %v258, 16
        %v336 = vpop.permute.xlu0 %335
        %337 = vrot.lane.b32.xlu0 %v255, 16
        %v338 = vpop.permute.xlu0 %337
        %339 = vrot.lane.b32.xlu0 %v259, 16
        %v340 = vpop.permute.xlu0 %339
        %vm341 = vcmp.lt.s32.totalorder %v277, 16
        %v342 = vsel %vm341, %v334, %v338
        %v343 = vsel %vm341, %v336, %v340
        %v344 = vsel %vm341, %v330, %v334
        %v345 = vsel %vm341, %v332, %v336
        %v346 = vsel %vm341, %v326, %v330
        %v347 = vsel %vm341, %v328, %v332
        %v348 = vsel %vm341, %v338, %v326
        %v349 = vsel %vm341, %v340, %v328
        %s350 = scalar_lea.vmem %s3, 4
        %v351 = vld [vmem:[%s350] sm:$0xf]
        %v353 = vlaneseq
        %v354 = vshrl.u32 %v353, 7
        %v355 = vsub.s32 0, %v354
        %v356 = vrot.slane %v351, %v355
        %v357 = vlaneseq
        %v358 = vshrl.u32 %v357, 7
        %v359 = vsub.s32 1, %v358
        %v360 = vrot.slane %v351, %v359
        %v361 = vlaneseq
        %v362 = vshrl.u32 %v361, 7
        %v363 = vsub.s32 2, %v362
        %v364 = vrot.slane %v351, %v363
        %v365 = vlaneseq
        %v366 = vshrl.u32 %v365, 7
        %v367 = vsub.s32 3, %v366
        %v368 = vrot.slane %v351, %v367
        %v373 = vmul.f32 %v348, %v356
        %v374 = vmul.f32 %v346, %v360
        %v375 = vmul.f32 %v344, %v364
        %v376 = vmul.f32 %v342, %v368
        %v377 = vmul.f32 %v349, %v356
        %v378 = vmul.f32 %v347, %v360
        %v379 = vmul.f32 %v345, %v364
        %v380 = vmul.f32 %v343, %v368
        %381 = vst [vmem:[#allocation3 + $0x40] sm:$0xff] %v373
        %382 = vst [vmem:[#allocation3 + $0x48] sm:$0xff] %v374
        %383 = vst [vmem:[#allocation3 + $0x50] sm:$0xff] %v375
        %384 = vst [vmem:[#allocation3 + $0x58] sm:$0xff] %v376
        %385 = vst [vmem:[#allocation3 + $0x60] sm:$0xff] %v377
        %386 = vst [vmem:[#allocation3 + $0x68] sm:$0xff] %v378
        %387 = vst [vmem:[#allocation3 + $0x70] sm:$0xff] %v379
        %388 = vst [vmem:[#allocation3 + $0x78] sm:$0xff] %v380
        %389 = vrot.lane.b32.xlu0 %v252, 15
        %v390 = vpop.permute.xlu0 %389
        %391 = vrot.lane.b32.xlu0 %v256, 15
        %v392 = vpop.permute.xlu0 %391
        %393 = vrot.lane.b32.xlu0 %v253, 15
        %v394 = vpop.permute.xlu0 %393
        %395 = vrot.lane.b32.xlu0 %v257, 15
        %v396 = vpop.permute.xlu0 %395
        %397 = vrot.lane.b32.xlu0 %v254, 15
        %v398 = vpop.permute.xlu0 %397
        %399 = vrot.lane.b32.xlu0 %v258, 15
        %v400 = vpop.permute.xlu0 %399
        %401 = vrot.lane.b32.xlu0 %v255, 15
        %v402 = vpop.permute.xlu0 %401
        %403 = vrot.lane.b32.xlu0 %v259, 15
        %v404 = vpop.permute.xlu0 %403
        %vm405 = vcmp.lt.s32.totalorder %v277, 15
        %v406 = vsel %vm405, %v398, %v402
        %v407 = vsel %vm405, %v400, %v404
        %v408 = vsel %vm405, %v394, %v398
        %v409 = vsel %vm405, %v396, %v400
        %v410 = vsel %vm405, %v390, %v394
        %v411 = vsel %vm405, %v392, %v396
        %v412 = vsel %vm405, %v402, %v390
        %v413 = vsel %vm405, %v404, %v392
        %s414 = scalar_lea.vmem %s3, 8
        %v415 = vld [vmem:[%s414] sm:$0xf]
        %v417 = vlaneseq
        %v418 = vshrl.u32 %v417, 7
        %v419 = vsub.s32 0, %v418
        %v420 = vrot.slane %v415, %v419
        %v421 = vlaneseq
        %v422 = vshrl.u32 %v421, 7
        %v423 = vsub.s32 1, %v422
        %v424 = vrot.slane %v415, %v423
        %v425 = vlaneseq
        %v426 = vshrl.u32 %v425, 7
        %v427 = vsub.s32 2, %v426
        %v428 = vrot.slane %v415, %v427
        %v429 = vlaneseq
        %v430 = vshrl.u32 %v429, 7
        %v431 = vsub.s32 3, %v430
        %v432 = vrot.slane %v415, %v431
        %v437 = vmul.f32 %v412, %v420
        %v438 = vmul.f32 %v410, %v424
        %v439 = vmul.f32 %v408, %v428
        %v440 = vmul.f32 %v406, %v432
        %v441 = vmul.f32 %v413, %v420
        %v442 = vmul.f32 %v411, %v424
        %v443 = vmul.f32 %v409, %v428
        %v444 = vmul.f32 %v407, %v432
        %445 = vst [vmem:[#allocation3 + $0x80] sm:$0xff] %v437
        %446 = vst [vmem:[#allocation3 + $0x88] sm:$0xff] %v438
        %447 = vst [vmem:[#allocation3 + $0x90] sm:$0xff] %v439
        %448 = vst [vmem:[#allocation3 + $0x98] sm:$0xff] %v440
        %449 = vst [vmem:[#allocation3 + $0xa0] sm:$0xff] %v441
        %450 = vst [vmem:[#allocation3 + $0xa8] sm:$0xff] %v442
        %451 = vst [vmem:[#allocation3 + $0xb0] sm:$0xff] %v443
        %452 = vst [vmem:[#allocation3 + $0xb8] sm:$0xff] %v444
        %453 = vrot.lane.b32.xlu0 %v252, 1
        %v454 = vpop.permute.xlu0 %453
        %455 = vrot.lane.b32.xlu0 %v256, 1
        %v456 = vpop.permute.xlu0 %455
        %457 = vrot.lane.b32.xlu0 %v253, 1
        %v458 = vpop.permute.xlu0 %457
        %459 = vrot.lane.b32.xlu0 %v257, 1
        %v460 = vpop.permute.xlu0 %459
        %461 = vrot.lane.b32.xlu0 %v254, 1
        %v462 = vpop.permute.xlu0 %461
        %463 = vrot.lane.b32.xlu0 %v258, 1
        %v464 = vpop.permute.xlu0 %463
        %465 = vrot.lane.b32.xlu0 %v255, 1
        %v466 = vpop.permute.xlu0 %465
        %467 = vrot.lane.b32.xlu0 %v259, 1
        %v468 = vpop.permute.xlu0 %467
        %vm469 = vcmp.lt.s32.totalorder %v277, 1
        %v470 = vsel %vm469, %v462, %v466
        %v471 = vsel %vm469, %v464, %v468
        %v472 = vsel %vm469, %v458, %v462
        %v473 = vsel %vm469, %v460, %v464
        %v474 = vsel %vm469, %v454, %v458
        %v475 = vsel %vm469, %v456, %v460
        %v476 = vsel %vm469, %v466, %v454
        %v477 = vsel %vm469, %v468, %v456
        %s478 = scalar_lea.vmem %s3, 12
        %v479 = vld [vmem:[%s478] sm:$0xf]
        %v481 = vlaneseq
        %v482 = vshrl.u32 %v481, 7
        %v483 = vsub.s32 0, %v482
        %v484 = vrot.slane %v479, %v483
        %v485 = vlaneseq
        %v486 = vshrl.u32 %v485, 7
        %v487 = vsub.s32 1, %v486
        %v488 = vrot.slane %v479, %v487
        %v489 = vlaneseq
        %v490 = vshrl.u32 %v489, 7
        %v491 = vsub.s32 2, %v490
        %v492 = vrot.slane %v479, %v491
        %v493 = vlaneseq
        %v494 = vshrl.u32 %v493, 7
        %v495 = vsub.s32 3, %v494
        %v496 = vrot.slane %v479, %v495
        %v501 = vmul.f32 %v476, %v484
        %v502 = vmul.f32 %v474, %v488
        %v503 = vmul.f32 %v472, %v492
        %v504 = vmul.f32 %v470, %v496
        %v505 = vmul.f32 %v477, %v484
        %v506 = vmul.f32 %v475, %v488
        %v507 = vmul.f32 %v473, %v492
        %v508 = vmul.f32 %v471, %v496
        %509 = vst [vmem:[#allocation3 + $0xc0] sm:$0xff] %v501
        %510 = vst [vmem:[#allocation3 + $0xc8] sm:$0xff] %v502
        %511 = vst [vmem:[#allocation3 + $0xd0] sm:$0xff] %v503
        %512 = vst [vmem:[#allocation3 + $0xd8] sm:$0xff] %v504
        %513 = vst [vmem:[#allocation3 + $0xe0] sm:$0xff] %v505
        %514 = vst [vmem:[#allocation3 + $0xe8] sm:$0xff] %v506
        %515 = vst [vmem:[#allocation3 + $0xf0] sm:$0xff] %v507
        %516 = vst [vmem:[#allocation3 + $0xf8] sm:$0xff] %v508
        %517 = vst [vmem:[#allocation3 + $0x100] sm:$0xff] %v252
        %518 = vst [vmem:[#allocation3 + $0x108] sm:$0xff] %v253
        %519 = vst [vmem:[#allocation3 + $0x110] sm:$0xff] %v254
        %520 = vst [vmem:[#allocation3 + $0x118] sm:$0xff] %v255
        %521 = vst [vmem:[#allocation3 + $0x120] sm:$0xff] %v256
        %522 = vst [vmem:[#allocation3 + $0x128] sm:$0xff] %v257
        %523 = vst [vmem:[#allocation3 + $0x130] sm:$0xff] %v258
        %524 = vst [vmem:[#allocation3 + $0x138] sm:$0xff] %v259
        %525 = vrot.lane.b32.xlu0 %v252, 127
        %v526 = vpop.permute.xlu0 %525
        %527 = vrot.lane.b32.xlu0 %v256, 127
        %v528 = vpop.permute.xlu0 %527
        %529 = vrot.lane.b32.xlu0 %v253, 127
        %v530 = vpop.permute.xlu0 %529
        %531 = vrot.lane.b32.xlu0 %v257, 127
        %v532 = vpop.permute.xlu0 %531
        %533 = vrot.lane.b32.xlu0 %v254, 127
        %v534 = vpop.permute.xlu0 %533
        %535 = vrot.lane.b32.xlu0 %v258, 127
        %v536 = vpop.permute.xlu0 %535
        %537 = vrot.lane.b32.xlu0 %v255, 127
        %v538 = vpop.permute.xlu0 %537
        %539 = vrot.lane.b32.xlu0 %v259, 127
        %v540 = vpop.permute.xlu0 %539
        %vm541 = vcmp.lt.s32.totalorder %v277, 127
        %v542 = vsel %vm541, %v534, %v538
        %v543 = vsel %vm541, %v536, %v540
        %v544 = vsel %vm541, %v530, %v534
        %v545 = vsel %vm541, %v532, %v536
        %v546 = vsel %vm541, %v526, %v530
        %v547 = vsel %vm541, %v528, %v532
        %v548 = vsel %vm541, %v538, %v526
        %v549 = vsel %vm541, %v540, %v528
        %s550 = scalar_lea.vmem %s3, 20
        %v551 = vld [vmem:[%s550] sm:$0xf]
        %v553 = vlaneseq
        %v554 = vshrl.u32 %v553, 7
        %v555 = vsub.s32 0, %v554
        %v556 = vrot.slane %v551, %v555
        %v557 = vlaneseq
        %v558 = vshrl.u32 %v557, 7
        %v559 = vsub.s32 1, %v558
        %v560 = vrot.slane %v551, %v559
        %v561 = vlaneseq
        %v562 = vshrl.u32 %v561, 7
        %v563 = vsub.s32 2, %v562
        %v564 = vrot.slane %v551, %v563
        %v565 = vlaneseq
        %v566 = vshrl.u32 %v565, 7
        %v567 = vsub.s32 3, %v566
        %v568 = vrot.slane %v551, %v567
        %v573 = vmul.f32 %v546, %v556
        %v574 = vmul.f32 %v544, %v560
        %v575 = vmul.f32 %v542, %v564
        %v576 = vmul.f32 %v548, %v568
        %v577 = vmul.f32 %v547, %v556
        %v578 = vmul.f32 %v545, %v560
        %v579 = vmul.f32 %v543, %v564
        %v580 = vmul.f32 %v549, %v568
        %581 = vst [vmem:[#allocation3 + $0x140] sm:$0xff] %v573
        %582 = vst [vmem:[#allocation3 + $0x148] sm:$0xff] %v574
        %583 = vst [vmem:[#allocation3 + $0x150] sm:$0xff] %v575
        %584 = vst [vmem:[#allocation3 + $0x158] sm:$0xff] %v576
        %585 = vst [vmem:[#allocation3 + $0x160] sm:$0xff] %v577
        %586 = vst [vmem:[#allocation3 + $0x168] sm:$0xff] %v578
        %587 = vst [vmem:[#allocation3 + $0x170] sm:$0xff] %v579
        %588 = vst [vmem:[#allocation3 + $0x178] sm:$0xff] %v580
        %589 = vrot.lane.b32.xlu0 %v252, 113
        %v590 = vpop.permute.xlu0 %589
        %591 = vrot.lane.b32.xlu0 %v256, 113
        %v592 = vpop.permute.xlu0 %591
        %593 = vrot.lane.b32.xlu0 %v253, 113
        %v594 = vpop.permute.xlu0 %593
        %595 = vrot.lane.b32.xlu0 %v257, 113
        %v596 = vpop.permute.xlu0 %595
        %597 = vrot.lane.b32.xlu0 %v254, 113
        %v598 = vpop.permute.xlu0 %597
        %599 = vrot.lane.b32.xlu0 %v258, 113
        %v600 = vpop.permute.xlu0 %599
        %601 = vrot.lane.b32.xlu0 %v255, 113
        %v602 = vpop.permute.xlu0 %601
        %603 = vrot.lane.b32.xlu0 %v259, 113
        %v604 = vpop.permute.xlu0 %603
        %vm605 = vcmp.lt.s32.totalorder %v277, 113
        %v606 = vsel %vm605, %v598, %v602
        %v607 = vsel %vm605, %v600, %v604
        %v608 = vsel %vm605, %v594, %v598
        %v609 = vsel %vm605, %v596, %v600
        %v610 = vsel %vm605, %v590, %v594
        %v611 = vsel %vm605, %v592, %v596
        %v612 = vsel %vm605, %v602, %v590
        %v613 = vsel %vm605, %v604, %v592
        %s614 = scalar_lea.vmem %s3, 24
        %v615 = vld [vmem:[%s614] sm:$0xf]
        %v617 = vlaneseq
        %v618 = vshrl.u32 %v617, 7
        %v619 = vsub.s32 0, %v618
        %v620 = vrot.slane %v615, %v619
        %v621 = vlaneseq
        %v622 = vshrl.u32 %v621, 7
        %v623 = vsub.s32 1, %v622
        %v624 = vrot.slane %v615, %v623
        %v625 = vlaneseq
        %v626 = vshrl.u32 %v625, 7
        %v627 = vsub.s32 2, %v626
        %v628 = vrot.slane %v615, %v627
        %v629 = vlaneseq
        %v630 = vshrl.u32 %v629, 7
        %v631 = vsub.s32 3, %v630
        %v632 = vrot.slane %v615, %v631
        %v637 = vmul.f32 %v610, %v620
        %v638 = vmul.f32 %v608, %v624
        %v639 = vmul.f32 %v606, %v628
        %v640 = vmul.f32 %v612, %v632
        %v641 = vmul.f32 %v611, %v620
        %v642 = vmul.f32 %v609, %v624
        %v643 = vmul.f32 %v607, %v628
        %v644 = vmul.f32 %v613, %v632
        %645 = vst [vmem:[#allocation3 + $0x180] sm:$0xff] %v637
        %646 = vst [vmem:[#allocation3 + $0x188] sm:$0xff] %v638
        %647 = vst [vmem:[#allocation3 + $0x190] sm:$0xff] %v639
        %648 = vst [vmem:[#allocation3 + $0x198] sm:$0xff] %v640
        %649 = vst [vmem:[#allocation3 + $0x1a0] sm:$0xff] %v641
        %650 = vst [vmem:[#allocation3 + $0x1a8] sm:$0xff] %v642
        %651 = vst [vmem:[#allocation3 + $0x1b0] sm:$0xff] %v643
        %652 = vst [vmem:[#allocation3 + $0x1b8] sm:$0xff] %v644
        %653 = vrot.lane.b32.xlu0 %v252, 112
        %v654 = vpop.permute.xlu0 %653
        %655 = vrot.lane.b32.xlu0 %v256, 112
        %v656 = vpop.permute.xlu0 %655
        %657 = vrot.lane.b32.xlu0 %v253, 112
        %v658 = vpop.permute.xlu0 %657
        %659 = vrot.lane.b32.xlu0 %v257, 112
        %v660 = vpop.permute.xlu0 %659
        %661 = vrot.lane.b32.xlu0 %v254, 112
        %v662 = vpop.permute.xlu0 %661
        %663 = vrot.lane.b32.xlu0 %v258, 112
        %v664 = vpop.permute.xlu0 %663
        %665 = vrot.lane.b32.xlu0 %v255, 112
        %v666 = vpop.permute.xlu0 %665
        %667 = vrot.lane.b32.xlu0 %v259, 112
        %v668 = vpop.permute.xlu0 %667
        %vm669 = vcmp.lt.s32.totalorder %v277, 112
        %v670 = vsel %vm669, %v662, %v666
        %v671 = vsel %vm669, %v664, %v668
        %v672 = vsel %vm669, %v658, %v662
        %v673 = vsel %vm669, %v660, %v664
        %v674 = vsel %vm669, %v654, %v658
        %v675 = vsel %vm669, %v656, %v660
        %v676 = vsel %vm669, %v666, %v654
        %v677 = vsel %vm669, %v668, %v656
        %s678 = scalar_lea.vmem %s3, 28
        %v679 = vld [vmem:[%s678] sm:$0xf]
        %v681 = vlaneseq
        %v682 = vshrl.u32 %v681, 7
        %v683 = vsub.s32 0, %v682
        %v684 = vrot.slane %v679, %v683
        %v685 = vlaneseq
        %v686 = vshrl.u32 %v685, 7
        %v687 = vsub.s32 1, %v686
        %v688 = vrot.slane %v679, %v687
        %v689 = vlaneseq
        %v690 = vshrl.u32 %v689, 7
        %v691 = vsub.s32 2, %v690
        %v692 = vrot.slane %v679, %v691
        %v693 = vlaneseq
        %v694 = vshrl.u32 %v693, 7
        %v695 = vsub.s32 3, %v694
        %v696 = vrot.slane %v679, %v695
        %v701 = vmul.f32 %v674, %v684
        %v702 = vmul.f32 %v672, %v688
        %v703 = vmul.f32 %v670, %v692
        %v704 = vmul.f32 %v676, %v696
        %v705 = vmul.f32 %v675, %v684
        %v706 = vmul.f32 %v673, %v688
        %v707 = vmul.f32 %v671, %v692
        %v708 = vmul.f32 %v677, %v696
        %709 = vst [vmem:[#allocation3 + $0x1c0] sm:$0xff] %v701
        %710 = vst [vmem:[#allocation3 + $0x1c8] sm:$0xff] %v702
        %711 = vst [vmem:[#allocation3 + $0x1d0] sm:$0xff] %v703
        %712 = vst [vmem:[#allocation3 + $0x1d8] sm:$0xff] %v704
        %713 = vst [vmem:[#allocation3 + $0x1e0] sm:$0xff] %v705
        %714 = vst [vmem:[#allocation3 + $0x1e8] sm:$0xff] %v706
        %715 = vst [vmem:[#allocation3 + $0x1f0] sm:$0xff] %v707
        %716 = vst [vmem:[#allocation3 + $0x1f8] sm:$0xff] %v708
        %717 = vrot.lane.b32.xlu0 %v252, 111
        %v718 = vpop.permute.xlu0 %717
        %719 = vrot.lane.b32.xlu0 %v256, 111
        %v720 = vpop.permute.xlu0 %719
        %721 = vrot.lane.b32.xlu0 %v253, 111
        %v722 = vpop.permute.xlu0 %721
        %723 = vrot.lane.b32.xlu0 %v257, 111
        %v724 = vpop.permute.xlu0 %723
        %725 = vrot.lane.b32.xlu0 %v254, 111
        %v726 = vpop.permute.xlu0 %725
        %727 = vrot.lane.b32.xlu0 %v258, 111
        %v728 = vpop.permute.xlu0 %727
        %729 = vrot.lane.b32.xlu0 %v255, 111
        %v730 = vpop.permute.xlu0 %729
        %731 = vrot.lane.b32.xlu0 %v259, 111
        %v732 = vpop.permute.xlu0 %731
        %vm733 = vcmp.lt.s32.totalorder %v277, 111
        %v734 = vsel %vm733, %v726, %v730
        %v735 = vsel %vm733, %v728, %v732
        %v736 = vsel %vm733, %v722, %v726
        %v737 = vsel %vm733, %v724, %v728
        %v738 = vsel %vm733, %v718, %v722
        %v739 = vsel %vm733, %v720, %v724
        %v740 = vsel %vm733, %v730, %v718
        %v741 = vsel %vm733, %v732, %v720
        %s742 = scalar_lea.vmem %s3, 32
        %v743 = vld [vmem:[%s742] sm:$0xf]
        %v745 = vlaneseq
        %v746 = vshrl.u32 %v745, 7
        %v747 = vsub.s32 0, %v746
        %v748 = vrot.slane %v743, %v747
        %v749 = vlaneseq
        %v750 = vshrl.u32 %v749, 7
        %v751 = vsub.s32 1, %v750
        %v752 = vrot.slane %v743, %v751
        %v753 = vlaneseq
        %v754 = vshrl.u32 %v753, 7
        %v755 = vsub.s32 2, %v754
        %v756 = vrot.slane %v743, %v755
        %v757 = vlaneseq
        %v758 = vshrl.u32 %v757, 7
        %v759 = vsub.s32 3, %v758
        %v760 = vrot.slane %v743, %v759
        %v765 = vmul.f32 %v738, %v748
        %v766 = vmul.f32 %v736, %v752
        %v767 = vmul.f32 %v734, %v756
        %v768 = vmul.f32 %v740, %v760
        %v769 = vmul.f32 %v739, %v748
        %v770 = vmul.f32 %v737, %v752
        %v771 = vmul.f32 %v735, %v756
        %v772 = vmul.f32 %v741, %v760
        %773 = vst [vmem:[#allocation3 + $0x200] sm:$0xff] %v765
        %774 = vst [vmem:[#allocation3 + $0x208] sm:$0xff] %v766
        %775 = vst [vmem:[#allocation3 + $0x210] sm:$0xff] %v767
        %776 = vst [vmem:[#allocation3 + $0x218] sm:$0xff] %v768
        %777 = vst [vmem:[#allocation3 + $0x220] sm:$0xff] %v769
        %778 = vst [vmem:[#allocation3 + $0x228] sm:$0xff] %v770
        %779 = vst [vmem:[#allocation3 + $0x230] sm:$0xff] %v771
        %780 = vst [vmem:[#allocation3 + $0x238] sm:$0xff] %v772
        %v781 = vld [vmem:[%s1] sm:$0xff]
        %v782 = vld [vmem:[%s1 + $0x8] sm:$0xff]
        %v783 = vld [vmem:[%s1 + $0x10] sm:$0xff]
        %v784 = vld [vmem:[%s1 + $0x18] sm:$0xff]
        %v785 = vld [vmem:[%s1 + $0x20] sm:$0xff]
        %v786 = vld [vmem:[%s1 + $0x28] sm:$0xff]
        %v787 = vld [vmem:[%s1 + $0x30] sm:$0xff]
        %v788 = vld [vmem:[%s1 + $0x38] sm:$0xff]
        %v789 = vld [vmem:[#allocation3] sm:$0xff]
        %v790 = vld [vmem:[#allocation3 + $0x8] sm:$0xff]
        %v791 = vld [vmem:[#allocation3 + $0x10] sm:$0xff]
        %v792 = vld [vmem:[#allocation3 + $0x18] sm:$0xff]
        %v793 = vld [vmem:[#allocation3 + $0x20] sm:$0xff]
        %v794 = vld [vmem:[#allocation3 + $0x28] sm:$0xff]
        %v795 = vld [vmem:[#allocation3 + $0x30] sm:$0xff]
        %v796 = vld [vmem:[#allocation3 + $0x38] sm:$0xff]
        %v797 = vld [vmem:[#allocation3 + $0x40] sm:$0xff]
        %v798 = vld [vmem:[#allocation3 + $0x48] sm:$0xff]
        %v799 = vld [vmem:[#allocation3 + $0x50] sm:$0xff]
        %v800 = vld [vmem:[#allocation3 + $0x58] sm:$0xff]
        %v801 = vld [vmem:[#allocation3 + $0x60] sm:$0xff]
        %v802 = vld [vmem:[#allocation3 + $0x68] sm:$0xff]
        %v803 = vld [vmem:[#allocation3 + $0x70] sm:$0xff]
        %v804 = vld [vmem:[#allocation3 + $0x78] sm:$0xff]
        %v805 = vld [vmem:[#allocation3 + $0x80] sm:$0xff]
        %v806 = vld [vmem:[#allocation3 + $0x88] sm:$0xff]
        %v807 = vld [vmem:[#allocation3 + $0x90] sm:$0xff]
        %v808 = vld [vmem:[#allocation3 + $0x98] sm:$0xff]
        %v809 = vld [vmem:[#allocation3 + $0xa0] sm:$0xff]
        %v810 = vld [vmem:[#allocation3 + $0xa8] sm:$0xff]
        %v811 = vld [vmem:[#allocation3 + $0xb0] sm:$0xff]
        %v812 = vld [vmem:[#allocation3 + $0xb8] sm:$0xff]
        %v813 = vld [vmem:[#allocation3 + $0xc0] sm:$0xff]
        %v814 = vld [vmem:[#allocation3 + $0xc8] sm:$0xff]
        %v815 = vld [vmem:[#allocation3 + $0xd0] sm:$0xff]
        %v816 = vld [vmem:[#allocation3 + $0xd8] sm:$0xff]
        %v817 = vld [vmem:[#allocation3 + $0xe0] sm:$0xff]
        %v818 = vld [vmem:[#allocation3 + $0xe8] sm:$0xff]
        %v819 = vld [vmem:[#allocation3 + $0xf0] sm:$0xff]
        %v820 = vld [vmem:[#allocation3 + $0xf8] sm:$0xff]
        %v821 = vld [vmem:[#allocation3 + $0x100] sm:$0xff]
        %v822 = vld [vmem:[#allocation3 + $0x108] sm:$0xff]
        %v823 = vld [vmem:[#allocation3 + $0x110] sm:$0xff]
        %v824 = vld [vmem:[#allocation3 + $0x118] sm:$0xff]
        %v825 = vld [vmem:[#allocation3 + $0x120] sm:$0xff]
        %v826 = vld [vmem:[#allocation3 + $0x128] sm:$0xff]
        %v827 = vld [vmem:[#allocation3 + $0x130] sm:$0xff]
        %v828 = vld [vmem:[#allocation3 + $0x138] sm:$0xff]
        %v829 = vld [vmem:[#allocation3 + $0x140] sm:$0xff]
        %v830 = vld [vmem:[#allocation3 + $0x148] sm:$0xff]
        %v831 = vld [vmem:[#allocation3 + $0x150] sm:$0xff]
        %v832 = vld [vmem:[#allocation3 + $0x158] sm:$0xff]
        %v833 = vld [vmem:[#allocation3 + $0x160] sm:$0xff]
        %v834 = vld [vmem:[#allocation3 + $0x168] sm:$0xff]
        %v835 = vld [vmem:[#allocation3 + $0x170] sm:$0xff]
        %v836 = vld [vmem:[#allocation3 + $0x178] sm:$0xff]
        %v837 = vld [vmem:[#allocation3 + $0x180] sm:$0xff]
        %v838 = vld [vmem:[#allocation3 + $0x188] sm:$0xff]
        %v839 = vld [vmem:[#allocation3 + $0x190] sm:$0xff]
        %v840 = vld [vmem:[#allocation3 + $0x198] sm:$0xff]
        %v841 = vld [vmem:[#allocation3 + $0x1a0] sm:$0xff]
        %v842 = vld [vmem:[#allocation3 + $0x1a8] sm:$0xff]
        %v843 = vld [vmem:[#allocation3 + $0x1b0] sm:$0xff]
        %v844 = vld [vmem:[#allocation3 + $0x1b8] sm:$0xff]
        %v845 = vld [vmem:[#allocation3 + $0x1c0] sm:$0xff]
        %v846 = vld [vmem:[#allocation3 + $0x1c8] sm:$0xff]
        %v847 = vld [vmem:[#allocation3 + $0x1d0] sm:$0xff]
        %v848 = vld [vmem:[#allocation3 + $0x1d8] sm:$0xff]
        %v849 = vld [vmem:[#allocation3 + $0x1e0] sm:$0xff]
        %v850 = vld [vmem:[#allocation3 + $0x1e8] sm:$0xff]
        %v851 = vld [vmem:[#allocation3 + $0x1f0] sm:$0xff]
        %v852 = vld [vmem:[#allocation3 + $0x1f8] sm:$0xff]
        %v853 = vld [vmem:[#allocation3 + $0x200] sm:$0xff]
        %v854 = vld [vmem:[#allocation3 + $0x208] sm:$0xff]
        %v855 = vld [vmem:[#allocation3 + $0x210] sm:$0xff]
        %v856 = vld [vmem:[#allocation3 + $0x218] sm:$0xff]
        %v857 = vld [vmem:[#allocation3 + $0x220] sm:$0xff]
        %v858 = vld [vmem:[#allocation3 + $0x228] sm:$0xff]
        %v859 = vld [vmem:[#allocation3 + $0x230] sm:$0xff]
        %v860 = vld [vmem:[#allocation3 + $0x238] sm:$0xff]
        %v861 = vld [vmem:[%s2] sm:$0xff]
        %v862 = vld [vmem:[%s2 + $0x8] sm:$0xff]
        %v863 = vld [vmem:[%s2 + $0x10] sm:$0xff]
        %v864 = vld [vmem:[%s2 + $0x18] sm:$0xff]
        %866 = vset.pattern.permute.xlu0 0
        %867 = vperm.xlu0 %866, %v861
        %v868 = vpop.permute.xlu0 %867
        %871 = vset.pattern.permute.xlu0 0
        %872 = vperm.xlu0 %871, %v862
        %v873 = vpop.permute.xlu0 %872
        %876 = vset.pattern.permute.xlu0 0
        %877 = vperm.xlu0 %876, %v863
        %v878 = vpop.permute.xlu0 %877
        %881 = vset.pattern.permute.xlu0 0
        %882 = vperm.xlu0 %881, %v864
        %v883 = vpop.permute.xlu0 %882
        %vm885 = vcmask 130048
        %v887 = vsel %vm885, %v782, 0
        %v890 = vsel %vm885, %v784, 0
        %v893 = vsel %vm885, %v786, 0
        %v896 = vsel %vm885, %v788, 0
        %898 = vmatprep.subr.mxu0 %v790
        %899 = vmatpush1.msra.mxu0 %v789
        %900 = vmatprep.subr.mxu0 %v794
        %901 = vmatpush1.msra.mxu0 %v793
        %902 = vmatprep.subr.mxu0 %v798
        %903 = vmatpush1.msra.mxu0 %v797
        %904 = vmatprep.subr.mxu0 %v802
        %905 = vmatpush1.msra.mxu0 %v801
        %906 = vmatprep.subr.mxu0 %v806
        %907 = vmatpush1.msra.mxu0 %v805
        %908 = vmatprep.subr.mxu0 %v810
        %909 = vmatpush1.msra.mxu0 %v809
        %910 = vmatprep.subr.mxu0 %v814
        %911 = vmatpush1.msra.mxu0 %v813
        %912 = vmatprep.subr.mxu0 %v818
        %913 = vmatpush1.msra.mxu0 %v817
        %914 = vmatprep.subr.mxu0 %v822
        %915 = vmatpush1.msra.mxu0 %v821
        %916 = vmatprep.subr.mxu0 %v826
        %917 = vmatpush1.msra.mxu0 %v825
        %918 = vmatprep.subr.mxu0 %v830
        %919 = vmatpush1.msra.mxu0 %v829
        %920 = vmatprep.subr.mxu0 %v834
        %921 = vmatpush1.msra.mxu0 %v833
        %922 = vmatprep.subr.mxu0 %v838
        %923 = vmatpush1.msra.mxu0 %v837
        %924 = vmatprep.subr.mxu0 %v842
        %925 = vmatpush1.msra.mxu0 %v841
        %926 = vmatprep.subr.mxu0 %v846
        %927 = vmatpush1.msra.mxu0 %v845
        %928 = vmatprep.subr.mxu0 %v850
        %929 = vmatpush1.msra.mxu0 %v849
        %930 = vmatprep.subr.mxu0 %v854
        %931 = vmatpush1.msra.mxu0 %v853
        %932 = vmatprep.subr.mxu0 %v858
        %933 = vmatpush1.msra.mxu0 %v857
        %934 = vmatprep.subr.mxu0 0.0
        %935 = vmatpush1.msra.mxu0 0.0
        %936 = vmatprep.subr.mxu0 0.0
        %937 = vmatpush1.msra.mxu0 0.0
        %938 = vmatprep.subr.mxu0 0.0
        %939 = vmatpush1.msra.mxu0 0.0
        %940 = vmatprep.subr.mxu0 0.0
        %941 = vmatpush1.msra.mxu0 0.0
        %942 = vmatprep.subr.mxu0 0.0
        %943 = vmatpush1.msra.mxu0 0.0
        %944 = vmatprep.subr.mxu0 0.0
        %945 = vmatpush1.msra.mxu0 0.0
        %946 = vmatprep.subr.mxu0 0.0
        %947 = vmatpush1.msra.mxu0 0.0
        %948 = vmatprep.subr.mxu0 0.0
        %949 = vmatpush1.msra.mxu0 0.0
        %950 = vmatprep.subr.mxu0 0.0
        %951 = vmatpush1.msra.mxu0 0.0
        %952 = vmatprep.subr.mxu0 0.0
        %953 = vmatpush1.msra.mxu0 0.0
        %954 = vmatprep.subr.mxu0 0.0
        %955 = vmatpush1.msra.mxu0 0.0
        %956 = vmatprep.subr.mxu0 0.0
        %957 = vmatpush1.msra.mxu0 0.0
        %958 = vmatprep.subr.mxu0 0.0
        %959 = vmatpush1.msra.mxu0 0.0
        %960 = vmatprep.subr.mxu0 0.0
        %961 = vmatpush1.msra.mxu0 0.0
        %962 = vmatprep.mubr.f32.mxu0 %v887
        %963 = vmatmul.mubr.f32.gmra.mrb[0].mxu0 %v781
        %v964 = vpop.f32.mrb[0].mxu0
        %v965 = vadd.f32 %v868, %v964
        %v966 = vpop.f32.mrb[0].mxu0
        %v967 = vadd.f32 %v868, %v966
        %968 = vmatprep.mubr.f32.mxu0 %v890
        %969 = vmatmul.mubr.f32.gmra.mrb[0].mxu0 %v783
        %v970 = vpop.f32.mrb[0].mxu0
        %v971 = vadd.f32 %v873, %v970
        %v972 = vpop.f32.mrb[0].mxu0
        %v973 = vadd.f32 %v873, %v972
        %974 = vmatprep.mubr.f32.mxu0 %v893
        %975 = vmatmul.mubr.f32.gmra.mrb[0].mxu0 %v785
        %v976 = vpop.f32.mrb[0].mxu0
        %v977 = vadd.f32 %v878, %v976
        %v978 = vpop.f32.mrb[0].mxu0
        %v979 = vadd.f32 %v878, %v978
        %980 = vmatprep.mubr.f32.mxu0 %v896
        %981 = vmatmul.mubr.f32.gmra.mrb[0].mxu0 %v787
        %v982 = vpop.f32.mrb[0].mxu0
        %v983 = vadd.f32 %v883, %v982
        %v984 = vpop.f32.mrb[0].mxu0
        %v985 = vadd.f32 %v883, %v984
        %986 = vdwg.mxu0
        %987 = vmatprep.subr.mxu0 %v792
        %988 = vmatpush1.msra.mxu0 %v791
        %989 = vmatprep.subr.mxu0 %v796
        %990 = vmatpush1.msra.mxu0 %v795
        %991 = vmatprep.subr.mxu0 %v800
        %992 = vmatpush1.msra.mxu0 %v799
        %993 = vmatprep.subr.mxu0 %v804
        %994 = vmatpush1.msra.mxu0 %v803
        %995 = vmatprep.subr.mxu0 %v808
        %996 = vmatpush1.msra.mxu0 %v807
        %997 = vmatprep.subr.mxu0 %v812
        %998 = vmatpush1.msra.mxu0 %v811
        %999 = vmatprep.subr.mxu0 %v816
        %1000 = vmatpush1.msra.mxu0 %v815
        %1001 = vmatprep.subr.mxu0 %v820
        %1002 = vmatpush1.msra.mxu0 %v819
        %1003 = vmatprep.subr.mxu0 %v824
        %1004 = vmatpush1.msra.mxu0 %v823
        %1005 = vmatprep.subr.mxu0 %v828
        %1006 = vmatpush1.msra.mxu0 %v827
        %1007 = vmatprep.subr.mxu0 %v832
        %1008 = vmatpush1.msra.mxu0 %v831
        %1009 = vmatprep.subr.mxu0 %v836
        %1010 = vmatpush1.msra.mxu0 %v835
        %1011 = vmatprep.subr.mxu0 %v840
        %1012 = vmatpush1.msra.mxu0 %v839
        %1013 = vmatprep.subr.mxu0 %v844
        %1014 = vmatpush1.msra.mxu0 %v843
        %1015 = vmatprep.subr.mxu0 %v848
        %1016 = vmatpush1.msra.mxu0 %v847
        %1017 = vmatprep.subr.mxu0 %v852
        %1018 = vmatpush1.msra.mxu0 %v851
        %1019 = vmatprep.subr.mxu0 %v856
        %1020 = vmatpush1.msra.mxu0 %v855
        %1021 = vmatprep.subr.mxu0 %v860
        %1022 = vmatpush1.msra.mxu0 %v859
        %1023 = vmatprep.subr.mxu0 0.0
        %1024 = vmatpush1.msra.mxu0 0.0
        %1025 = vmatprep.subr.mxu0 0.0
        %1026 = vmatpush1.msra.mxu0 0.0
        %1027 = vmatprep.subr.mxu0 0.0
        %1028 = vmatpush1.msra.mxu0 0.0
        %1029 = vmatprep.subr.mxu0 0.0
        %1030 = vmatpush1.msra.mxu0 0.0
        %1031 = vmatprep.subr.mxu0 0.0
        %1032 = vmatpush1.msra.mxu0 0.0
        %1033 = vmatprep.subr.mxu0 0.0
        %1034 = vmatpush1.msra.mxu0 0.0
        %1035 = vmatprep.subr.mxu0 0.0
        %1036 = vmatpush1.msra.mxu0 0.0
        %1037 = vmatprep.subr.mxu0 0.0
        %1038 = vmatpush1.msra.mxu0 0.0
        %1039 = vmatprep.subr.mxu0 0.0
        %1040 = vmatpush1.msra.mxu0 0.0
        %1041 = vmatprep.subr.mxu0 0.0
        %1042 = vmatpush1.msra.mxu0 0.0
        %1043 = vmatprep.subr.mxu0 0.0
        %1044 = vmatpush1.msra.mxu0 0.0
        %1045 = vmatprep.subr.mxu0 0.0
        %1046 = vmatpush1.msra.mxu0 0.0
        %1047 = vmatprep.subr.mxu0 0.0
        %1048 = vmatpush1.msra.mxu0 0.0
        %1049 = vmatprep.subr.mxu0 0.0
        %1050 = vmatpush1.msra.mxu0 0.0
        %1051 = vmatprep.mubr.f32.mxu0 %v887
        %1052 = vmatmul.mubr.f32.gmra.mrb[0].mxu0 %v781
        %v1053 = vpop.f32.mrb[0].mxu0
        %v1054 = vadd.f32 %v868, %v1053
        %v1055 = vpop.f32.mrb[0].mxu0
        %v1056 = vadd.f32 %v868, %v1055
        %1057 = vmatprep.mubr.f32.mxu0 %v890
        %1058 = vmatmul.mubr.f32.gmra.mrb[0].mxu0 %v783
        %v1059 = vpop.f32.mrb[0].mxu0
        %v1060 = vadd.f32 %v873, %v1059
        %v1061 = vpop.f32.mrb[0].mxu0
        %v1062 = vadd.f32 %v873, %v1061
        %1063 = vmatprep.mubr.f32.mxu0 %v893
        %1064 = vmatmul.mubr.f32.gmra.mrb[0].mxu0 %v785
        %v1065 = vpop.f32.mrb[0].mxu0
        %v1066 = vadd.f32 %v878, %v1065
        %v1067 = vpop.f32.mrb[0].mxu0
        %v1068 = vadd.f32 %v878, %v1067
        %1069 = vmatprep.mubr.f32.mxu0 %v896
        %1070 = vmatmul.mubr.f32.gmra.mrb[0].mxu0 %v787
        %v1071 = vpop.f32.mrb[0].mxu0
        %v1072 = vadd.f32 %v883, %v1071
        %v1073 = vpop.f32.mrb[0].mxu0
        %v1074 = vadd.f32 %v883, %v1073
        %1075 = vdwg.mxu0
        %v1076 = vxor.u32 %v965, 2147483648
        %v1077 = vxor.u32 %v967, 2147483648
        %v1078 = vxor.u32 %v1054, 2147483648
        %v1079 = vxor.u32 %v1056, 2147483648
        %v1080 = vmul.f32 %v1076, 1.442695
        %v1081 = vpow.pop %v1080
        %v1082 = vmul.f32 %v1077, 1.442695
        %v1083 = vpow.pop %v1082
        %v1084 = vmul.f32 %v1078, 1.442695
        %v1085 = vpow.pop %v1084
        %v1086 = vmul.f32 %v1079, 1.442695
        %v1087 = vpow.pop %v1086
        %v1088 = vadd.f32 %v1081, 1.0
        %v1089 = vadd.f32 %v1083, 1.0
        %v1090 = vadd.f32 %v1085, 1.0
        %v1091 = vadd.f32 %v1087, 1.0
        %v1092 = vrcp.pop %v1088
        %v1093 = vmul.f32 1.0, %v1092
        %v1094 = vrcp.pop %v1089
        %v1095 = vmul.f32 1.0, %v1094
        %v1096 = vrcp.pop %v1090
        %v1097 = vmul.f32 1.0, %v1096
        %v1098 = vrcp.pop %v1091
        %v1099 = vmul.f32 1.0, %v1098
        %v1100 = vxor.u32 %v971, 2147483648
        %v1101 = vxor.u32 %v973, 2147483648
        %v1102 = vxor.u32 %v1060, 2147483648
        %v1103 = vxor.u32 %v1062, 2147483648
        %v1104 = vmul.f32 %v1100, 1.442695
        %v1105 = vpow.pop %v1104
        %v1106 = vmul.f32 %v1101, 1.442695
        %v1107 = vpow.pop %v1106
        %v1108 = vmul.f32 %v1102, 1.442695
        %v1109 = vpow.pop %v1108
        %v1110 = vmul.f32 %v1103, 1.442695
        %v1111 = vpow.pop %v1110
        %v1112 = vadd.f32 %v1105, 1.0
        %v1113 = vadd.f32 %v1107, 1.0
        %v1114 = vadd.f32 %v1109, 1.0
        %v1115 = vadd.f32 %v1111, 1.0
        %v1116 = vrcp.pop %v1112
        %v1117 = vmul.f32 1.0, %v1116
        %v1118 = vrcp.pop %v1113
        %v1119 = vmul.f32 1.0, %v1118
        %v1120 = vrcp.pop %v1114
        %v1121 = vmul.f32 1.0, %v1120
        %v1122 = vrcp.pop %v1115
        %v1123 = vmul.f32 1.0, %v1122
        %v1124 = vxor.u32 %v977, 2147483648
        %v1125 = vxor.u32 %v979, 2147483648
        %v1126 = vxor.u32 %v1066, 2147483648
        %v1127 = vxor.u32 %v1068, 2147483648
        %v1128 = vmul.f32 %v1124, 1.442695
        %v1129 = vpow.pop %v1128
        %v1130 = vmul.f32 %v1125, 1.442695
        %v1131 = vpow.pop %v1130
        %v1132 = vmul.f32 %v1126, 1.442695
        %v1133 = vpow.pop %v1132
        %v1134 = vmul.f32 %v1127, 1.442695
        %v1135 = vpow.pop %v1134
        %v1136 = vadd.f32 %v1129, 1.0
        %v1137 = vadd.f32 %v1131, 1.0
        %v1138 = vadd.f32 %v1133, 1.0
        %v1139 = vadd.f32 %v1135, 1.0
        %v1140 = vrcp.pop %v1136
        %v1141 = vmul.f32 1.0, %v1140
        %v1142 = vrcp.pop %v1137
        %v1143 = vmul.f32 1.0, %v1142
        %v1144 = vrcp.pop %v1138
        %v1145 = vmul.f32 1.0, %v1144
        %v1146 = vrcp.pop %v1139
        %v1147 = vmul.f32 1.0, %v1146
        %v1148 = vtanh.pop %v983
        %v1149 = vtanh.pop %v985
        %v1150 = vtanh.pop %v1072
        %v1151 = vtanh.pop %v1074
        %v1152 = vld [vmem:[#allocation5] sm:$0xff]
        %v1153 = vld [vmem:[#allocation5 + $0x8] sm:$0xff]
        %v1154 = vld [vmem:[#allocation5 + $0x10] sm:$0xff]
        %v1155 = vld [vmem:[#allocation5 + $0x18] sm:$0xff]
        %v1156 = vmul.f32 %v1117, %v1152
        %v1157 = vmul.f32 %v1119, %v1153
        %v1158 = vmul.f32 %v1121, %v1154
        %v1159 = vmul.f32 %v1123, %v1155
        %v1160 = vmul.f32 %v1093, %v1148
        %v1161 = vmul.f32 %v1095, %v1149
        %v1162 = vmul.f32 %v1097, %v1150
        %v1163 = vmul.f32 %v1099, %v1151
        %v1164 = vadd.f32 %v1156, %v1160
        %v1165 = vadd.f32 %v1157, %v1161
        %v1166 = vadd.f32 %v1158, %v1162
        %v1167 = vadd.f32 %v1159, %v1163
        %v1168 = vtanh.pop %v1164
        %v1169 = vtanh.pop %v1165
        %v1170 = vtanh.pop %v1166
        %v1171 = vtanh.pop %v1167
        %v1172 = vmul.f32 %v1141, %v1168
        %v1173 = vmul.f32 %v1143, %v1169
        %v1174 = vmul.f32 %v1145, %v1170
        %v1175 = vmul.f32 %v1147, %v1171
        %1176 = vst [vmem:[#allocation5] sm:$0xff] %v1164
        %1177 = vst [vmem:[#allocation5 + $0x8] sm:$0xff] %v1165
        %1178 = vst [vmem:[#allocation5 + $0x10] sm:$0xff] %v1166
        %1179 = vst [vmem:[#allocation5 + $0x18] sm:$0xff] %v1167
        %1180 = vst [vmem:[#allocation4] sm:$0xff] %v1172
        %1181 = vst [vmem:[#allocation4 + $0x8] sm:$0xff] %v1173
        %1182 = vst [vmem:[#allocation4 + $0x10] sm:$0xff] %v1174
        %1183 = vst [vmem:[#allocation4 + $0x18] sm:$0xff] %v1175
        %1184 = vst [vmem:[%s223] sm:$0xff] %v1172
        %1185 = vst [vmem:[%s223 + $0x8] sm:$0xff] %v1173
        %1186 = vst [vmem:[%s223 + $0x10] sm:$0xff] %v1174
        %1187 = vst [vmem:[%s223 + $0x18] sm:$0xff] %v1175
        %p1188 = scmp.lt.s32.totalorder %s18, 7
        %s1189 = scalar_select %p1188, %s18, 7
        %s1190 = smul.addr %s1189, 4
        %s1191 = smul.addr %s1190, 8
        %s1192 = scalar_lea.vmem %s4, %s1191
        // Predicated region
        $region41: #{_lambda_.2} parent=35 // pred_check
          %p1193 = pneg %p125
        $region42: #{_lambda_.2} parent=35 // pred_check_branch
          %1195 = sbr.rel (%p1193) target = $region44
        $region43: #{_lambda_.2} parent=35 // pred_region
          _
        $region44: #{_lambda_.2} parent=35 // pred_fallthru
          _
        // Predicated region
        $region45: #{_lambda_.2} parent=35 // pred_check
          %p1196 = pneg %p146
        $region46: #{_lambda_.2} parent=35 // pred_check_branch
          %1198 = sbr.rel (%p1196) target = $region48
        $region47: #{_lambda_.2} parent=35 // pred_region
          %s1200 = ssub.s32 512, 512
          %1201 = vsyncadd [#allocation6], %s1200
          %s1203 = sshll.u32 [#allocation5], 4
          %s1204 = int_to_ptr.vmem [resolvable:$true] %s1203
          %1206 = dma.vmem_to_hbm [thread:$0]  %s1204, 512, %s5, [#allocation6]
        $region48: #{_lambda_.2} parent=35 // pred_fallthru
          _
        // Predicated region
        $region49: #{_lambda_.2} parent=35 // pred_check
          %p1207 = pneg %p146
        $region50: #{_lambda_.2} parent=35 // pred_check_branch
          %1209 = sbr.rel (%p1207) target = $region52
        $region51: #{_lambda_.2} parent=35 // pred_region
          %1210 = dma.done [#allocation6], 512
        $region52: #{_lambda_.2} parent=35 // pred_fallthru
          _
      $region36: #{_lambda_.2} parent=5 // pred_fallthru
        _
      %p1211 = scmp.le.s32.totalorder 2, %s13
      // Predicated region
      $region53: #{_lambda_.2} parent=5 // pred_check
        %p1212 = pneg %p1211
      $region54: #{_lambda_.2} parent=5 // pred_check_branch
        %1214 = sbr.rel (%p1212) target = $region56
      $region55: #{_lambda_.2} parent=5 // pred_region
        %s1215 = ssub.s32 %s13, 2
        // Predicated region
        $region57: #{_lambda_.2} parent=55 // pred_check
          %p1216 = pneg %p131
        $region58: #{_lambda_.2} parent=55 // pred_check_branch
          %1218 = sbr.rel (%p1216) target = $region60
        $region59: #{_lambda_.2} parent=55 // pred_region
          %p1219 = scmp.lt.s32.totalorder %s19, 7
          %s1220 = scalar_select %p1219, %s19, 7
          %s1221 = smul.addr %s1220, 4
          %s1222 = smul.addr %s1221, 8
          %s1223 = scalar_lea.vmem %s4, %s1222
        $region60: #{_lambda_.2} parent=55 // pred_fallthru
          _
      $region56: #{_lambda_.2} parent=5 // pred_fallthru
        _
    $region6: #{_lambda_.2} parent=1 // loop_footer
      %s17 = sadd.s32 1, %s13
    $region7: #{_lambda_.2} parent=1 // loop_footer_branch
      %12 = sbr.rel target = $region3
    $region8: #{_lambda_.2} parent=1 // loop_exit
      _
    %1224 = vsyncpa [#allocation6], 1
    %s1225 = scalar_lea.sflag [#allocation6], 1
    %1226 = vsyncpa %s1225, 1

// kernel: squeeze.1
$region0: #{squeeze.1}
  %s0 = inlined_call_operand.vmem [shape: f32[1,8,512], index: 0, kind: input, shape index: {}]
  %s1 = inlined_call_operand.vmem [shape: f32[8,2,16,16], index: 1, kind: output, shape index: {}]
  %v2 = vld [vmem:[%s0] sm:$0xff]
  %vm3 = vcmask 130048
  %4 = vst.msk [vmem:[%s1] sm:$0x1] %vm3, %v2
  %s5 = scalar_lea.vmem %s1, 31
  %6 = vst.msk [vmem:[%s5] sm:$0x2] %vm3, %v2
  %s7 = scalar_lea.vmem %s1, 62
  %8 = vst.msk [vmem:[%s7] sm:$0x4] %vm3, %v2
  %s9 = scalar_lea.vmem %s1, 93
  %10 = vst.msk [vmem:[%s9] sm:$0x8] %vm3, %v2
  %s11 = scalar_lea.vmem %s1, 124
  %12 = vst.msk [vmem:[%s11] sm:$0x10] %vm3, %v2
  %s13 = scalar_lea.vmem %s1, 155
  %14 = vst.msk [vmem:[%s13] sm:$0x20] %vm3, %v2
  %s15 = scalar_lea.vmem %s1, 186
  %16 = vst.msk [vmem:[%s15] sm:$0x40] %vm3, %v2
  %s17 = scalar_lea.vmem %s1, 217
  %18 = vst.msk [vmem:[%s17] sm:$0x80] %vm3, %v2
  %s19 = scalar_lea.vmem %s0, 8
  %v20 = vld [vmem:[%s19] sm:$0xff]
  %vm21 = vcmask 130048
  %s22 = scalar_lea.vmem %s1, 8
  %23 = vst.msk [vmem:[%s22] sm:$0x1] %vm21, %v20
  %s24 = scalar_lea.vmem %s1, 39
  %25 = vst.msk [vmem:[%s24] sm:$0x2] %vm21, %v20
  %s26 = scalar_lea.vmem %s1, 70
  %27 = vst.msk [vmem:[%s26] sm:$0x4] %vm21, %v20
  %s28 = scalar_lea.vmem %s1, 101
  %29 = vst.msk [vmem:[%s28] sm:$0x8] %vm21, %v20
  %s30 = scalar_lea.vmem %s1, 132
  %31 = vst.msk [vmem:[%s30] sm:$0x10] %vm21, %v20
  %s32 = scalar_lea.vmem %s1, 163
  %33 = vst.msk [vmem:[%s32] sm:$0x20] %vm21, %v20
  %s34 = scalar_lea.vmem %s1, 194
  %35 = vst.msk [vmem:[%s34] sm:$0x40] %vm21, %v20
  %s36 = scalar_lea.vmem %s1, 225
  %37 = vst.msk [vmem:[%s36] sm:$0x80] %vm21, %v20
  %s38 = scalar_lea.vmem %s0, 16
  %v39 = vld [vmem:[%s38] sm:$0xff]
  %vm40 = vcmask 130048
  %s41 = scalar_lea.vmem %s1, 16
  %42 = vst.msk [vmem:[%s41] sm:$0x1] %vm40, %v39
  %s43 = scalar_lea.vmem %s1, 47
  %44 = vst.msk [vmem:[%s43] sm:$0x2] %vm40, %v39
  %s45 = scalar_lea.vmem %s1, 78
  %46 = vst.msk [vmem:[%s45] sm:$0x4] %vm40, %v39
  %s47 = scalar_lea.vmem %s1, 109
  %48 = vst.msk [vmem:[%s47] sm:$0x8] %vm40, %v39
  %s49 = scalar_lea.vmem %s1, 140
  %50 = vst.msk [vmem:[%s49] sm:$0x10] %vm40, %v39
  %s51 = scalar_lea.vmem %s1, 171
  %52 = vst.msk [vmem:[%s51] sm:$0x20] %vm40, %v39
  %s53 = scalar_lea.vmem %s1, 202
  %54 = vst.msk [vmem:[%s53] sm:$0x40] %vm40, %v39
  %s55 = scalar_lea.vmem %s1, 233
  %56 = vst.msk [vmem:[%s55] sm:$0x80] %vm40, %v39
  %s57 = scalar_lea.vmem %s0, 24
  %v58 = vld [vmem:[%s57] sm:$0xff]
  %vm59 = vcmask 130048
  %s60 = scalar_lea.vmem %s1, 24
  %61 = vst.msk [vmem:[%s60] sm:$0x1] %vm59, %v58
  %s62 = scalar_lea.vmem %s1, 55
  %63 = vst.msk [vmem:[%s62] sm:$0x2] %vm59, %v58
  %s64 = scalar_lea.vmem %s1, 86
  %65 = vst.msk [vmem:[%s64] sm:$0x4] %vm59, %v58
  %s66 = scalar_lea.vmem %s1, 117
  %67 = vst.msk [vmem:[%s66] sm:$0x8] %vm59, %v58
  %s68 = scalar_lea.vmem %s1, 148
  %69 = vst.msk [vmem:[%s68] sm:$0x10] %vm59, %v58
  %s70 = scalar_lea.vmem %s1, 179
  %71 = vst.msk [vmem:[%s70] sm:$0x20] %vm59, %v58
  %s72 = scalar_lea.vmem %s1, 210
  %73 = vst.msk [vmem:[%s72] sm:$0x40] %vm59, %v58
  %s74 = scalar_lea.vmem %s1, 241
  %75 = vst.msk [vmem:[%s74] sm:$0x80] %vm59, %v58
  %v76 = vld [vmem:[%s0] ss:$8 sm:$0xf]
  %s77 = scalar_lea.vmem %s0, 4294967265
  %v78 = vld [vmem:[%s77] ss:$8 sm:$0xf0]
  %vm79 = vcmask 1047556
  %v80 = vsel %vm79, %v78, %v76
  %81 = vrot.lane.b32.xlu0 %v80, 112
  %v82 = vpop.permute.xlu0 %81
  %vm83 = vcmask 130048
  %s84 = scalar_lea.vmem %s1, 1
  %85 = vst.msk [vmem:[%s84] ss:$8 sm:$0xf] %vm83, %v82
  %s86 = scalar_lea.vmem %s1, 1
  %87 = vst.msk [vmem:[%s86] ss:$8 sm:$0xf0] %vm83, %v82
  %s88 = scalar_lea.vmem %s0, 2
  %v89 = vld [vmem:[%s88] ss:$8 sm:$0xf]
  %s90 = scalar_lea.vmem %s0, 4294967267
  %v91 = vld [vmem:[%s90] ss:$8 sm:$0xf0]
  %vm92 = vcmask 1047556
  %v93 = vsel %vm92, %v91, %v89
  %94 = vrot.lane.b32.xlu0 %v93, 112
  %v95 = vpop.permute.xlu0 %94
  %vm96 = vcmask 130048
  %s97 = scalar_lea.vmem %s1, 65
  %98 = vst.msk [vmem:[%s97] ss:$8 sm:$0xf] %vm96, %v95
  %s99 = scalar_lea.vmem %s1, 65
  %100 = vst.msk [vmem:[%s99] ss:$8 sm:$0xf0] %vm96, %v95
  %s101 = scalar_lea.vmem %s0, 4
  %v102 = vld [vmem:[%s101] ss:$8 sm:$0xf]
  %s103 = scalar_lea.vmem %s0, 4294967269
  %v104 = vld [vmem:[%s103] ss:$8 sm:$0xf0]
  %vm105 = vcmask 1047556
  %v106 = vsel %vm105, %v104, %v102
  %107 = vrot.lane.b32.xlu0 %v106, 112
  %v108 = vpop.permute.xlu0 %107
  %vm109 = vcmask 130048
  %s110 = scalar_lea.vmem %s1, 129
  %111 = vst.msk [vmem:[%s110] ss:$8 sm:$0xf] %vm109, %v108
  %s112 = scalar_lea.vmem %s1, 129
  %113 = vst.msk [vmem:[%s112] ss:$8 sm:$0xf0] %vm109, %v108
  %s114 = scalar_lea.vmem %s0, 6
  %v115 = vld [vmem:[%s114] ss:$8 sm:$0xf]
  %s116 = scalar_lea.vmem %s0, 4294967271
  %v117 = vld [vmem:[%s116] ss:$8 sm:$0xf0]
  %vm118 = vcmask 1047556
  %v119 = vsel %vm118, %v117, %v115
  %120 = vrot.lane.b32.xlu0 %v119, 112
  %v121 = vpop.permute.xlu0 %120
  %vm122 = vcmask 130048
  %s123 = scalar_lea.vmem %s1, 193
  %124 = vst.msk [vmem:[%s123] ss:$8 sm:$0xf] %vm122, %v121
  %s125 = scalar_lea.vmem %s1, 193
  %126 = vst.msk [vmem:[%s125] ss:$8 sm:$0xf0] %vm122, %v121
  %v127 = vld [vmem:[%s0] ss:$8 sm:$0xf]
  %s128 = scalar_lea.vmem %s0, 4294967265
  %v129 = vld [vmem:[%s128] ss:$8 sm:$0xf0]
  %vm130 = vcmask 1047556
  %v131 = vsel %vm130, %v129, %v127
  %132 = vrot.lane.b32.xlu0 %v131, 96
  %v133 = vpop.permute.xlu0 %132
  %vm134 = vcmask 130048
  %s135 = scalar_lea.vmem %s1, 2
  %136 = vst.msk [vmem:[%s135] ss:$8 sm:$0xf] %vm134, %v133
  %s137 = scalar_lea.vmem %s1, 2
  %138 = vst.msk [vmem:[%s137] ss:$8 sm:$0xf0] %vm134, %v133
  %s139 = scalar_lea.vmem %s0, 2
  %v140 = vld [vmem:[%s139] ss:$8 sm:$0xf]
  %s141 = scalar_lea.vmem %s0, 4294967267
  %v142 = vld [vmem:[%s141] ss:$8 sm:$0xf0]
  %vm143 = vcmask 1047556
  %v144 = vsel %vm143, %v142, %v140
  %145 = vrot.lane.b32.xlu0 %v144, 96
  %v146 = vpop.permute.xlu0 %145
  %vm147 = vcmask 130048
  %s148 = scalar_lea.vmem %s1, 66
  %149 = vst.msk [vmem:[%s148] ss:$8 sm:$0xf] %vm147, %v146
  %s150 = scalar_lea.vmem %s1, 66
  %151 = vst.msk [vmem:[%s150] ss:$8 sm:$0xf0] %vm147, %v146
  %s152 = scalar_lea.vmem %s0, 4
  %v153 = vld [vmem:[%s152] ss:$8 sm:$0xf]
  %s154 = scalar_lea.vmem %s0, 4294967269
  %v155 = vld [vmem:[%s154] ss:$8 sm:$0xf0]
  %vm156 = vcmask 1047556
  %v157 = vsel %vm156, %v155, %v153
  %158 = vrot.lane.b32.xlu0 %v157, 96
  %v159 = vpop.permute.xlu0 %158
  %vm160 = vcmask 130048
  %s161 = scalar_lea.vmem %s1, 130
  %162 = vst.msk [vmem:[%s161] ss:$8 sm:$0xf] %vm160, %v159
  %s163 = scalar_lea.vmem %s1, 130
  %164 = vst.msk [vmem:[%s163] ss:$8 sm:$0xf0] %vm160, %v159
  %s165 = scalar_lea.vmem %s0, 6
  %v166 = vld [vmem:[%s165] ss:$8 sm:$0xf]
  %s167 = scalar_lea.vmem %s0, 4294967271
  %v168 = vld [vmem:[%s167] ss:$8 sm:$0xf0]
  %vm169 = vcmask 1047556
  %v170 = vsel %vm169, %v168, %v166
  %171 = vrot.lane.b32.xlu0 %v170, 96
  %v172 = vpop.permute.xlu0 %171
  %vm173 = vcmask 130048
  %s174 = scalar_lea.vmem %s1, 194
  %175 = vst.msk [vmem:[%s174] ss:$8 sm:$0xf] %vm173, %v172
  %s176 = scalar_lea.vmem %s1, 194
  %177 = vst.msk [vmem:[%s176] ss:$8 sm:$0xf0] %vm173, %v172
  %v178 = vld [vmem:[%s0] ss:$8 sm:$0xf]
  %s179 = scalar_lea.vmem %s0, 4294967265
  %v180 = vld [vmem:[%s179] ss:$8 sm:$0xf0]
  %vm181 = vcmask 1047556
  %v182 = vsel %vm181, %v180, %v178
  %183 = vrot.lane.b32.xlu0 %v182, 80
  %v184 = vpop.permute.xlu0 %183
  %vm185 = vcmask 130048
  %s186 = scalar_lea.vmem %s1, 3
  %187 = vst.msk [vmem:[%s186] ss:$8 sm:$0xf] %vm185, %v184
  %s188 = scalar_lea.vmem %s1, 3
  %189 = vst.msk [vmem:[%s188] ss:$8 sm:$0xf0] %vm185, %v184
  %s190 = scalar_lea.vmem %s0, 2
  %v191 = vld [vmem:[%s190] ss:$8 sm:$0xf]
  %s192 = scalar_lea.vmem %s0, 4294967267
  %v193 = vld [vmem:[%s192] ss:$8 sm:$0xf0]
  %vm194 = vcmask 1047556
  %v195 = vsel %vm194, %v193, %v191
  %196 = vrot.lane.b32.xlu0 %v195, 80
  %v197 = vpop.permute.xlu0 %196
  %vm198 = vcmask 130048
  %s199 = scalar_lea.vmem %s1, 67
  %200 = vst.msk [vmem:[%s199] ss:$8 sm:$0xf] %vm198, %v197
  %s201 = scalar_lea.vmem %s1, 67
  %202 = vst.msk [vmem:[%s201] ss:$8 sm:$0xf0] %vm198, %v197
  %s203 = scalar_lea.vmem %s0, 4
  %v204 = vld [vmem:[%s203] ss:$8 sm:$0xf]
  %s205 = scalar_lea.vmem %s0, 4294967269
  %v206 = vld [vmem:[%s205] ss:$8 sm:$0xf0]
  %vm207 = vcmask 1047556
  %v208 = vsel %vm207, %v206, %v204
  %209 = vrot.lane.b32.xlu0 %v208, 80
  %v210 = vpop.permute.xlu0 %209
  %vm211 = vcmask 130048
  %s212 = scalar_lea.vmem %s1, 131
  %213 = vst.msk [vmem:[%s212] ss:$8 sm:$0xf] %vm211, %v210
  %s214 = scalar_lea.vmem %s1, 131
  %215 = vst.msk [vmem:[%s214] ss:$8 sm:$0xf0] %vm211, %v210
  %s216 = scalar_lea.vmem %s0, 6
  %v217 = vld [vmem:[%s216] ss:$8 sm:$0xf]
  %s218 = scalar_lea.vmem %s0, 4294967271
  %v219 = vld [vmem:[%s218] ss:$8 sm:$0xf0]
  %vm220 = vcmask 1047556
  %v221 = vsel %vm220, %v219, %v217
  %222 = vrot.lane.b32.xlu0 %v221, 80
  %v223 = vpop.permute.xlu0 %222
  %vm224 = vcmask 130048
  %s225 = scalar_lea.vmem %s1, 195
  %226 = vst.msk [vmem:[%s225] ss:$8 sm:$0xf] %vm224, %v223
  %s227 = scalar_lea.vmem %s1, 195
  %228 = vst.msk [vmem:[%s227] ss:$8 sm:$0xf0] %vm224, %v223
  %v229 = vld [vmem:[%s0] ss:$8 sm:$0xf]
  %s230 = scalar_lea.vmem %s0, 4294967265
  %v231 = vld [vmem:[%s230] ss:$8 sm:$0xf0]
  %vm232 = vcmask 1047556
  %v233 = vsel %vm232, %v231, %v229
  %234 = vrot.lane.b32.xlu0 %v233, 64
  %v235 = vpop.permute.xlu0 %234
  %vm236 = vcmask 130048
  %s237 = scalar_lea.vmem %s1, 4
  %238 = vst.msk [vmem:[%s237] ss:$8 sm:$0xf] %vm236, %v235
  %s239 = scalar_lea.vmem %s1, 4
  %240 = vst.msk [vmem:[%s239] ss:$8 sm:$0xf0] %vm236, %v235
  %s241 = scalar_lea.vmem %s0, 2
  %v242 = vld [vmem:[%s241] ss:$8 sm:$0xf]
  %s243 = scalar_lea.vmem %s0, 4294967267
  %v244 = vld [vmem:[%s243] ss:$8 sm:$0xf0]
  %vm245 = vcmask 1047556
  %v246 = vsel %vm245, %v244, %v242
  %247 = vrot.lane.b32.xlu0 %v246, 64
  %v248 = vpop.permute.xlu0 %247
  %vm249 = vcmask 130048
  %s250 = scalar_lea.vmem %s1, 68
  %251 = vst.msk [vmem:[%s250] ss:$8 sm:$0xf] %vm249, %v248
  %s252 = scalar_lea.vmem %s1, 68
  %253 = vst.msk [vmem:[%s252] ss:$8 sm:$0xf0] %vm249, %v248
  %s254 = scalar_lea.vmem %s0, 4
  %v255 = vld [vmem:[%s254] ss:$8 sm:$0xf]
  %s256 = scalar_lea.vmem %s0, 4294967269
  %v257 = vld [vmem:[%s256] ss:$8 sm:$0xf0]
  %vm258 = vcmask 1047556
  %v259 = vsel %vm258, %v257, %v255
  %260 = vrot.lane.b32.xlu0 %v259, 64
  %v261 = vpop.permute.xlu0 %260
  %vm262 = vcmask 130048
  %s263 = scalar_lea.vmem %s1, 132
  %264 = vst.msk [vmem:[%s263] ss:$8 sm:$0xf] %vm262, %v261
  %s265 = scalar_lea.vmem %s1, 132
  %266 = vst.msk [vmem:[%s265] ss:$8 sm:$0xf0] %vm262, %v261
  %s267 = scalar_lea.vmem %s0, 6
  %v268 = vld [vmem:[%s267] ss:$8 sm:$0xf]
  %s269 = scalar_lea.vmem %s0, 4294967271
  %v270 = vld [vmem:[%s269] ss:$8 sm:$0xf0]
  %vm271 = vcmask 1047556
  %v272 = vsel %vm271, %v270, %v268
  %273 = vrot.lane.b32.xlu0 %v272, 64
  %v274 = vpop.permute.xlu0 %273
  %vm275 = vcmask 130048
  %s276 = scalar_lea.vmem %s1, 196
  %277 = vst.msk [vmem:[%s276] ss:$8 sm:$0xf] %vm275, %v274
  %s278 = scalar_lea.vmem %s1, 196
  %279 = vst.msk [vmem:[%s278] ss:$8 sm:$0xf0] %vm275, %v274
  %v280 = vld [vmem:[%s0] ss:$8 sm:$0xf]
  %s281 = scalar_lea.vmem %s0, 4294967265
  %v282 = vld [vmem:[%s281] ss:$8 sm:$0xf0]
  %vm283 = vcmask 1047556
  %v284 = vsel %vm283, %v282, %v280
  %285 = vrot.lane.b32.xlu0 %v284, 48
  %v286 = vpop.permute.xlu0 %285
  %vm287 = vcmask 130048
  %s288 = scalar_lea.vmem %s1, 5
  %289 = vst.msk [vmem:[%s288] ss:$8 sm:$0xf] %vm287, %v286
  %s290 = scalar_lea.vmem %s1, 5
  %291 = vst.msk [vmem:[%s290] ss:$8 sm:$0xf0] %vm287, %v286
  %s292 = scalar_lea.vmem %s0, 2
  %v293 = vld [vmem:[%s292] ss:$8 sm:$0xf]
  %s294 = scalar_lea.vmem %s0, 4294967267
  %v295 = vld [vmem:[%s294] ss:$8 sm:$0xf0]
  %vm296 = vcmask 1047556
  %v297 = vsel %vm296, %v295, %v293
  %298 = vrot.lane.b32.xlu0 %v297, 48
  %v299 = vpop.permute.xlu0 %298
  %vm300 = vcmask 130048
  %s301 = scalar_lea.vmem %s1, 69
  %302 = vst.msk [vmem:[%s301] ss:$8 sm:$0xf] %vm300, %v299
  %s303 = scalar_lea.vmem %s1, 69
  %304 = vst.msk [vmem:[%s303] ss:$8 sm:$0xf0] %vm300, %v299
  %s305 = scalar_lea.vmem %s0, 4
  %v306 = vld [vmem:[%s305] ss:$8 sm:$0xf]
  %s307 = scalar_lea.vmem %s0, 4294967269
  %v308 = vld [vmem:[%s307] ss:$8 sm:$0xf0]
  %vm309 = vcmask 1047556
  %v310 = vsel %vm309, %v308, %v306
  %311 = vrot.lane.b32.xlu0 %v310, 48
  %v312 = vpop.permute.xlu0 %311
  %vm313 = vcmask 130048
  %s314 = scalar_lea.vmem %s1, 133
  %315 = vst.msk [vmem:[%s314] ss:$8 sm:$0xf] %vm313, %v312
  %s316 = scalar_lea.vmem %s1, 133
  %317 = vst.msk [vmem:[%s316] ss:$8 sm:$0xf0] %vm313, %v312
  %s318 = scalar_lea.vmem %s0, 6
  %v319 = vld [vmem:[%s318] ss:$8 sm:$0xf]
  %s320 = scalar_lea.vmem %s0, 4294967271
  %v321 = vld [vmem:[%s320] ss:$8 sm:$0xf0]
  %vm322 = vcmask 1047556
  %v323 = vsel %vm322, %v321, %v319
  %324 = vrot.lane.b32.xlu0 %v323, 48
  %v325 = vpop.permute.xlu0 %324
  %vm326 = vcmask 130048
  %s327 = scalar_lea.vmem %s1, 197
  %328 = vst.msk [vmem:[%s327] ss:$8 sm:$0xf] %vm326, %v325
  %s329 = scalar_lea.vmem %s1, 197
  %330 = vst.msk [vmem:[%s329] ss:$8 sm:$0xf0] %vm326, %v325
  %v331 = vld [vmem:[%s0] ss:$8 sm:$0xf]
  %s332 = scalar_lea.vmem %s0, 4294967265
  %v333 = vld [vmem:[%s332] ss:$8 sm:$0xf0]
  %vm334 = vcmask 1047556
  %v335 = vsel %vm334, %v333, %v331
  %336 = vrot.lane.b32.xlu0 %v335, 32
  %v337 = vpop.permute.xlu0 %336
  %vm338 = vcmask 130048
  %s339 = scalar_lea.vmem %s1, 6
  %340 = vst.msk [vmem:[%s339] ss:$8 sm:$0xf] %vm338, %v337
  %s341 = scalar_lea.vmem %s1, 6
  %342 = vst.msk [vmem:[%s341] ss:$8 sm:$0xf0] %vm338, %v337
  %s343 = scalar_lea.vmem %s0, 2
  %v344 = vld [vmem:[%s343] ss:$8 sm:$0xf]
  %s345 = scalar_lea.vmem %s0, 4294967267
  %v346 = vld [vmem:[%s345] ss:$8 sm:$0xf0]
  %vm347 = vcmask 1047556
  %v348 = vsel %vm347, %v346, %v344
  %349 = vrot.lane.b32.xlu0 %v348, 32
  %v350 = vpop.permute.xlu0 %349
  %vm351 = vcmask 130048
  %s352 = scalar_lea.vmem %s1, 70
  %353 = vst.msk [vmem:[%s352] ss:$8 sm:$0xf] %vm351, %v350
  %s354 = scalar_lea.vmem %s1, 70
  %355 = vst.msk [vmem:[%s354] ss:$8 sm:$0xf0] %vm351, %v350
  %s356 = scalar_lea.vmem %s0, 4
  %v357 = vld [vmem:[%s356] ss:$8 sm:$0xf]
  %s358 = scalar_lea.vmem %s0, 4294967269
  %v359 = vld [vmem:[%s358] ss:$8 sm:$0xf0]
  %vm360 = vcmask 1047556
  %v361 = vsel %vm360, %v359, %v357
  %362 = vrot.lane.b32.xlu0 %v361, 32
  %v363 = vpop.permute.xlu0 %362
  %vm364 = vcmask 130048
  %s365 = scalar_lea.vmem %s1, 134
  %366 = vst.msk [vmem:[%s365] ss:$8 sm:$0xf] %vm364, %v363
  %s367 = scalar_lea.vmem %s1, 134
  %368 = vst.msk [vmem:[%s367] ss:$8 sm:$0xf0] %vm364, %v363
  %s369 = scalar_lea.vmem %s0, 6
  %v370 = vld [vmem:[%s369] ss:$8 sm:$0xf]
  %s371 = scalar_lea.vmem %s0, 4294967271
  %v372 = vld [vmem:[%s371] ss:$8 sm:$0xf0]
  %vm373 = vcmask 1047556
  %v374 = vsel %vm373, %v372, %v370
  %375 = vrot.lane.b32.xlu0 %v374, 32
  %v376 = vpop.permute.xlu0 %375
  %vm377 = vcmask 130048
  %s378 = scalar_lea.vmem %s1, 198
  %379 = vst.msk [vmem:[%s378] ss:$8 sm:$0xf] %vm377, %v376
  %s380 = scalar_lea.vmem %s1, 198
  %381 = vst.msk [vmem:[%s380] ss:$8 sm:$0xf0] %vm377, %v376
  %v382 = vld [vmem:[%s0] ss:$8 sm:$0xf]
  %s383 = scalar_lea.vmem %s0, 4294967265
  %v384 = vld [vmem:[%s383] ss:$8 sm:$0xf0]
  %vm385 = vcmask 1047556
  %v386 = vsel %vm385, %v384, %v382
  %387 = vrot.lane.b32.xlu0 %v386, 16
  %v388 = vpop.permute.xlu0 %387
  %vm389 = vcmask 130048
  %s390 = scalar_lea.vmem %s1, 7
  %391 = vst.msk [vmem:[%s390] ss:$8 sm:$0xf] %vm389, %v388
  %s392 = scalar_lea.vmem %s1, 7
  %393 = vst.msk [vmem:[%s392] ss:$8 sm:$0xf0] %vm389, %v388
  %s394 = scalar_lea.vmem %s0, 2
  %v395 = vld [vmem:[%s394] ss:$8 sm:$0xf]
  %s396 = scalar_lea.vmem %s0, 4294967267
  %v397 = vld [vmem:[%s396] ss:$8 sm:$0xf0]
  %vm398 = vcmask 1047556
  %v399 = vsel %vm398, %v397, %v395
  %400 = vrot.lane.b32.xlu0 %v399, 16
  %v401 = vpop.permute.xlu0 %400
  %vm402 = vcmask 130048
  %s403 = scalar_lea.vmem %s1, 71
  %404 = vst.msk [vmem:[%s403] ss:$8 sm:$0xf] %vm402, %v401
  %s405 = scalar_lea.vmem %s1, 71
  %406 = vst.msk [vmem:[%s405] ss:$8 sm:$0xf0] %vm402, %v401
  %s407 = scalar_lea.vmem %s0, 4
  %v408 = vld [vmem:[%s407] ss:$8 sm:$0xf]
  %s409 = scalar_lea.vmem %s0, 4294967269
  %v410 = vld [vmem:[%s409] ss:$8 sm:$0xf0]
  %vm411 = vcmask 1047556
  %v412 = vsel %vm411, %v410, %v408
  %413 = vrot.lane.b32.xlu0 %v412, 16
  %v414 = vpop.permute.xlu0 %413
  %vm415 = vcmask 130048
  %s416 = scalar_lea.vmem %s1, 135
  %417 = vst.msk [vmem:[%s416] ss:$8 sm:$0xf] %vm415, %v414
  %s418 = scalar_lea.vmem %s1, 135
  %419 = vst.msk [vmem:[%s418] ss:$8 sm:$0xf0] %vm415, %v414
  %s420 = scalar_lea.vmem %s0, 6
  %v421 = vld [vmem:[%s420] ss:$8 sm:$0xf]
  %s422 = scalar_lea.vmem %s0, 4294967271
  %v423 = vld [vmem:[%s422] ss:$8 sm:$0xf0]
  %vm424 = vcmask 1047556
  %v425 = vsel %vm424, %v423, %v421
  %426 = vrot.lane.b32.xlu0 %v425, 16
  %v427 = vpop.permute.xlu0 %426
  %vm428 = vcmask 130048
  %s429 = scalar_lea.vmem %s1, 199
  %430 = vst.msk [vmem:[%s429] ss:$8 sm:$0xf] %vm428, %v427
  %s431 = scalar_lea.vmem %s1, 199
  %432 = vst.msk [vmem:[%s431] ss:$8 sm:$0xf0] %vm428, %v427

</llo_original>
